<compile_context>
chip_gen: v5e
topology: v5e:2x2
jax: 0.10.0
libtpu: 0.0.40
codegen_flags: <defaults>
</compile_context>

<pallas_src>
import functools

import jax
import jax.numpy as jnp
from jax import lax
from jax.experimental import pallas as pl
from jax.experimental.pallas import tpu as pltpu


def _round_up(x, m):
    return (x + m - 1) // m * m


def _pfn_tile_kernel(x_ref, w_ref, b_ref, out_ref, *, n_points, last_layer):
    """One pillar tile: fused (x @ W' + b') -> ReLU -> per-pillar max -> store."""
    rows, _ = x_ref.shape                    # rows = tile_pillars * n_points
    c_out = w_ref.shape[1]
    tile_p = rows // n_points

    # Linear with BN scale/shift pre-folded into W'/b'.  MXU, f32 accumulation.
    x = x_ref[...]
    w = w_ref[...].astype(x.dtype)           # f32 x f32 or bf16 x bf16 on the MXU
    y = jnp.dot(x, w, preferred_element_type=jnp.float32) + b_ref[...]
    y = jnp.maximum(y, 0.0)                  # ReLU in f32 (safe on v5e: no bf16 VPU)

    y = y.reshape(tile_p, n_points, c_out)   # leading-dim split only (layout-trivial)
    y_max = jnp.max(y, axis=1, keepdims=True)            # (tile_p, 1, Cout)

    if last_layer:
        out_ref[...] = y_max.astype(out_ref.dtype)
    else:
        out_ref[:, :, :c_out] = y.astype(out_ref.dtype)
        out_ref[:, :, c_out:] = jnp.broadcast_to(
            y_max, (tile_p, n_points, c_out)).astype(out_ref.dtype)


def _fold_batchnorm(x_flat_f32, weight, gamma, beta, eps):
    """Fold training-mode BatchNorm1d stats of y = x @ W (over all P*N rows) into W, b.

    Uses centered sufficient statistics of x (mean_x, Cov_x) so there is no
    catastrophic cancellation; everything in f32.
    """
    m_rows = x_flat_f32.shape[0]
    mean_x = jnp.mean(x_flat_f32, axis=0)                        # (Cin,)
    xc = x_flat_f32 - mean_x
    cov_x = (xc.T @ xc) / m_rows                                 # (Cin, Cin), biased
    mean_y = mean_x @ weight                                     # (Cout,)
    var_y = jnp.einsum("kc,kl,lc->c", weight, cov_x, weight)     # w_c^T Cov w_c
    var_y = jnp.maximum(var_y, 0.0)
    scale = gamma * lax.rsqrt(var_y + eps)                       # (Cout,)
    w_fold = (weight * scale[None, :]).astype(jnp.float32)
    b_fold = ((beta - mean_y * scale)[None, :]).astype(jnp.float32)
    return w_fold, b_fold


def _choose_pillar_tile(num_pillars, n_points, c_in, c_out, last_layer,
                        in_itemsize, out_itemsize, budget_bytes):
    """Largest pillar tile fitting the VMEM budget (counting 128-lane padding and 2x buffers)."""
    lane = 128
    in_bytes = n_points * _round_up(c_in, lane) * in_itemsize
    if last_layer:
        out_bytes = _round_up(c_out, lane) * out_itemsize
    else:
        out_bytes = n_points * _round_up(2 * c_out, lane) * out_itemsize
    work_bytes = 3 * n_points * _round_up(c_out, lane) * 4        # f32 intermediates
    per_pillar = 2 * (in_bytes + out_bytes) + work_bytes          # x2: double buffering
    tile = max(8, budget_bytes // per_pillar)
    if tile >= num_pillars:
        return num_pillars
    return max(8, (tile // 8) * 8)


def pfn_layer(inputs, weight, gamma=None, beta=None, *, eps=1e-3, last_layer=False,
              pillar_tile=None, vmem_budget_bytes=24 << 20, vmem_limit_bytes=48 << 20):
    """PFNLayer forward.

    inputs: (P, N, Cin); weight: (Cin, Cout); gamma/beta: (Cout,) or (1, Cout) f32.
    Returns (P, N, 2*Cout) [not last layer] or (P, 1, Cout) [last layer] in inputs.dtype.
    """
    num_p, n_points, c_in = inputs.shape
    c_out = weight.shape[1]
    out_dtype = inputs.dtype

    gamma = (jnp.ones((c_out,), jnp.float32) if gamma is None
             else gamma.reshape(-1).astype(jnp.float32))
    beta = (jnp.zeros((c_out,), jnp.float32) if beta is None
            else beta.reshape(-1).astype(jnp.float32))
    weight = weight.astype(jnp.float32)

    # Global BN batch stats from cheap sufficient statistics of x (plain XLA),
    # folded into the weight so every pillar tile is independent.
    x_flat = inputs.reshape(num_p * n_points, c_in)               # free, row-major
    w_fold, b_fold = _fold_batchnorm(x_flat.astype(jnp.float32), weight, gamma, beta, eps)

    if pillar_tile is None:
        pillar_tile = _choose_pillar_tile(
            num_p, n_points, c_in, c_out, last_layer,
            jnp.dtype(inputs.dtype).itemsize, jnp.dtype(out_dtype).itemsize,
            vmem_budget_bytes)
    pillar_tile = min(pillar_tile, num_p)
    if pillar_tile < num_p and (pillar_tile * n_points) % 8 != 0:
        pillar_tile = max(8, (pillar_tile // 8) * 8)              # keep sublane-aligned blocks

    grid = (pl.cdiv(num_p, pillar_tile),)

    x_spec = pl.BlockSpec((pillar_tile * n_points, c_in), lambda i: (i, 0))
    w_spec = pl.BlockSpec((c_in, c_out), lambda i: (0, 0))
    b_spec = pl.BlockSpec((1, c_out), lambda i: (0, 0))

    if last_layer:
        out_shape = jax.ShapeDtypeStruct((num_p, 1, c_out), out_dtype)
        out_spec = pl.BlockSpec((pillar_tile, 1, c_out), lambda i: (i, 0, 0))
    else:
        out_shape = jax.ShapeDtypeStruct((num_p, n_points, 2 * c_out), out_dtype)
        out_spec = pl.BlockSpec((pillar_tile, n_points, 2 * c_out), lambda i: (i, 0, 0))

    kernel = functools.partial(_pfn_tile_kernel, n_points=n_points, last_layer=last_layer)
    return pl.pallas_call(
        kernel,
        out_shape=out_shape,
        grid=grid,
        in_specs=[x_spec, w_spec, b_spec],
        out_specs=out_spec,
        compiler_params=pltpu.CompilerParams(
            dimension_semantics=("parallel",),        # independent tiles; v7x: 2 TCs
            vmem_limit_bytes=vmem_limit_bytes),
    )(x_flat, w_fold, b_fold)


def _reference(inputs, weight, gamma, beta, *, eps=1e-3, last_layer=False):
    """Pure-JAX reference mirroring the PyTorch forward (training-mode BN, biased var)."""
    x = inputs.astype(jnp.float32) @ weight
    flat = x.reshape(-1, x.shape[-1])
    mean = flat.mean(0)
    var = ((flat - mean) ** 2).mean(0)
    x = (x - mean) * lax.rsqrt(var + eps) * gamma.reshape(-1) + beta.reshape(-1)
    x = jnp.maximum(x, 0.0)
    x_max = jnp.max(x, axis=1, keepdims=True)
    if last_layer:
        return x_max
    x_rep = jnp.broadcast_to(x_max, x.shape)
    return jnp.concatenate([x, x_rep], axis=2)


if __name__ == "__main__":
    key = jax.random.PRNGKey(0)
    num_pillars, n_points = 256, 32        # pillars, max points per pillar
    in_channels = 10                       # PointPillars VFE point features
    out_channels = 64                      # not-last PFNLayer -> effective Cout = 32
    c_out = out_channels // 2

    k_x, k_w = jax.random.split(key)
    inputs = jax.random.normal(k_x, (num_pillars, n_points, in_channels), dtype=jnp.float32)
    bound = 1.0 / (in_channels ** 0.5)
    weight = jax.random.uniform(k_w, (in_channels, c_out),
                                minval=-bound, maxval=bound, dtype=jnp.float32)
    gamma = jnp.ones((c_out,), jnp.float32)   # BatchNorm1d default affine params
    beta = jnp.zeros((c_out,), jnp.float32)

    # --- not-last layer, f32 I/O (explicit tile so the grid divides P exactly) ---
    out = pfn_layer(inputs, weight, gamma, beta, last_layer=False, pillar_tile=64)
    out = jax.block_until_ready(out)
    ref = _reference(inputs, weight, gamma, beta, last_layer=False)
    assert out.shape == (num_pillars, n_points, out_channels), out.shape
    assert jnp.allclose(out, ref, atol=5e-4, rtol=5e-4), "f32 mismatch vs reference"

    # --- last-layer path: (P, 1, Cout) ---
    out_last = pfn_layer(inputs, weight, gamma, beta, last_layer=True, pillar_tile=64)
    out_last = jax.block_until_ready(out_last)
    ref_last = _reference(inputs, weight, gamma, beta, last_layer=True)
    assert out_last.shape == (num_pillars, 1, c_out), out_last.shape
    assert jnp.allclose(out_last, ref_last, atol=5e-4, rtol=5e-4), "last-layer mismatch"

    # --- bf16 activation I/O (halves HBM traffic; f32 MXU accumulate in-kernel) ---
    inputs_bf16 = inputs.astype(jnp.bfloat16)
    out_bf16 = pfn_layer(inputs_bf16, weight, gamma, beta, last_layer=False, pillar_tile=64)
    out_bf16 = jax.block_until_ready(out_bf16)
    ref_bf16 = _reference(inputs_bf16.astype(jnp.float32), weight, gamma, beta, last_layer=False)
    assert out_bf16.dtype == jnp.bfloat16
    assert jnp.allclose(out_bf16.astype(jnp.float32), ref_bf16, atol=1e-1, rtol=1e-1), "bf16 mismatch"

    print("KERNEL_OK")
</pallas_src>

<mosaic_0001>
module attributes {stable_mosaic.version = 11 : i64} {
  func.func @_pfn_tile_kernel(%arg0: i32, %arg1: memref<2048x10xf32, #tpu.memory_space<vmem>>, %arg2: memref<10x32xf32, #tpu.memory_space<vmem>>, %arg3: memref<1x32xf32, #tpu.memory_space<vmem>>, %arg4: memref<64x32x64xf32, #tpu.memory_space<vmem>>) attributes {dimension_semantics = [#tpu.dimension_semantics<parallel>], iteration_bounds = array<i64: 4>, scalar_prefetch = 0 : i64, scratch_operands = 0 : i64, tpu.core_type = #tpu.core_type<tc>, window_params = [{transform_indices = @transform_0, window_bounds = array<i64: 2048, 10>}, {pipeline_mode = #tpu.pipeline_mode<synchronous>, transform_indices = @transform_1, window_bounds = array<i64: 10, 32>}, {pipeline_mode = #tpu.pipeline_mode<synchronous>, transform_indices = @transform_2, window_bounds = array<i64: 1, 32>}, {transform_indices = @transform_3, window_bounds = array<i64: 64, 32, 64>}]} {
    %c0 = arith.constant 0 : index
    %c0_0 = arith.constant 0 : index
    %0 = vector.load %arg1[%c0, %c0_0] : memref<2048x10xf32, #tpu.memory_space<vmem>>, vector<2048x10xf32>
    %c0_1 = arith.constant 0 : index
    %c0_2 = arith.constant 0 : index
    %1 = vector.load %arg2[%c0_1, %c0_2] : memref<10x32xf32, #tpu.memory_space<vmem>>, vector<10x32xf32>
    %cst = arith.constant dense<0.000000e+00> : vector<2048x32xf32>
    %2 = tpu.matmul %0, %1, %cst {dimension_numbers = #tpu.dot_dimension_numbers<[1], [0], [0], [1], [0, 0, 1, 1], [], []>} : vector<2048x10xf32>, vector<10x32xf32>, vector<2048x32xf32> -> vector<2048x32xf32>
    %c0_3 = arith.constant 0 : index
    %c0_4 = arith.constant 0 : index
    %3 = vector.load %arg3[%c0_3, %c0_4] : memref<1x32xf32, #tpu.memory_space<vmem>>, vector<1x32xf32>
    %4 = vector.broadcast %3 : vector<1x32xf32> to vector<2048x32xf32>
    %5 = arith.addf %2, %4 : vector<2048x32xf32>
    %cst_5 = arith.constant 0.000000e+00 : f32
    %6 = vector.broadcast %cst_5 : f32 to vector<2048x32xf32>
    %7 = arith.maximumf %5, %6 : vector<2048x32xf32>
    %8 = vector.shape_cast %7 : vector<2048x32xf32> to vector<64x32x32xf32>
    %cst_6 = arith.constant dense<0xFF800000> : vector<64x32xf32>
    %9 = vector.multi_reduction <maximumf>, %8, %cst_6 [1] : vector<64x32x32xf32> to vector<64x32xf32>
    %10 = vector.shape_cast %9 : vector<64x32xf32> to vector<64x1x32xf32>
    %c0_7 = arith.constant 0 : index
    %c0_8 = arith.constant 0 : index
    %c0_9 = arith.constant 0 : index
    %11 = vector.load %arg4[%c0_7, %c0_8, %c0_9] : memref<64x32x64xf32, #tpu.memory_space<vmem>>, vector<64x32x32xf32>
    tpu.vector_store %arg4[%c0_7, %c0_8, %c0_9], %8 {strides = array<i32>} : memref<64x32x64xf32, #tpu.memory_space<vmem>>, vector<64x32x32xf32>,
    %12 = vector.shape_cast %10 : vector<64x1x32xf32> to vector<64x1x32xf32>
    %13 = vector.broadcast %12 : vector<64x1x32xf32> to vector<64x32x32xf32>
    %c0_10 = arith.constant 0 : index
    %c0_11 = arith.constant 0 : index
    %c32 = arith.constant 32 : index
    %14 = vector.load %arg4[%c0_10, %c0_11, %c32] : memref<64x32x64xf32, #tpu.memory_space<vmem>>, vector<64x32x32xf32>
    tpu.vector_store %arg4[%c0_10, %c0_11, %c32], %13 {strides = array<i32>} : memref<64x32x64xf32, #tpu.memory_space<vmem>>, vector<64x32x32xf32>,
    return
  }
  func.func @transform_0(%arg0: i32) -> (i32, i32) {
    %c0_i32 = arith.constant 0 : i32
    %c0_i32_0 = arith.constant 0 : i32
    return %arg0, %c0_i32 : i32, i32
  }
  func.func @transform_1(%arg0: i32) -> (i32, i32) {
    %c0_i32 = arith.constant 0 : i32
    %c0_i32_0 = arith.constant 0 : i32
    %c0_i32_1 = arith.constant 0 : i32
    return %c0_i32, %c0_i32_0 : i32, i32
  }
  func.func @transform_2(%arg0: i32) -> (i32, i32) {
    %c0_i32 = arith.constant 0 : i32
    %c0_i32_0 = arith.constant 0 : i32
    %c0_i32_1 = arith.constant 0 : i32
    return %c0_i32, %c0_i32_0 : i32, i32
  }
  func.func @transform_3(%arg0: i32) -> (i32, i32, i32) {
    %c0_i32 = arith.constant 0 : i32
    %c0_i32_0 = arith.constant 0 : i32
    %c0_i32_1 = arith.constant 0 : i32
    return %arg0, %c0_i32, %c0_i32_0 : i32, i32, i32
  }
}

</mosaic_0001>

<llo_original>
// kernel: tpu_custom_call.1
$region0: #{tpu_custom_call.1}
  #allocation0 [shape = 'u32[]', space=smem, size = 0x4, offset = 0x4, fixed_abs, tag = 'smem constant byte address 0x4 - core index']
  #allocation1 [shape = 'u32[72,128]{1,0:T(1,128)}', space=vmem, size = 0x9000, scoped, tag = 'internal scratch']
  %s0 = inlined_call_operand.vmem [shape: f32[8192,10], index: 0, kind: input, shape index: {}]
  %s1 = inlined_call_operand.vmem [shape: f32[10,32], index: 1, kind: input, shape index: {}]
  %s2 = inlined_call_operand.vmem [shape: f32[1,32], index: 2, kind: input, shape index: {}]
  %s3 = inlined_call_operand.vmem [shape: f32[256,32,64], index: 3, kind: output, shape index: {}]
  %s4 = sld [smem:[#allocation0]]
  $region45: #{tpu_custom_call.1} parent=0
    _
  %s6 = ssub.s32 1, %s4
  %s7 = scalar_select 0, %s6, %s4
  loop: start=0, step=1, limit=6
  $region2: #{tpu_custom_call.1} parent=0 // loop_pre_header
    _
  $region3: #{tpu_custom_call.1} parent=0 // loop_header
    %s9 = sphi 0, %s13
    %p10 = scmp.ge.s32.totalorder %s9, 6
    %s19 = sphi 0, %s21
    %s22 = sphi 0, %s19
    %s23 = sphi 0, %s22
    %s39 = sphi 0, %s23
    %s43 = sphi 0, %s43
    %s45 = sphi 0, %s43
    %s46 = sphi 0, %s45
    %s60 = sphi 0, %s46
    %s64 = sphi 0, %s64
    %s66 = sphi 0, %s64
    %s67 = sphi 0, %s66
    %s81 = sphi 0, %s67
    %s87 = sphi 0, %s89
    %s90 = sphi 0, %s87
    %s91 = sphi 0, %s90
    %s107 = sphi 0, %s91
  $region4: #{tpu_custom_call.1} parent=0 // loop_header_branch
    %12 = sbr.rel (%p10) target = $region8
  $region5: #{tpu_custom_call.1} parent=0 // loop_body
    %s14 = ssub.s32 %s9, 1
    %s15 = ssub.s32 %s9, 2
    %s16 = sadd.s32 %s9, 1
    %s17 = ssub.s32 %s9, %s16
    %p18 = scmp.eq.s32.totalorder %s17, 0
    %s20 = sadd.s32 %s19, 1
    %s21 = scalar_select %p18, %s19, %s20
    %p24 = pneg %p18
    %p25 = scmp.eq.s32.totalorder %s9, 3
    %p26 = por %p24, %p25
    %p27 = scmp.ne.s32.totalorder %s19, %s22
    %p28 = scmp.eq.s32.totalorder %s9, 0
    %p29 = por %p27, %p28
    %p30 = scmp.ne.s32.totalorder %s19, %s22
    %p31 = scmp.eq.s32.totalorder %s14, 3
    %p32 = por %p30, %p31
    %p33 = scmp.ne.s32.totalorder %s22, %s23
    %p34 = scmp.eq.s32.totalorder %s14, 0
    %p35 = por %p33, %p34
    %p36 = scmp.ne.s32.totalorder %s22, %s23
    %p37 = scmp.eq.s32.totalorder %s15, 3
    %p38 = por %p36, %p37
    %p40 = scmp.ne.s32.totalorder %s23, %s39
    %p41 = scmp.eq.s32.totalorder %s15, 0
    %p42 = por %p40, %p41
    %s44 = sadd.s32 %s43, 1
    %p47 = scmp.eq.s32.totalorder %s9, 3
    %p48 = scmp.ne.s32.totalorder %s43, %s45
    %p49 = scmp.eq.s32.totalorder %s9, 0
    %p50 = por %p48, %p49
    %p51 = scmp.ne.s32.totalorder %s43, %s45
    %p52 = scmp.eq.s32.totalorder %s14, 3
    %p53 = por %p51, %p52
    %p54 = scmp.ne.s32.totalorder %s45, %s46
    %p55 = scmp.eq.s32.totalorder %s14, 0
    %p56 = por %p54, %p55
    %p57 = scmp.ne.s32.totalorder %s45, %s46
    %p58 = scmp.eq.s32.totalorder %s15, 3
    %p59 = por %p57, %p58
    %p61 = scmp.ne.s32.totalorder %s46, %s60
    %p62 = scmp.eq.s32.totalorder %s15, 0
    %p63 = por %p61, %p62
    %s65 = sadd.s32 %s64, 1
    %p68 = scmp.eq.s32.totalorder %s9, 3
    %p69 = scmp.ne.s32.totalorder %s64, %s66
    %p70 = scmp.eq.s32.totalorder %s9, 0
    %p71 = por %p69, %p70
    %p72 = scmp.ne.s32.totalorder %s64, %s66
    %p73 = scmp.eq.s32.totalorder %s14, 3
    %p74 = por %p72, %p73
    %p75 = scmp.ne.s32.totalorder %s66, %s67
    %p76 = scmp.eq.s32.totalorder %s14, 0
    %p77 = por %p75, %p76
    %p78 = scmp.ne.s32.totalorder %s66, %s67
    %p79 = scmp.eq.s32.totalorder %s15, 3
    %p80 = por %p78, %p79
    %p82 = scmp.ne.s32.totalorder %s67, %s81
    %p83 = scmp.eq.s32.totalorder %s15, 0
    %p84 = por %p82, %p83
    %s85 = ssub.s32 %s9, %s16
    %p86 = scmp.eq.s32.totalorder %s85, 0
    %s88 = sadd.s32 %s87, 1
    %s89 = scalar_select %p86, %s87, %s88
    %p92 = pneg %p86
    %p93 = scmp.eq.s32.totalorder %s9, 3
    %p94 = por %p92, %p93
    %p95 = scmp.ne.s32.totalorder %s87, %s90
    %p96 = scmp.eq.s32.totalorder %s9, 0
    %p97 = por %p95, %p96
    %p98 = scmp.ne.s32.totalorder %s87, %s90
    %p99 = scmp.eq.s32.totalorder %s14, 3
    %p100 = por %p98, %p99
    %p101 = scmp.ne.s32.totalorder %s90, %s91
    %p102 = scmp.eq.s32.totalorder %s14, 0
    %p103 = por %p101, %p102
    %p104 = scmp.ne.s32.totalorder %s90, %s91
    %p105 = scmp.eq.s32.totalorder %s15, 3
    %p106 = por %p104, %p105
    %p108 = scmp.ne.s32.totalorder %s91, %s107
    %p109 = scmp.eq.s32.totalorder %s15, 0
    %p110 = por %p108, %p109
    %p111 = scmp.le.s32.totalorder 1, %s9
    %p112 = scmp.lt.s32.totalorder %s9, 5
    %p113 = pnand %p111, %p112
    %p114 = pneg %p113
    // Predicated region
    $region9: #{tpu_custom_call.1} parent=5 // pred_check
      _
    $region10: #{tpu_custom_call.1} parent=5 // pred_check_branch
      %116 = sbr.rel (%p113) target = $region12
    $region11: #{tpu_custom_call.1} parent=5 // pred_region
      %s117 = ssub.s32 %s9, 1
      // Predicated region
      $region13: #{tpu_custom_call.1} parent=11 // pred_check
        %p118 = pneg %p56
      $region14: #{tpu_custom_call.1} parent=11 // pred_check_branch
        %120 = sbr.rel (%p118) target = $region16
      $region15: #{tpu_custom_call.1} parent=11 // pred_region
        _
      $region16: #{tpu_custom_call.1} parent=11 // pred_fallthru
        _
      // Predicated region
      $region17: #{tpu_custom_call.1} parent=11 // pred_check
        %p121 = pneg %p77
      $region18: #{tpu_custom_call.1} parent=11 // pred_check_branch
        %123 = sbr.rel (%p121) target = $region20
      $region19: #{tpu_custom_call.1} parent=11 // pred_region
        _
      $region20: #{tpu_custom_call.1} parent=11 // pred_fallthru
        _
    $region12: #{tpu_custom_call.1} parent=5 // pred_fallthru
      _
    %p124 = scmp.lt.s32.totalorder %s9, 4
    // Predicated region
    $region21: #{tpu_custom_call.1} parent=5 // pred_check
      %p125 = pneg %p124
    $region22: #{tpu_custom_call.1} parent=5 // pred_check_branch
      %127 = sbr.rel (%p125) target = $region24
    $region23: #{tpu_custom_call.1} parent=5 // pred_region
      // Predicated region
      $region25: #{tpu_custom_call.1} parent=23 // pred_check
        %p128 = pneg %p29
      $region26: #{tpu_custom_call.1} parent=23 // pred_check_branch
        %130 = sbr.rel (%p128) target = $region28
      $region27: #{tpu_custom_call.1} parent=23 // pred_region
        %s131 = smul.u32 256, %s9
        %p132 = scmp.lt.s32.totalorder %s131, 1023
        %s133 = scalar_select %p132, %s131, 1023
        %s134 = smul.addr %s133, 8
        %s135 = scalar_lea.vmem %s0, %s134
        %s136 = smul.u32 256, %s9
      $region28: #{tpu_custom_call.1} parent=23 // pred_fallthru
        _
    $region24: #{tpu_custom_call.1} parent=5 // pred_fallthru
      _
    %p137 = scmp.le.s32.totalorder 1, %s9
    %p138 = scmp.lt.s32.totalorder %s9, 5
    %p139 = pnand %p137, %p138
    %p140 = pneg %p139
    // Predicated region
    $region29: #{tpu_custom_call.1} parent=5 // pred_check
      _
    $region30: #{tpu_custom_call.1} parent=5 // pred_check_branch
      %142 = sbr.rel (%p139) target = $region32
    $region31: #{tpu_custom_call.1} parent=5 // pred_region
      %s143 = ssub.s32 %s9, 1
      %s144 = smul.u32 256, %s14
      %p145 = scmp.lt.s32.totalorder %s144, 1023
      %s146 = scalar_select %p145, %s144, 1023
      %s147 = smul.addr %s146, 8
      %s148 = scalar_lea.vmem %s0, %s147
      %p149 = pneg %p35
      %p150 = pneg %p32
      %p151 = pneg %p56
      %p152 = pneg %p53
      %p153 = pneg %p77
      %p154 = pneg %p74
      %p155 = pneg %p103
      %p156 = pneg %p100
      %s157 = smul.u32 64, %s14
      %p158 = scmp.lt.s32.totalorder %s157, 255
      %s159 = scalar_select %p158, %s157, 255
      %s160 = smul.addr %s159, 4
      %s161 = smul.addr %s160, 8
      %s162 = scalar_lea.vmem %s3, %s161
      %s163 = smul.u32 256, %s14
      %p164 = scmp.lt.s32.totalorder %s163, 1023
      %s165 = scalar_select %p164, %s163, 1023
      %s166 = smul.addr %s165, 8
      %s167 = scalar_lea.vmem %s0, %s166
      %s168 = smul.u32 256, %s14
      %s169 = smul.u32 64, %s14
      %p170 = scmp.lt.s32.totalorder %s169, 255
      %s171 = scalar_select %p170, %s169, 255
      %s172 = smul.addr %s171, 4
      %s173 = smul.addr %s172, 8
      %s174 = scalar_lea.vmem %s3, %s173
      %s175 = smul.u32 64, %s14
      %v176 = vld [vmem:[%s167] sm:$0xff]
      %v177 = vld [vmem:[%s167 + $0x8] sm:$0xff]
      %v178 = vld [vmem:[%s167 + $0x10] sm:$0xff]
      %v179 = vld [vmem:[%s167 + $0x18] sm:$0xff]
      %v180 = vld [vmem:[%s167 + $0x20] sm:$0xff]
      %v181 = vld [vmem:[%s167 + $0x28] sm:$0xff]
      %v182 = vld [vmem:[%s167 + $0x30] sm:$0xff]
      %v183 = vld [vmem:[%s167 + $0x38] sm:$0xff]
      %v184 = vld [vmem:[%s167 + $0x40] sm:$0xff]
      %v185 = vld [vmem:[%s167 + $0x48] sm:$0xff]
      %v186 = vld [vmem:[%s167 + $0x50] sm:$0xff]
      %v187 = vld [vmem:[%s167 + $0x58] sm:$0xff]
      %v188 = vld [vmem:[%s167 + $0x60] sm:$0xff]
      %v189 = vld [vmem:[%s167 + $0x68] sm:$0xff]
      %v190 = vld [vmem:[%s167 + $0x70] sm:$0xff]
      %v191 = vld [vmem:[%s167 + $0x78] sm:$0xff]
      %v192 = vld [vmem:[%s167 + $0x80] sm:$0xff]
      %v193 = vld [vmem:[%s167 + $0x88] sm:$0xff]
      %v194 = vld [vmem:[%s167 + $0x90] sm:$0xff]
      %v195 = vld [vmem:[%s167 + $0x98] sm:$0xff]
      %v196 = vld [vmem:[%s167 + $0xa0] sm:$0xff]
      %v197 = vld [vmem:[%s167 + $0xa8] sm:$0xff]
      %v198 = vld [vmem:[%s167 + $0xb0] sm:$0xff]
      %v199 = vld [vmem:[%s167 + $0xb8] sm:$0xff]
      %v200 = vld [vmem:[%s167 + $0xc0] sm:$0xff]
      %v201 = vld [vmem:[%s167 + $0xc8] sm:$0xff]
      %v202 = vld [vmem:[%s167 + $0xd0] sm:$0xff]
      %v203 = vld [vmem:[%s167 + $0xd8] sm:$0xff]
      %v204 = vld [vmem:[%s167 + $0xe0] sm:$0xff]
      %v205 = vld [vmem:[%s167 + $0xe8] sm:$0xff]
      %v206 = vld [vmem:[%s167 + $0xf0] sm:$0xff]
      %v207 = vld [vmem:[%s167 + $0xf8] sm:$0xff]
      %v208 = vld [vmem:[%s167 + $0x100] sm:$0xff]
      %v209 = vld [vmem:[%s167 + $0x108] sm:$0xff]
      %v210 = vld [vmem:[%s167 + $0x110] sm:$0xff]
      %v211 = vld [vmem:[%s167 + $0x118] sm:$0xff]
      %v212 = vld [vmem:[%s167 + $0x120] sm:$0xff]
      %v213 = vld [vmem:[%s167 + $0x128] sm:$0xff]
      %v214 = vld [vmem:[%s167 + $0x130] sm:$0xff]
      %v215 = vld [vmem:[%s167 + $0x138] sm:$0xff]
      %v216 = vld [vmem:[%s167 + $0x140] sm:$0xff]
      %v217 = vld [vmem:[%s167 + $0x148] sm:$0xff]
      %v218 = vld [vmem:[%s167 + $0x150] sm:$0xff]
      %v219 = vld [vmem:[%s167 + $0x158] sm:$0xff]
      %v220 = vld [vmem:[%s167 + $0x160] sm:$0xff]
      %v221 = vld [vmem:[%s167 + $0x168] sm:$0xff]
      %v222 = vld [vmem:[%s167 + $0x170] sm:$0xff]
      %v223 = vld [vmem:[%s167 + $0x178] sm:$0xff]
      %v224 = vld [vmem:[%s167 + $0x180] sm:$0xff]
      %v225 = vld [vmem:[%s167 + $0x188] sm:$0xff]
      %v226 = vld [vmem:[%s167 + $0x190] sm:$0xff]
      %v227 = vld [vmem:[%s167 + $0x198] sm:$0xff]
      %v228 = vld [vmem:[%s167 + $0x1a0] sm:$0xff]
      %v229 = vld [vmem:[%s167 + $0x1a8] sm:$0xff]
      %v230 = vld [vmem:[%s167 + $0x1b0] sm:$0xff]
      %v231 = vld [vmem:[%s167 + $0x1b8] sm:$0xff]
      %v232 = vld [vmem:[%s167 + $0x1c0] sm:$0xff]
      %v233 = vld [vmem:[%s167 + $0x1c8] sm:$0xff]
      %v234 = vld [vmem:[%s167 + $0x1d0] sm:$0xff]
      %v235 = vld [vmem:[%s167 + $0x1d8] sm:$0xff]
      %v236 = vld [vmem:[%s167 + $0x1e0] sm:$0xff]
      %v237 = vld [vmem:[%s167 + $0x1e8] sm:$0xff]
      %v238 = vld [vmem:[%s167 + $0x1f0] sm:$0xff]
      %v239 = vld [vmem:[%s167 + $0x1f8] sm:$0xff]
      %v240 = vld [vmem:[%s167 + $0x200] sm:$0xff]
      %v241 = vld [vmem:[%s167 + $0x208] sm:$0xff]
      %v242 = vld [vmem:[%s167 + $0x210] sm:$0xff]
      %v243 = vld [vmem:[%s167 + $0x218] sm:$0xff]
      %v244 = vld [vmem:[%s167 + $0x220] sm:$0xff]
      %v245 = vld [vmem:[%s167 + $0x228] sm:$0xff]
      %v246 = vld [vmem:[%s167 + $0x230] sm:$0xff]
      %v247 = vld [vmem:[%s167 + $0x238] sm:$0xff]
      %v248 = vld [vmem:[%s167 + $0x240] sm:$0xff]
      %v249 = vld [vmem:[%s167 + $0x248] sm:$0xff]
      %v250 = vld [vmem:[%s167 + $0x250] sm:$0xff]
      %v251 = vld [vmem:[%s167 + $0x258] sm:$0xff]
      %v252 = vld [vmem:[%s167 + $0x260] sm:$0xff]
      %v253 = vld [vmem:[%s167 + $0x268] sm:$0xff]
      %v254 = vld [vmem:[%s167 + $0x270] sm:$0xff]
      %v255 = vld [vmem:[%s167 + $0x278] sm:$0xff]
      %v256 = vld [vmem:[%s167 + $0x280] sm:$0xff]
      %v257 = vld [vmem:[%s167 + $0x288] sm:$0xff]
      %v258 = vld [vmem:[%s167 + $0x290] sm:$0xff]
      %v259 = vld [vmem:[%s167 + $0x298] sm:$0xff]
      %v260 = vld [vmem:[%s167 + $0x2a0] sm:$0xff]
      %v261 = vld [vmem:[%s167 + $0x2a8] sm:$0xff]
      %v262 = vld [vmem:[%s167 + $0x2b0] sm:$0xff]
      %v263 = vld [vmem:[%s167 + $0x2b8] sm:$0xff]
      %v264 = vld [vmem:[%s167 + $0x2c0] sm:$0xff]
      %v265 = vld [vmem:[%s167 + $0x2c8] sm:$0xff]
      %v266 = vld [vmem:[%s167 + $0x2d0] sm:$0xff]
      %v267 = vld [vmem:[%s167 + $0x2d8] sm:$0xff]
      %v268 = vld [vmem:[%s167 + $0x2e0] sm:$0xff]
      %v269 = vld [vmem:[%s167 + $0x2e8] sm:$0xff]
      %v270 = vld [vmem:[%s167 + $0x2f0] sm:$0xff]
      %v271 = vld [vmem:[%s167 + $0x2f8] sm:$0xff]
      %v272 = vld [vmem:[%s167 + $0x300] sm:$0xff]
      %v273 = vld [vmem:[%s167 + $0x308] sm:$0xff]
      %v274 = vld [vmem:[%s167 + $0x310] sm:$0xff]
      %v275 = vld [vmem:[%s167 + $0x318] sm:$0xff]
      %v276 = vld [vmem:[%s167 + $0x320] sm:$0xff]
      %v277 = vld [vmem:[%s167 + $0x328] sm:$0xff]
      %v278 = vld [vmem:[%s167 + $0x330] sm:$0xff]
      %v279 = vld [vmem:[%s167 + $0x338] sm:$0xff]
      %v280 = vld [vmem:[%s167 + $0x340] sm:$0xff]
      %v281 = vld [vmem:[%s167 + $0x348] sm:$0xff]
      %v282 = vld [vmem:[%s167 + $0x350] sm:$0xff]
      %v283 = vld [vmem:[%s167 + $0x358] sm:$0xff]
      %v284 = vld [vmem:[%s167 + $0x360] sm:$0xff]
      %v285 = vld [vmem:[%s167 + $0x368] sm:$0xff]
      %v286 = vld [vmem:[%s167 + $0x370] sm:$0xff]
      %v287 = vld [vmem:[%s167 + $0x378] sm:$0xff]
      %v288 = vld [vmem:[%s167 + $0x380] sm:$0xff]
      %v289 = vld [vmem:[%s167 + $0x388] sm:$0xff]
      %v290 = vld [vmem:[%s167 + $0x390] sm:$0xff]
      %v291 = vld [vmem:[%s167 + $0x398] sm:$0xff]
      %v292 = vld [vmem:[%s167 + $0x3a0] sm:$0xff]
      %v293 = vld [vmem:[%s167 + $0x3a8] sm:$0xff]
      %v294 = vld [vmem:[%s167 + $0x3b0] sm:$0xff]
      %v295 = vld [vmem:[%s167 + $0x3b8] sm:$0xff]
      %v296 = vld [vmem:[%s167 + $0x3c0] sm:$0xff]
      %v297 = vld [vmem:[%s167 + $0x3c8] sm:$0xff]
      %v298 = vld [vmem:[%s167 + $0x3d0] sm:$0xff]
      %v299 = vld [vmem:[%s167 + $0x3d8] sm:$0xff]
      %v300 = vld [vmem:[%s167 + $0x3e0] sm:$0xff]
      %v301 = vld [vmem:[%s167 + $0x3e8] sm:$0xff]
      %v302 = vld [vmem:[%s167 + $0x3f0] sm:$0xff]
      %v303 = vld [vmem:[%s167 + $0x3f8] sm:$0xff]
      %v304 = vld [vmem:[%s167 + $0x400] sm:$0xff]
      %v305 = vld [vmem:[%s167 + $0x408] sm:$0xff]
      %v306 = vld [vmem:[%s167 + $0x410] sm:$0xff]
      %v307 = vld [vmem:[%s167 + $0x418] sm:$0xff]
      %v308 = vld [vmem:[%s167 + $0x420] sm:$0xff]
      %v309 = vld [vmem:[%s167 + $0x428] sm:$0xff]
      %v310 = vld [vmem:[%s167 + $0x430] sm:$0xff]
      %v311 = vld [vmem:[%s167 + $0x438] sm:$0xff]
      %v312 = vld [vmem:[%s167 + $0x440] sm:$0xff]
      %v313 = vld [vmem:[%s167 + $0x448] sm:$0xff]
      %v314 = vld [vmem:[%s167 + $0x450] sm:$0xff]
      %v315 = vld [vmem:[%s167 + $0x458] sm:$0xff]
      %v316 = vld [vmem:[%s167 + $0x460] sm:$0xff]
      %v317 = vld [vmem:[%s167 + $0x468] sm:$0xff]
      %v318 = vld [vmem:[%s167 + $0x470] sm:$0xff]
      %v319 = vld [vmem:[%s167 + $0x478] sm:$0xff]
      %v320 = vld [vmem:[%s167 + $0x480] sm:$0xff]
      %v321 = vld [vmem:[%s167 + $0x488] sm:$0xff]
      %v322 = vld [vmem:[%s167 + $0x490] sm:$0xff]
      %v323 = vld [vmem:[%s167 + $0x498] sm:$0xff]
      %v324 = vld [vmem:[%s167 + $0x4a0] sm:$0xff]
      %v325 = vld [vmem:[%s167 + $0x4a8] sm:$0xff]
      %v326 = vld [vmem:[%s167 + $0x4b0] sm:$0xff]
      %v327 = vld [vmem:[%s167 + $0x4b8] sm:$0xff]
      %v328 = vld [vmem:[%s167 + $0x4c0] sm:$0xff]
      %v329 = vld [vmem:[%s167 + $0x4c8] sm:$0xff]
      %v330 = vld [vmem:[%s167 + $0x4d0] sm:$0xff]
      %v331 = vld [vmem:[%s167 + $0x4d8] sm:$0xff]
      %v332 = vld [vmem:[%s167 + $0x4e0] sm:$0xff]
      %v333 = vld [vmem:[%s167 + $0x4e8] sm:$0xff]
      %v334 = vld [vmem:[%s167 + $0x4f0] sm:$0xff]
      %v335 = vld [vmem:[%s167 + $0x4f8] sm:$0xff]
      %v336 = vld [vmem:[%s167 + $0x500] sm:$0xff]
      %v337 = vld [vmem:[%s167 + $0x508] sm:$0xff]
      %v338 = vld [vmem:[%s167 + $0x510] sm:$0xff]
      %v339 = vld [vmem:[%s167 + $0x518] sm:$0xff]
      %v340 = vld [vmem:[%s167 + $0x520] sm:$0xff]
      %v341 = vld [vmem:[%s167 + $0x528] sm:$0xff]
      %v342 = vld [vmem:[%s167 + $0x530] sm:$0xff]
      %v343 = vld [vmem:[%s167 + $0x538] sm:$0xff]
      %v344 = vld [vmem:[%s167 + $0x540] sm:$0xff]
      %v345 = vld [vmem:[%s167 + $0x548] sm:$0xff]
      %v346 = vld [vmem:[%s167 + $0x550] sm:$0xff]
      %v347 = vld [vmem:[%s167 + $0x558] sm:$0xff]
      %v348 = vld [vmem:[%s167 + $0x560] sm:$0xff]
      %v349 = vld [vmem:[%s167 + $0x568] sm:$0xff]
      %v350 = vld [vmem:[%s167 + $0x570] sm:$0xff]
      %v351 = vld [vmem:[%s167 + $0x578] sm:$0xff]
      %v352 = vld [vmem:[%s167 + $0x580] sm:$0xff]
      %v353 = vld [vmem:[%s167 + $0x588] sm:$0xff]
      %v354 = vld [vmem:[%s167 + $0x590] sm:$0xff]
      %v355 = vld [vmem:[%s167 + $0x598] sm:$0xff]
      %v356 = vld [vmem:[%s167 + $0x5a0] sm:$0xff]
      %v357 = vld [vmem:[%s167 + $0x5a8] sm:$0xff]
      %v358 = vld [vmem:[%s167 + $0x5b0] sm:$0xff]
      %v359 = vld [vmem:[%s167 + $0x5b8] sm:$0xff]
      %v360 = vld [vmem:[%s167 + $0x5c0] sm:$0xff]
      %v361 = vld [vmem:[%s167 + $0x5c8] sm:$0xff]
      %v362 = vld [vmem:[%s167 + $0x5d0] sm:$0xff]
      %v363 = vld [vmem:[%s167 + $0x5d8] sm:$0xff]
      %v364 = vld [vmem:[%s167 + $0x5e0] sm:$0xff]
      %v365 = vld [vmem:[%s167 + $0x5e8] sm:$0xff]
      %v366 = vld [vmem:[%s167 + $0x5f0] sm:$0xff]
      %v367 = vld [vmem:[%s167 + $0x5f8] sm:$0xff]
      %v368 = vld [vmem:[%s167 + $0x600] sm:$0xff]
      %v369 = vld [vmem:[%s167 + $0x608] sm:$0xff]
      %v370 = vld [vmem:[%s167 + $0x610] sm:$0xff]
      %v371 = vld [vmem:[%s167 + $0x618] sm:$0xff]
      %v372 = vld [vmem:[%s167 + $0x620] sm:$0xff]
      %v373 = vld [vmem:[%s167 + $0x628] sm:$0xff]
      %v374 = vld [vmem:[%s167 + $0x630] sm:$0xff]
      %v375 = vld [vmem:[%s167 + $0x638] sm:$0xff]
      %v376 = vld [vmem:[%s167 + $0x640] sm:$0xff]
      %v377 = vld [vmem:[%s167 + $0x648] sm:$0xff]
      %v378 = vld [vmem:[%s167 + $0x650] sm:$0xff]
      %v379 = vld [vmem:[%s167 + $0x658] sm:$0xff]
      %v380 = vld [vmem:[%s167 + $0x660] sm:$0xff]
      %v381 = vld [vmem:[%s167 + $0x668] sm:$0xff]
      %v382 = vld [vmem:[%s167 + $0x670] sm:$0xff]
      %v383 = vld [vmem:[%s167 + $0x678] sm:$0xff]
      %v384 = vld [vmem:[%s167 + $0x680] sm:$0xff]
      %v385 = vld [vmem:[%s167 + $0x688] sm:$0xff]
      %v386 = vld [vmem:[%s167 + $0x690] sm:$0xff]
      %v387 = vld [vmem:[%s167 + $0x698] sm:$0xff]
      %v388 = vld [vmem:[%s167 + $0x6a0] sm:$0xff]
      %v389 = vld [vmem:[%s167 + $0x6a8] sm:$0xff]
      %v390 = vld [vmem:[%s167 + $0x6b0] sm:$0xff]
      %v391 = vld [vmem:[%s167 + $0x6b8] sm:$0xff]
      %v392 = vld [vmem:[%s167 + $0x6c0] sm:$0xff]
      %v393 = vld [vmem:[%s167 + $0x6c8] sm:$0xff]
      %v394 = vld [vmem:[%s167 + $0x6d0] sm:$0xff]
      %v395 = vld [vmem:[%s167 + $0x6d8] sm:$0xff]
      %v396 = vld [vmem:[%s167 + $0x6e0] sm:$0xff]
      %v397 = vld [vmem:[%s167 + $0x6e8] sm:$0xff]
      %v398 = vld [vmem:[%s167 + $0x6f0] sm:$0xff]
      %v399 = vld [vmem:[%s167 + $0x6f8] sm:$0xff]
      %v400 = vld [vmem:[%s167 + $0x700] sm:$0xff]
      %v401 = vld [vmem:[%s167 + $0x708] sm:$0xff]
      %v402 = vld [vmem:[%s167 + $0x710] sm:$0xff]
      %v403 = vld [vmem:[%s167 + $0x718] sm:$0xff]
      %v404 = vld [vmem:[%s167 + $0x720] sm:$0xff]
      %v405 = vld [vmem:[%s167 + $0x728] sm:$0xff]
      %v406 = vld [vmem:[%s167 + $0x730] sm:$0xff]
      %v407 = vld [vmem:[%s167 + $0x738] sm:$0xff]
      %v408 = vld [vmem:[%s167 + $0x740] sm:$0xff]
      %v409 = vld [vmem:[%s167 + $0x748] sm:$0xff]
      %v410 = vld [vmem:[%s167 + $0x750] sm:$0xff]
      %v411 = vld [vmem:[%s167 + $0x758] sm:$0xff]
      %v412 = vld [vmem:[%s167 + $0x760] sm:$0xff]
      %v413 = vld [vmem:[%s167 + $0x768] sm:$0xff]
      %v414 = vld [vmem:[%s167 + $0x770] sm:$0xff]
      %v415 = vld [vmem:[%s167 + $0x778] sm:$0xff]
      %v416 = vld [vmem:[%s167 + $0x780] sm:$0xff]
      %v417 = vld [vmem:[%s167 + $0x788] sm:$0xff]
      %v418 = vld [vmem:[%s167 + $0x790] sm:$0xff]
      %v419 = vld [vmem:[%s167 + $0x798] sm:$0xff]
      %v420 = vld [vmem:[%s167 + $0x7a0] sm:$0xff]
      %v421 = vld [vmem:[%s167 + $0x7a8] sm:$0xff]
      %v422 = vld [vmem:[%s167 + $0x7b0] sm:$0xff]
      %v423 = vld [vmem:[%s167 + $0x7b8] sm:$0xff]
      %v424 = vld [vmem:[%s167 + $0x7c0] sm:$0xff]
      %v425 = vld [vmem:[%s167 + $0x7c8] sm:$0xff]
      %v426 = vld [vmem:[%s167 + $0x7d0] sm:$0xff]
      %v427 = vld [vmem:[%s167 + $0x7d8] sm:$0xff]
      %v428 = vld [vmem:[%s167 + $0x7e0] sm:$0xff]
      %v429 = vld [vmem:[%s167 + $0x7e8] sm:$0xff]
      %v430 = vld [vmem:[%s167 + $0x7f0] sm:$0xff]
      %v431 = vld [vmem:[%s167 + $0x7f8] sm:$0xff]
      %v432 = vld [vmem:[%s1] sm:$0xff]
      %v433 = vld [vmem:[%s1 + $0x8] sm:$0x3]
      %v434 = vld [vmem:[%s2] sm:$0x1]
      %v436 = vperm.slane %v434, 0
      %vm438 = vcmask 80896
      %v440 = vsel %vm438, %v176, 0
      %v443 = vsel %vm438, %v177, 0
      %v446 = vsel %vm438, %v178, 0
      %v449 = vsel %vm438, %v179, 0
      %v452 = vsel %vm438, %v180, 0
      %v455 = vsel %vm438, %v181, 0
      %v458 = vsel %vm438, %v182, 0
      %v461 = vsel %vm438, %v183, 0
      %v464 = vsel %vm438, %v184, 0
      %v467 = vsel %vm438, %v185, 0
      %v470 = vsel %vm438, %v186, 0
      %v473 = vsel %vm438, %v187, 0
      %v476 = vsel %vm438, %v188, 0
      %v479 = vsel %vm438, %v189, 0
      %v482 = vsel %vm438, %v190, 0
      %v485 = vsel %vm438, %v191, 0
      %v488 = vsel %vm438, %v192, 0
      %v491 = vsel %vm438, %v193, 0
      %v494 = vsel %vm438, %v194, 0
      %v497 = vsel %vm438, %v195, 0
      %v500 = vsel %vm438, %v196, 0
      %v503 = vsel %vm438, %v197, 0
      %v506 = vsel %vm438, %v198, 0
      %v509 = vsel %vm438, %v199, 0
      %v512 = vsel %vm438, %v200, 0
      %v515 = vsel %vm438, %v201, 0
      %v518 = vsel %vm438, %v202, 0
      %v521 = vsel %vm438, %v203, 0
      %v524 = vsel %vm438, %v204, 0
      %v527 = vsel %vm438, %v205, 0
      %v530 = vsel %vm438, %v206, 0
      %v533 = vsel %vm438, %v207, 0
      %v536 = vsel %vm438, %v208, 0
      %v539 = vsel %vm438, %v209, 0
      %v542 = vsel %vm438, %v210, 0
      %v545 = vsel %vm438, %v211, 0
      %v548 = vsel %vm438, %v212, 0
      %v551 = vsel %vm438, %v213, 0
      %v554 = vsel %vm438, %v214, 0
      %v557 = vsel %vm438, %v215, 0
      %v560 = vsel %vm438, %v216, 0
      %v563 = vsel %vm438, %v217, 0
      %v566 = vsel %vm438, %v218, 0
      %v569 = vsel %vm438, %v219, 0
      %v572 = vsel %vm438, %v220, 0
      %v575 = vsel %vm438, %v221, 0
      %v578 = vsel %vm438, %v222, 0
      %v581 = vsel %vm438, %v223, 0
      %v584 = vsel %vm438, %v224, 0
      %v587 = vsel %vm438, %v225, 0
      %v590 = vsel %vm438, %v226, 0
      %v593 = vsel %vm438, %v227, 0
      %v596 = vsel %vm438, %v228, 0
      %v599 = vsel %vm438, %v229, 0
      %v602 = vsel %vm438, %v230, 0
      %v605 = vsel %vm438, %v231, 0
      %v608 = vsel %vm438, %v232, 0
      %v611 = vsel %vm438, %v233, 0
      %v614 = vsel %vm438, %v234, 0
      %v617 = vsel %vm438, %v235, 0
      %v620 = vsel %vm438, %v236, 0
      %v623 = vsel %vm438, %v237, 0
      %v626 = vsel %vm438, %v238, 0
      %v629 = vsel %vm438, %v239, 0
      %v632 = vsel %vm438, %v240, 0
      %v635 = vsel %vm438, %v241, 0
      %v638 = vsel %vm438, %v242, 0
      %v641 = vsel %vm438, %v243, 0
      %v644 = vsel %vm438, %v244, 0
      %v647 = vsel %vm438, %v245, 0
      %v650 = vsel %vm438, %v246, 0
      %v653 = vsel %vm438, %v247, 0
      %v656 = vsel %vm438, %v248, 0
      %v659 = vsel %vm438, %v249, 0
      %v662 = vsel %vm438, %v250, 0
      %v665 = vsel %vm438, %v251, 0
      %v668 = vsel %vm438, %v252, 0
      %v671 = vsel %vm438, %v253, 0
      %v674 = vsel %vm438, %v254, 0
      %v677 = vsel %vm438, %v255, 0
      %v680 = vsel %vm438, %v256, 0
      %v683 = vsel %vm438, %v257, 0
      %v686 = vsel %vm438, %v258, 0
      %v689 = vsel %vm438, %v259, 0
      %v692 = vsel %vm438, %v260, 0
      %v695 = vsel %vm438, %v261, 0
      %v698 = vsel %vm438, %v262, 0
      %v701 = vsel %vm438, %v263, 0
      %v704 = vsel %vm438, %v264, 0
      %v707 = vsel %vm438, %v265, 0
      %v710 = vsel %vm438, %v266, 0
      %v713 = vsel %vm438, %v267, 0
      %v716 = vsel %vm438, %v268, 0
      %v719 = vsel %vm438, %v269, 0
      %v722 = vsel %vm438, %v270, 0
      %v725 = vsel %vm438, %v271, 0
      %v728 = vsel %vm438, %v272, 0
      %v731 = vsel %vm438, %v273, 0
      %v734 = vsel %vm438, %v274, 0
      %v737 = vsel %vm438, %v275, 0
      %v740 = vsel %vm438, %v276, 0
      %v743 = vsel %vm438, %v277, 0
      %v746 = vsel %vm438, %v278, 0
      %v749 = vsel %vm438, %v279, 0
      %v752 = vsel %vm438, %v280, 0
      %v755 = vsel %vm438, %v281, 0
      %v758 = vsel %vm438, %v282, 0
      %v761 = vsel %vm438, %v283, 0
      %v764 = vsel %vm438, %v284, 0
      %v767 = vsel %vm438, %v285, 0
      %v770 = vsel %vm438, %v286, 0
      %v773 = vsel %vm438, %v287, 0
      %v776 = vsel %vm438, %v288, 0
      %v779 = vsel %vm438, %v289, 0
      %v782 = vsel %vm438, %v290, 0
      %v785 = vsel %vm438, %v291, 0
      %v788 = vsel %vm438, %v292, 0
      %v791 = vsel %vm438, %v293, 0
      %v794 = vsel %vm438, %v294, 0
      %v797 = vsel %vm438, %v295, 0
      %v800 = vsel %vm438, %v296, 0
      %v803 = vsel %vm438, %v297, 0
      %v806 = vsel %vm438, %v298, 0
      %v809 = vsel %vm438, %v299, 0
      %v812 = vsel %vm438, %v300, 0
      %v815 = vsel %vm438, %v301, 0
      %v818 = vsel %vm438, %v302, 0
      %v821 = vsel %vm438, %v303, 0
      %v824 = vsel %vm438, %v304, 0
      %v827 = vsel %vm438, %v305, 0
      %v830 = vsel %vm438, %v306, 0
      %v833 = vsel %vm438, %v307, 0
      %v836 = vsel %vm438, %v308, 0
      %v839 = vsel %vm438, %v309, 0
      %v842 = vsel %vm438, %v310, 0
      %v845 = vsel %vm438, %v311, 0
      %v848 = vsel %vm438, %v312, 0
      %v851 = vsel %vm438, %v313, 0
      %v854 = vsel %vm438, %v314, 0
      %v857 = vsel %vm438, %v315, 0
      %v860 = vsel %vm438, %v316, 0
      %v863 = vsel %vm438, %v317, 0
      %v866 = vsel %vm438, %v318, 0
      %v869 = vsel %vm438, %v319, 0
      %v872 = vsel %vm438, %v320, 0
      %v875 = vsel %vm438, %v321, 0
      %v878 = vsel %vm438, %v322, 0
      %v881 = vsel %vm438, %v323, 0
      %v884 = vsel %vm438, %v324, 0
      %v887 = vsel %vm438, %v325, 0
      %v890 = vsel %vm438, %v326, 0
      %v893 = vsel %vm438, %v327, 0
      %v896 = vsel %vm438, %v328, 0
      %v899 = vsel %vm438, %v329, 0
      %v902 = vsel %vm438, %v330, 0
      %v905 = vsel %vm438, %v331, 0
      %v908 = vsel %vm438, %v332, 0
      %v911 = vsel %vm438, %v333, 0
      %v914 = vsel %vm438, %v334, 0
      %v917 = vsel %vm438, %v335, 0
      %v920 = vsel %vm438, %v336, 0
      %v923 = vsel %vm438, %v337, 0
      %v926 = vsel %vm438, %v338, 0
      %v929 = vsel %vm438, %v339, 0
      %v932 = vsel %vm438, %v340, 0
      %v935 = vsel %vm438, %v341, 0
      %v938 = vsel %vm438, %v342, 0
      %v941 = vsel %vm438, %v343, 0
      %v944 = vsel %vm438, %v344, 0
      %v947 = vsel %vm438, %v345, 0
      %v950 = vsel %vm438, %v346, 0
      %v953 = vsel %vm438, %v347, 0
      %v956 = vsel %vm438, %v348, 0
      %v959 = vsel %vm438, %v349, 0
      %v962 = vsel %vm438, %v350, 0
      %v965 = vsel %vm438, %v351, 0
      %v968 = vsel %vm438, %v352, 0
      %v971 = vsel %vm438, %v353, 0
      %v974 = vsel %vm438, %v354, 0
      %v977 = vsel %vm438, %v355, 0
      %v980 = vsel %vm438, %v356, 0
      %v983 = vsel %vm438, %v357, 0
      %v986 = vsel %vm438, %v358, 0
      %v989 = vsel %vm438, %v359, 0
      %v992 = vsel %vm438, %v360, 0
      %v995 = vsel %vm438, %v361, 0
      %v998 = vsel %vm438, %v362, 0
      %v1001 = vsel %vm438, %v363, 0
      %v1004 = vsel %vm438, %v364, 0
      %v1007 = vsel %vm438, %v365, 0
      %v1010 = vsel %vm438, %v366, 0
      %v1013 = vsel %vm438, %v367, 0
      %v1016 = vsel %vm438, %v368, 0
      %v1019 = vsel %vm438, %v369, 0
      %v1022 = vsel %vm438, %v370, 0
      %v1025 = vsel %vm438, %v371, 0
      %v1028 = vsel %vm438, %v372, 0
      %v1031 = vsel %vm438, %v373, 0
      %v1034 = vsel %vm438, %v374, 0
      %v1037 = vsel %vm438, %v375, 0
      %v1040 = vsel %vm438, %v376, 0
      %v1043 = vsel %vm438, %v377, 0
      %v1046 = vsel %vm438, %v378, 0
      %v1049 = vsel %vm438, %v379, 0
      %v1052 = vsel %vm438, %v380, 0
      %v1055 = vsel %vm438, %v381, 0
      %v1058 = vsel %vm438, %v382, 0
      %v1061 = vsel %vm438, %v383, 0
      %v1064 = vsel %vm438, %v384, 0
      %v1067 = vsel %vm438, %v385, 0
      %v1070 = vsel %vm438, %v386, 0
      %v1073 = vsel %vm438, %v387, 0
      %v1076 = vsel %vm438, %v388, 0
      %v1079 = vsel %vm438, %v389, 0
      %v1082 = vsel %vm438, %v390, 0
      %v1085 = vsel %vm438, %v391, 0
      %v1088 = vsel %vm438, %v392, 0
      %v1091 = vsel %vm438, %v393, 0
      %v1094 = vsel %vm438, %v394, 0
      %v1097 = vsel %vm438, %v395, 0
      %v1100 = vsel %vm438, %v396, 0
      %v1103 = vsel %vm438, %v397, 0
      %v1106 = vsel %vm438, %v398, 0
      %v1109 = vsel %vm438, %v399, 0
      %v1112 = vsel %vm438, %v400, 0
      %v1115 = vsel %vm438, %v401, 0
      %v1118 = vsel %vm438, %v402, 0
      %v1121 = vsel %vm438, %v403, 0
      %v1124 = vsel %vm438, %v404, 0
      %v1127 = vsel %vm438, %v405, 0
      %v1130 = vsel %vm438, %v406, 0
      %v1133 = vsel %vm438, %v407, 0
      %v1136 = vsel %vm438, %v408, 0
      %v1139 = vsel %vm438, %v409, 0
      %v1142 = vsel %vm438, %v410, 0
      %v1145 = vsel %vm438, %v411, 0
      %v1148 = vsel %vm438, %v412, 0
      %v1151 = vsel %vm438, %v413, 0
      %v1154 = vsel %vm438, %v414, 0
      %v1157 = vsel %vm438, %v415, 0
      %v1160 = vsel %vm438, %v416, 0
      %v1163 = vsel %vm438, %v417, 0
      %v1166 = vsel %vm438, %v418, 0
      %v1169 = vsel %vm438, %v419, 0
      %v1172 = vsel %vm438, %v420, 0
      %v1175 = vsel %vm438, %v421, 0
      %v1178 = vsel %vm438, %v422, 0
      %v1181 = vsel %vm438, %v423, 0
      %v1184 = vsel %vm438, %v424, 0
      %v1187 = vsel %vm438, %v425, 0
      %v1190 = vsel %vm438, %v426, 0
      %v1193 = vsel %vm438, %v427, 0
      %v1196 = vsel %vm438, %v428, 0
      %v1199 = vsel %vm438, %v429, 0
      %v1202 = vsel %vm438, %v430, 0
      %v1205 = vsel %vm438, %v431, 0
      %vm1207 = vcmask 1041408
      %v1209 = vsel %vm1207, %v433, 0
      %1211 = vmatpush.msra.mxu0 0.0
      %1212 = vmatpush.msra.mxu0 0.0
      %1213 = vmatpush.msra.mxu0 0.0
      %1214 = vmatpush.msra.mxu0 0.0
      %1215 = vmatpush.msra.mxu0 0.0
      %1216 = vmatpush.msra.mxu0 0.0
      %1217 = vmatpush.msra.mxu0 0.0
      %1218 = vmatpush.msra.mxu0 0.0
      %1219 = vmatpush.msra.mxu0 0.0
      %1220 = vmatpush.msra.mxu0 0.0
      %1221 = vmatpush.msra.mxu0 0.0
      %1222 = vmatpush.msra.mxu0 0.0
      %1223 = vmatpush.msra.mxu0 0.0
      %1224 = vmatpush.msra.mxu0 0.0
      %1225 = vmatpush.msra.mxu0 %v1209
      %1226 = vmatpush.msra.mxu0 %v432
      %1227 = vmatmul.f32.gmra.mxu0 %v440
      %v1228 = vpop.f32.mrf.mxu0
      %v1229 = vadd.f32 %v436, %v1228
      %1230 = vmatmul.f32.gmra.mxu0 %v443
      %v1231 = vpop.f32.mrf.mxu0
      %v1232 = vadd.f32 %v436, %v1231
      %1233 = vmatmul.f32.gmra.mxu0 %v446
      %v1234 = vpop.f32.mrf.mxu0
      %v1235 = vadd.f32 %v436, %v1234
      %1236 = vmatmul.f32.gmra.mxu0 %v449
      %v1237 = vpop.f32.mrf.mxu0
      %v1238 = vadd.f32 %v436, %v1237
      %1239 = vmatmul.f32.gmra.mxu0 %v452
      %v1240 = vpop.f32.mrf.mxu0
      %v1241 = vadd.f32 %v436, %v1240
      %1242 = vmatmul.f32.gmra.mxu0 %v455
      %v1243 = vpop.f32.mrf.mxu0
      %v1244 = vadd.f32 %v436, %v1243
      %1245 = vmatmul.f32.gmra.mxu0 %v458
      %v1246 = vpop.f32.mrf.mxu0
      %v1247 = vadd.f32 %v436, %v1246
      %1248 = vmatmul.f32.gmra.mxu0 %v461
      %v1249 = vpop.f32.mrf.mxu0
      %v1250 = vadd.f32 %v436, %v1249
      %1251 = vmatmul.f32.gmra.mxu0 %v464
      %v1252 = vpop.f32.mrf.mxu0
      %v1253 = vadd.f32 %v436, %v1252
      %1254 = vmatmul.f32.gmra.mxu0 %v467
      %v1255 = vpop.f32.mrf.mxu0
      %v1256 = vadd.f32 %v436, %v1255
      %1257 = vmatmul.f32.gmra.mxu0 %v470
      %v1258 = vpop.f32.mrf.mxu0
      %v1259 = vadd.f32 %v436, %v1258
      %1260 = vmatmul.f32.gmra.mxu0 %v473
      %v1261 = vpop.f32.mrf.mxu0
      %v1262 = vadd.f32 %v436, %v1261
      %1263 = vmatmul.f32.gmra.mxu0 %v476
      %v1264 = vpop.f32.mrf.mxu0
      %v1265 = vadd.f32 %v436, %v1264
      %1266 = vmatmul.f32.gmra.mxu0 %v479
      %v1267 = vpop.f32.mrf.mxu0
      %v1268 = vadd.f32 %v436, %v1267
      %1269 = vmatmul.f32.gmra.mxu0 %v482
      %v1270 = vpop.f32.mrf.mxu0
      %v1271 = vadd.f32 %v436, %v1270
      %1272 = vmatmul.f32.gmra.mxu0 %v485
      %v1273 = vpop.f32.mrf.mxu0
      %v1274 = vadd.f32 %v436, %v1273
      %1275 = vmatmul.f32.gmra.mxu0 %v488
      %v1276 = vpop.f32.mrf.mxu0
      %v1277 = vadd.f32 %v436, %v1276
      %1278 = vmatmul.f32.gmra.mxu0 %v491
      %v1279 = vpop.f32.mrf.mxu0
      %v1280 = vadd.f32 %v436, %v1279
      %1281 = vmatmul.f32.gmra.mxu0 %v494
      %v1282 = vpop.f32.mrf.mxu0
      %v1283 = vadd.f32 %v436, %v1282
      %1284 = vmatmul.f32.gmra.mxu0 %v497
      %v1285 = vpop.f32.mrf.mxu0
      %v1286 = vadd.f32 %v436, %v1285
      %1287 = vmatmul.f32.gmra.mxu0 %v500
      %v1288 = vpop.f32.mrf.mxu0
      %v1289 = vadd.f32 %v436, %v1288
      %1290 = vmatmul.f32.gmra.mxu0 %v503
      %v1291 = vpop.f32.mrf.mxu0
      %v1292 = vadd.f32 %v436, %v1291
      %1293 = vmatmul.f32.gmra.mxu0 %v506
      %v1294 = vpop.f32.mrf.mxu0
      %v1295 = vadd.f32 %v436, %v1294
      %1296 = vmatmul.f32.gmra.mxu0 %v509
      %v1297 = vpop.f32.mrf.mxu0
      %v1298 = vadd.f32 %v436, %v1297
      %1299 = vmatmul.f32.gmra.mxu0 %v512
      %v1300 = vpop.f32.mrf.mxu0
      %v1301 = vadd.f32 %v436, %v1300
      %1302 = vmatmul.f32.gmra.mxu0 %v515
      %v1303 = vpop.f32.mrf.mxu0
      %v1304 = vadd.f32 %v436, %v1303
      %1305 = vmatmul.f32.gmra.mxu0 %v518
      %v1306 = vpop.f32.mrf.mxu0
      %v1307 = vadd.f32 %v436, %v1306
      %1308 = vmatmul.f32.gmra.mxu0 %v521
      %v1309 = vpop.f32.mrf.mxu0
      %v1310 = vadd.f32 %v436, %v1309
      %1311 = vmatmul.f32.gmra.mxu0 %v524
      %v1312 = vpop.f32.mrf.mxu0
      %v1313 = vadd.f32 %v436, %v1312
      %1314 = vmatmul.f32.gmra.mxu0 %v527
      %v1315 = vpop.f32.mrf.mxu0
      %v1316 = vadd.f32 %v436, %v1315
      %1317 = vmatmul.f32.gmra.mxu0 %v530
      %v1318 = vpop.f32.mrf.mxu0
      %v1319 = vadd.f32 %v436, %v1318
      %1320 = vmatmul.f32.gmra.mxu0 %v533
      %v1321 = vpop.f32.mrf.mxu0
      %v1322 = vadd.f32 %v436, %v1321
      %1323 = vmatmul.f32.gmra.mxu0 %v536
      %v1324 = vpop.f32.mrf.mxu0
      %v1325 = vadd.f32 %v436, %v1324
      %1326 = vmatmul.f32.gmra.mxu0 %v539
      %v1327 = vpop.f32.mrf.mxu0
      %v1328 = vadd.f32 %v436, %v1327
      %1329 = vmatmul.f32.gmra.mxu0 %v542
      %v1330 = vpop.f32.mrf.mxu0
      %v1331 = vadd.f32 %v436, %v1330
      %1332 = vmatmul.f32.gmra.mxu0 %v545
      %v1333 = vpop.f32.mrf.mxu0
      %v1334 = vadd.f32 %v436, %v1333
      %1335 = vmatmul.f32.gmra.mxu0 %v548
      %v1336 = vpop.f32.mrf.mxu0
      %v1337 = vadd.f32 %v436, %v1336
      %1338 = vmatmul.f32.gmra.mxu0 %v551
      %v1339 = vpop.f32.mrf.mxu0
      %v1340 = vadd.f32 %v436, %v1339
      %1341 = vmatmul.f32.gmra.mxu0 %v554
      %v1342 = vpop.f32.mrf.mxu0
      %v1343 = vadd.f32 %v436, %v1342
      %1344 = vmatmul.f32.gmra.mxu0 %v557
      %v1345 = vpop.f32.mrf.mxu0
      %v1346 = vadd.f32 %v436, %v1345
      %1347 = vmatmul.f32.gmra.mxu0 %v560
      %v1348 = vpop.f32.mrf.mxu0
      %v1349 = vadd.f32 %v436, %v1348
      %1350 = vmatmul.f32.gmra.mxu0 %v563
      %v1351 = vpop.f32.mrf.mxu0
      %v1352 = vadd.f32 %v436, %v1351
      %1353 = vmatmul.f32.gmra.mxu0 %v566
      %v1354 = vpop.f32.mrf.mxu0
      %v1355 = vadd.f32 %v436, %v1354
      %1356 = vmatmul.f32.gmra.mxu0 %v569
      %v1357 = vpop.f32.mrf.mxu0
      %v1358 = vadd.f32 %v436, %v1357
      %1359 = vmatmul.f32.gmra.mxu0 %v572
      %v1360 = vpop.f32.mrf.mxu0
      %v1361 = vadd.f32 %v436, %v1360
      %1362 = vmatmul.f32.gmra.mxu0 %v575
      %v1363 = vpop.f32.mrf.mxu0
      %v1364 = vadd.f32 %v436, %v1363
      %1365 = vmatmul.f32.gmra.mxu0 %v578
      %v1366 = vpop.f32.mrf.mxu0
      %v1367 = vadd.f32 %v436, %v1366
      %1368 = vmatmul.f32.gmra.mxu0 %v581
      %v1369 = vpop.f32.mrf.mxu0
      %v1370 = vadd.f32 %v436, %v1369
      %1371 = vmatmul.f32.gmra.mxu0 %v584
      %v1372 = vpop.f32.mrf.mxu0
      %v1373 = vadd.f32 %v436, %v1372
      %1374 = vmatmul.f32.gmra.mxu0 %v587
      %v1375 = vpop.f32.mrf.mxu0
      %v1376 = vadd.f32 %v436, %v1375
      %1377 = vmatmul.f32.gmra.mxu0 %v590
      %v1378 = vpop.f32.mrf.mxu0
      %v1379 = vadd.f32 %v436, %v1378
      %1380 = vmatmul.f32.gmra.mxu0 %v593
      %v1381 = vpop.f32.mrf.mxu0
      %v1382 = vadd.f32 %v436, %v1381
      %1383 = vmatmul.f32.gmra.mxu0 %v596
      %v1384 = vpop.f32.mrf.mxu0
      %v1385 = vadd.f32 %v436, %v1384
      %1386 = vmatmul.f32.gmra.mxu0 %v599
      %v1387 = vpop.f32.mrf.mxu0
      %v1388 = vadd.f32 %v436, %v1387
      %1389 = vmatmul.f32.gmra.mxu0 %v602
      %v1390 = vpop.f32.mrf.mxu0
      %v1391 = vadd.f32 %v436, %v1390
      %1392 = vmatmul.f32.gmra.mxu0 %v605
      %v1393 = vpop.f32.mrf.mxu0
      %v1394 = vadd.f32 %v436, %v1393
      %1395 = vmatmul.f32.gmra.mxu0 %v608
      %v1396 = vpop.f32.mrf.mxu0
      %v1397 = vadd.f32 %v436, %v1396
      %1398 = vmatmul.f32.gmra.mxu0 %v611
      %v1399 = vpop.f32.mrf.mxu0
      %v1400 = vadd.f32 %v436, %v1399
      %1401 = vmatmul.f32.gmra.mxu0 %v614
      %v1402 = vpop.f32.mrf.mxu0
      %v1403 = vadd.f32 %v436, %v1402
      %1404 = vmatmul.f32.gmra.mxu0 %v617
      %v1405 = vpop.f32.mrf.mxu0
      %v1406 = vadd.f32 %v436, %v1405
      %1407 = vmatmul.f32.gmra.mxu0 %v620
      %v1408 = vpop.f32.mrf.mxu0
      %v1409 = vadd.f32 %v436, %v1408
      %1410 = vmatmul.f32.gmra.mxu0 %v623
      %v1411 = vpop.f32.mrf.mxu0
      %v1412 = vadd.f32 %v436, %v1411
      %1413 = vmatmul.f32.gmra.mxu0 %v626
      %v1414 = vpop.f32.mrf.mxu0
      %v1415 = vadd.f32 %v436, %v1414
      %1416 = vmatmul.f32.gmra.mxu0 %v629
      %v1417 = vpop.f32.mrf.mxu0
      %v1418 = vadd.f32 %v436, %v1417
      %1419 = vmatmul.f32.gmra.mxu0 %v632
      %v1420 = vpop.f32.mrf.mxu0
      %v1421 = vadd.f32 %v436, %v1420
      %1422 = vmatmul.f32.gmra.mxu0 %v635
      %v1423 = vpop.f32.mrf.mxu0
      %v1424 = vadd.f32 %v436, %v1423
      %1425 = vmatmul.f32.gmra.mxu0 %v638
      %v1426 = vpop.f32.mrf.mxu0
      %v1427 = vadd.f32 %v436, %v1426
      %1428 = vmatmul.f32.gmra.mxu0 %v641
      %v1429 = vpop.f32.mrf.mxu0
      %v1430 = vadd.f32 %v436, %v1429
      %1431 = vmatmul.f32.gmra.mxu0 %v644
      %v1432 = vpop.f32.mrf.mxu0
      %v1433 = vadd.f32 %v436, %v1432
      %1434 = vmatmul.f32.gmra.mxu0 %v647
      %v1435 = vpop.f32.mrf.mxu0
      %v1436 = vadd.f32 %v436, %v1435
      %1437 = vmatmul.f32.gmra.mxu0 %v650
      %v1438 = vpop.f32.mrf.mxu0
      %v1439 = vadd.f32 %v436, %v1438
      %1440 = vmatmul.f32.gmra.mxu0 %v653
      %v1441 = vpop.f32.mrf.mxu0
      %v1442 = vadd.f32 %v436, %v1441
      %1443 = vmatmul.f32.gmra.mxu0 %v656
      %v1444 = vpop.f32.mrf.mxu0
      %v1445 = vadd.f32 %v436, %v1444
      %1446 = vmatmul.f32.gmra.mxu0 %v659
      %v1447 = vpop.f32.mrf.mxu0
      %v1448 = vadd.f32 %v436, %v1447
      %1449 = vmatmul.f32.gmra.mxu0 %v662
      %v1450 = vpop.f32.mrf.mxu0
      %v1451 = vadd.f32 %v436, %v1450
      %1452 = vmatmul.f32.gmra.mxu0 %v665
      %v1453 = vpop.f32.mrf.mxu0
      %v1454 = vadd.f32 %v436, %v1453
      %1455 = vmatmul.f32.gmra.mxu0 %v668
      %v1456 = vpop.f32.mrf.mxu0
      %v1457 = vadd.f32 %v436, %v1456
      %1458 = vmatmul.f32.gmra.mxu0 %v671
      %v1459 = vpop.f32.mrf.mxu0
      %v1460 = vadd.f32 %v436, %v1459
      %1461 = vmatmul.f32.gmra.mxu0 %v674
      %v1462 = vpop.f32.mrf.mxu0
      %v1463 = vadd.f32 %v436, %v1462
      %1464 = vmatmul.f32.gmra.mxu0 %v677
      %v1465 = vpop.f32.mrf.mxu0
      %v1466 = vadd.f32 %v436, %v1465
      %1467 = vmatmul.f32.gmra.mxu0 %v680
      %v1468 = vpop.f32.mrf.mxu0
      %v1469 = vadd.f32 %v436, %v1468
      %1470 = vmatmul.f32.gmra.mxu0 %v683
      %v1471 = vpop.f32.mrf.mxu0
      %v1472 = vadd.f32 %v436, %v1471
      %1473 = vmatmul.f32.gmra.mxu0 %v686
      %v1474 = vpop.f32.mrf.mxu0
      %v1475 = vadd.f32 %v436, %v1474
      %1476 = vmatmul.f32.gmra.mxu0 %v689
      %v1477 = vpop.f32.mrf.mxu0
      %v1478 = vadd.f32 %v436, %v1477
      %1479 = vmatmul.f32.gmra.mxu0 %v692
      %v1480 = vpop.f32.mrf.mxu0
      %v1481 = vadd.f32 %v436, %v1480
      %1482 = vmatmul.f32.gmra.mxu0 %v695
      %v1483 = vpop.f32.mrf.mxu0
      %v1484 = vadd.f32 %v436, %v1483
      %1485 = vmatmul.f32.gmra.mxu0 %v698
      %v1486 = vpop.f32.mrf.mxu0
      %v1487 = vadd.f32 %v436, %v1486
      %1488 = vmatmul.f32.gmra.mxu0 %v701
      %v1489 = vpop.f32.mrf.mxu0
      %v1490 = vadd.f32 %v436, %v1489
      %1491 = vmatmul.f32.gmra.mxu0 %v704
      %v1492 = vpop.f32.mrf.mxu0
      %v1493 = vadd.f32 %v436, %v1492
      %1494 = vmatmul.f32.gmra.mxu0 %v707
      %v1495 = vpop.f32.mrf.mxu0
      %v1496 = vadd.f32 %v436, %v1495
      %1497 = vmatmul.f32.gmra.mxu0 %v710
      %v1498 = vpop.f32.mrf.mxu0
      %v1499 = vadd.f32 %v436, %v1498
      %1500 = vmatmul.f32.gmra.mxu0 %v713
      %v1501 = vpop.f32.mrf.mxu0
      %v1502 = vadd.f32 %v436, %v1501
      %1503 = vmatmul.f32.gmra.mxu0 %v716
      %v1504 = vpop.f32.mrf.mxu0
      %v1505 = vadd.f32 %v436, %v1504
      %1506 = vmatmul.f32.gmra.mxu0 %v719
      %v1507 = vpop.f32.mrf.mxu0
      %v1508 = vadd.f32 %v436, %v1507
      %1509 = vmatmul.f32.gmra.mxu0 %v722
      %v1510 = vpop.f32.mrf.mxu0
      %v1511 = vadd.f32 %v436, %v1510
      %1512 = vmatmul.f32.gmra.mxu0 %v725
      %v1513 = vpop.f32.mrf.mxu0
      %v1514 = vadd.f32 %v436, %v1513
      %1515 = vmatmul.f32.gmra.mxu0 %v728
      %v1516 = vpop.f32.mrf.mxu0
      %v1517 = vadd.f32 %v436, %v1516
      %1518 = vmatmul.f32.gmra.mxu0 %v731
      %v1519 = vpop.f32.mrf.mxu0
      %v1520 = vadd.f32 %v436, %v1519
      %1521 = vmatmul.f32.gmra.mxu0 %v734
      %v1522 = vpop.f32.mrf.mxu0
      %v1523 = vadd.f32 %v436, %v1522
      %1524 = vmatmul.f32.gmra.mxu0 %v737
      %v1525 = vpop.f32.mrf.mxu0
      %v1526 = vadd.f32 %v436, %v1525
      %1527 = vmatmul.f32.gmra.mxu0 %v740
      %v1528 = vpop.f32.mrf.mxu0
      %v1529 = vadd.f32 %v436, %v1528
      %1530 = vmatmul.f32.gmra.mxu0 %v743
      %v1531 = vpop.f32.mrf.mxu0
      %v1532 = vadd.f32 %v436, %v1531
      %1533 = vmatmul.f32.gmra.mxu0 %v746
      %v1534 = vpop.f32.mrf.mxu0
      %v1535 = vadd.f32 %v436, %v1534
      %1536 = vmatmul.f32.gmra.mxu0 %v749
      %v1537 = vpop.f32.mrf.mxu0
      %v1538 = vadd.f32 %v436, %v1537
      %1539 = vmatmul.f32.gmra.mxu0 %v752
      %v1540 = vpop.f32.mrf.mxu0
      %v1541 = vadd.f32 %v436, %v1540
      %1542 = vmatmul.f32.gmra.mxu0 %v755
      %v1543 = vpop.f32.mrf.mxu0
      %v1544 = vadd.f32 %v436, %v1543
      %1545 = vmatmul.f32.gmra.mxu0 %v758
      %v1546 = vpop.f32.mrf.mxu0
      %v1547 = vadd.f32 %v436, %v1546
      %1548 = vmatmul.f32.gmra.mxu0 %v761
      %v1549 = vpop.f32.mrf.mxu0
      %v1550 = vadd.f32 %v436, %v1549
      %1551 = vmatmul.f32.gmra.mxu0 %v764
      %v1552 = vpop.f32.mrf.mxu0
      %v1553 = vadd.f32 %v436, %v1552
      %1554 = vmatmul.f32.gmra.mxu0 %v767
      %v1555 = vpop.f32.mrf.mxu0
      %v1556 = vadd.f32 %v436, %v1555
      %1557 = vmatmul.f32.gmra.mxu0 %v770
      %v1558 = vpop.f32.mrf.mxu0
      %v1559 = vadd.f32 %v436, %v1558
      %1560 = vmatmul.f32.gmra.mxu0 %v773
      %v1561 = vpop.f32.mrf.mxu0
      %v1562 = vadd.f32 %v436, %v1561
      %1563 = vmatmul.f32.gmra.mxu0 %v776
      %v1564 = vpop.f32.mrf.mxu0
      %v1565 = vadd.f32 %v436, %v1564
      %1566 = vmatmul.f32.gmra.mxu0 %v779
      %v1567 = vpop.f32.mrf.mxu0
      %v1568 = vadd.f32 %v436, %v1567
      %1569 = vmatmul.f32.gmra.mxu0 %v782
      %v1570 = vpop.f32.mrf.mxu0
      %v1571 = vadd.f32 %v436, %v1570
      %1572 = vmatmul.f32.gmra.mxu0 %v785
      %v1573 = vpop.f32.mrf.mxu0
      %v1574 = vadd.f32 %v436, %v1573
      %1575 = vmatmul.f32.gmra.mxu0 %v788
      %v1576 = vpop.f32.mrf.mxu0
      %v1577 = vadd.f32 %v436, %v1576
      %1578 = vmatmul.f32.gmra.mxu0 %v791
      %v1579 = vpop.f32.mrf.mxu0
      %v1580 = vadd.f32 %v436, %v1579
      %1581 = vmatmul.f32.gmra.mxu0 %v794
      %v1582 = vpop.f32.mrf.mxu0
      %v1583 = vadd.f32 %v436, %v1582
      %1584 = vmatmul.f32.gmra.mxu0 %v797
      %v1585 = vpop.f32.mrf.mxu0
      %v1586 = vadd.f32 %v436, %v1585
      %1587 = vmatmul.f32.gmra.mxu0 %v800
      %v1588 = vpop.f32.mrf.mxu0
      %v1589 = vadd.f32 %v436, %v1588
      %1590 = vmatmul.f32.gmra.mxu0 %v803
      %v1591 = vpop.f32.mrf.mxu0
      %v1592 = vadd.f32 %v436, %v1591
      %1593 = vmatmul.f32.gmra.mxu0 %v806
      %v1594 = vpop.f32.mrf.mxu0
      %v1595 = vadd.f32 %v436, %v1594
      %1596 = vmatmul.f32.gmra.mxu0 %v809
      %v1597 = vpop.f32.mrf.mxu0
      %v1598 = vadd.f32 %v436, %v1597
      %1599 = vmatmul.f32.gmra.mxu0 %v812
      %v1600 = vpop.f32.mrf.mxu0
      %v1601 = vadd.f32 %v436, %v1600
      %1602 = vmatmul.f32.gmra.mxu0 %v815
      %v1603 = vpop.f32.mrf.mxu0
      %v1604 = vadd.f32 %v436, %v1603
      %1605 = vmatmul.f32.gmra.mxu0 %v818
      %v1606 = vpop.f32.mrf.mxu0
      %v1607 = vadd.f32 %v436, %v1606
      %1608 = vmatmul.f32.gmra.mxu0 %v821
      %v1609 = vpop.f32.mrf.mxu0
      %v1610 = vadd.f32 %v436, %v1609
      %1611 = vmatmul.f32.gmra.mxu0 %v824
      %v1612 = vpop.f32.mrf.mxu0
      %v1613 = vadd.f32 %v436, %v1612
      %1614 = vmatmul.f32.gmra.mxu0 %v827
      %v1615 = vpop.f32.mrf.mxu0
      %v1616 = vadd.f32 %v436, %v1615
      %1617 = vmatmul.f32.gmra.mxu0 %v830
      %v1618 = vpop.f32.mrf.mxu0
      %v1619 = vadd.f32 %v436, %v1618
      %1620 = vmatmul.f32.gmra.mxu0 %v833
      %v1621 = vpop.f32.mrf.mxu0
      %v1622 = vadd.f32 %v436, %v1621
      %1623 = vmatmul.f32.gmra.mxu0 %v836
      %v1624 = vpop.f32.mrf.mxu0
      %v1625 = vadd.f32 %v436, %v1624
      %1626 = vmatmul.f32.gmra.mxu0 %v839
      %v1627 = vpop.f32.mrf.mxu0
      %v1628 = vadd.f32 %v436, %v1627
      %1629 = vmatmul.f32.gmra.mxu0 %v842
      %v1630 = vpop.f32.mrf.mxu0
      %v1631 = vadd.f32 %v436, %v1630
      %1632 = vmatmul.f32.gmra.mxu0 %v845
      %v1633 = vpop.f32.mrf.mxu0
      %v1634 = vadd.f32 %v436, %v1633
      %1635 = vmatmul.f32.gmra.mxu0 %v848
      %v1636 = vpop.f32.mrf.mxu0
      %v1637 = vadd.f32 %v436, %v1636
      %1638 = vmatmul.f32.gmra.mxu0 %v851
      %v1639 = vpop.f32.mrf.mxu0
      %v1640 = vadd.f32 %v436, %v1639
      %1641 = vmatmul.f32.gmra.mxu0 %v854
      %v1642 = vpop.f32.mrf.mxu0
      %v1643 = vadd.f32 %v436, %v1642
      %1644 = vmatmul.f32.gmra.mxu0 %v857
      %v1645 = vpop.f32.mrf.mxu0
      %v1646 = vadd.f32 %v436, %v1645
      %1647 = vmatmul.f32.gmra.mxu0 %v860
      %v1648 = vpop.f32.mrf.mxu0
      %v1649 = vadd.f32 %v436, %v1648
      %1650 = vmatmul.f32.gmra.mxu0 %v863
      %v1651 = vpop.f32.mrf.mxu0
      %v1652 = vadd.f32 %v436, %v1651
      %1653 = vmatmul.f32.gmra.mxu0 %v866
      %v1654 = vpop.f32.mrf.mxu0
      %v1655 = vadd.f32 %v436, %v1654
      %1656 = vmatmul.f32.gmra.mxu0 %v869
      %v1657 = vpop.f32.mrf.mxu0
      %v1658 = vadd.f32 %v436, %v1657
      %1659 = vmatmul.f32.gmra.mxu0 %v872
      %v1660 = vpop.f32.mrf.mxu0
      %v1661 = vadd.f32 %v436, %v1660
      %1662 = vmatmul.f32.gmra.mxu0 %v875
      %v1663 = vpop.f32.mrf.mxu0
      %v1664 = vadd.f32 %v436, %v1663
      %1665 = vmatmul.f32.gmra.mxu0 %v878
      %v1666 = vpop.f32.mrf.mxu0
      %v1667 = vadd.f32 %v436, %v1666
      %1668 = vmatmul.f32.gmra.mxu0 %v881
      %v1669 = vpop.f32.mrf.mxu0
      %v1670 = vadd.f32 %v436, %v1669
      %1671 = vmatmul.f32.gmra.mxu0 %v884
      %v1672 = vpop.f32.mrf.mxu0
      %v1673 = vadd.f32 %v436, %v1672
      %1674 = vmatmul.f32.gmra.mxu0 %v887
      %v1675 = vpop.f32.mrf.mxu0
      %v1676 = vadd.f32 %v436, %v1675
      %1677 = vmatmul.f32.gmra.mxu0 %v890
      %v1678 = vpop.f32.mrf.mxu0
      %v1679 = vadd.f32 %v436, %v1678
      %1680 = vmatmul.f32.gmra.mxu0 %v893
      %v1681 = vpop.f32.mrf.mxu0
      %v1682 = vadd.f32 %v436, %v1681
      %1683 = vmatmul.f32.gmra.mxu0 %v896
      %v1684 = vpop.f32.mrf.mxu0
      %v1685 = vadd.f32 %v436, %v1684
      %1686 = vmatmul.f32.gmra.mxu0 %v899
      %v1687 = vpop.f32.mrf.mxu0
      %v1688 = vadd.f32 %v436, %v1687
      %1689 = vmatmul.f32.gmra.mxu0 %v902
      %v1690 = vpop.f32.mrf.mxu0
      %v1691 = vadd.f32 %v436, %v1690
      %1692 = vmatmul.f32.gmra.mxu0 %v905
      %v1693 = vpop.f32.mrf.mxu0
      %v1694 = vadd.f32 %v436, %v1693
      %1695 = vmatmul.f32.gmra.mxu0 %v908
      %v1696 = vpop.f32.mrf.mxu0
      %v1697 = vadd.f32 %v436, %v1696
      %1698 = vmatmul.f32.gmra.mxu0 %v911
      %v1699 = vpop.f32.mrf.mxu0
      %v1700 = vadd.f32 %v436, %v1699
      %1701 = vmatmul.f32.gmra.mxu0 %v914
      %v1702 = vpop.f32.mrf.mxu0
      %v1703 = vadd.f32 %v436, %v1702
      %1704 = vmatmul.f32.gmra.mxu0 %v917
      %v1705 = vpop.f32.mrf.mxu0
      %v1706 = vadd.f32 %v436, %v1705
      %1707 = vmatmul.f32.gmra.mxu0 %v920
      %v1708 = vpop.f32.mrf.mxu0
      %v1709 = vadd.f32 %v436, %v1708
      %1710 = vmatmul.f32.gmra.mxu0 %v923
      %v1711 = vpop.f32.mrf.mxu0
      %v1712 = vadd.f32 %v436, %v1711
      %1713 = vmatmul.f32.gmra.mxu0 %v926
      %v1714 = vpop.f32.mrf.mxu0
      %v1715 = vadd.f32 %v436, %v1714
      %1716 = vmatmul.f32.gmra.mxu0 %v929
      %v1717 = vpop.f32.mrf.mxu0
      %v1718 = vadd.f32 %v436, %v1717
      %1719 = vmatmul.f32.gmra.mxu0 %v932
      %v1720 = vpop.f32.mrf.mxu0
      %v1721 = vadd.f32 %v436, %v1720
      %1722 = vmatmul.f32.gmra.mxu0 %v935
      %v1723 = vpop.f32.mrf.mxu0
      %v1724 = vadd.f32 %v436, %v1723
      %1725 = vmatmul.f32.gmra.mxu0 %v938
      %v1726 = vpop.f32.mrf.mxu0
      %v1727 = vadd.f32 %v436, %v1726
      %1728 = vmatmul.f32.gmra.mxu0 %v941
      %v1729 = vpop.f32.mrf.mxu0
      %v1730 = vadd.f32 %v436, %v1729
      %1731 = vmatmul.f32.gmra.mxu0 %v944
      %v1732 = vpop.f32.mrf.mxu0
      %v1733 = vadd.f32 %v436, %v1732
      %1734 = vmatmul.f32.gmra.mxu0 %v947
      %v1735 = vpop.f32.mrf.mxu0
      %v1736 = vadd.f32 %v436, %v1735
      %1737 = vmatmul.f32.gmra.mxu0 %v950
      %v1738 = vpop.f32.mrf.mxu0
      %v1739 = vadd.f32 %v436, %v1738
      %1740 = vmatmul.f32.gmra.mxu0 %v953
      %v1741 = vpop.f32.mrf.mxu0
      %v1742 = vadd.f32 %v436, %v1741
      %1743 = vmatmul.f32.gmra.mxu0 %v956
      %v1744 = vpop.f32.mrf.mxu0
      %v1745 = vadd.f32 %v436, %v1744
      %1746 = vmatmul.f32.gmra.mxu0 %v959
      %v1747 = vpop.f32.mrf.mxu0
      %v1748 = vadd.f32 %v436, %v1747
      %1749 = vmatmul.f32.gmra.mxu0 %v962
      %v1750 = vpop.f32.mrf.mxu0
      %v1751 = vadd.f32 %v436, %v1750
      %1752 = vmatmul.f32.gmra.mxu0 %v965
      %v1753 = vpop.f32.mrf.mxu0
      %v1754 = vadd.f32 %v436, %v1753
      %1755 = vmatmul.f32.gmra.mxu0 %v968
      %v1756 = vpop.f32.mrf.mxu0
      %v1757 = vadd.f32 %v436, %v1756
      %1758 = vmatmul.f32.gmra.mxu0 %v971
      %v1759 = vpop.f32.mrf.mxu0
      %v1760 = vadd.f32 %v436, %v1759
      %1761 = vmatmul.f32.gmra.mxu0 %v974
      %v1762 = vpop.f32.mrf.mxu0
      %v1763 = vadd.f32 %v436, %v1762
      %1764 = vmatmul.f32.gmra.mxu0 %v977
      %v1765 = vpop.f32.mrf.mxu0
      %v1766 = vadd.f32 %v436, %v1765
      %1767 = vmatmul.f32.gmra.mxu0 %v980
      %v1768 = vpop.f32.mrf.mxu0
      %v1769 = vadd.f32 %v436, %v1768
      %1770 = vmatmul.f32.gmra.mxu0 %v983
      %v1771 = vpop.f32.mrf.mxu0
      %v1772 = vadd.f32 %v436, %v1771
      %1773 = vmatmul.f32.gmra.mxu0 %v986
      %v1774 = vpop.f32.mrf.mxu0
      %v1775 = vadd.f32 %v436, %v1774
      %1776 = vmatmul.f32.gmra.mxu0 %v989
      %v1777 = vpop.f32.mrf.mxu0
      %v1778 = vadd.f32 %v436, %v1777
      %1779 = vmatmul.f32.gmra.mxu0 %v992
      %v1780 = vpop.f32.mrf.mxu0
      %v1781 = vadd.f32 %v436, %v1780
      %1782 = vmatmul.f32.gmra.mxu0 %v995
      %v1783 = vpop.f32.mrf.mxu0
      %v1784 = vadd.f32 %v436, %v1783
      %1785 = vmatmul.f32.gmra.mxu0 %v998
      %v1786 = vpop.f32.mrf.mxu0
      %v1787 = vadd.f32 %v436, %v1786
      %1788 = vmatmul.f32.gmra.mxu0 %v1001
      %v1789 = vpop.f32.mrf.mxu0
      %v1790 = vadd.f32 %v436, %v1789
      %1791 = vmatmul.f32.gmra.mxu0 %v1004
      %v1792 = vpop.f32.mrf.mxu0
      %v1793 = vadd.f32 %v436, %v1792
      %1794 = vmatmul.f32.gmra.mxu0 %v1007
      %v1795 = vpop.f32.mrf.mxu0
      %v1796 = vadd.f32 %v436, %v1795
      %1797 = vmatmul.f32.gmra.mxu0 %v1010
      %v1798 = vpop.f32.mrf.mxu0
      %v1799 = vadd.f32 %v436, %v1798
      %1800 = vmatmul.f32.gmra.mxu0 %v1013
      %v1801 = vpop.f32.mrf.mxu0
      %v1802 = vadd.f32 %v436, %v1801
      %1803 = vmatmul.f32.gmra.mxu0 %v1016
      %v1804 = vpop.f32.mrf.mxu0
      %v1805 = vadd.f32 %v436, %v1804
      %1806 = vmatmul.f32.gmra.mxu0 %v1019
      %v1807 = vpop.f32.mrf.mxu0
      %v1808 = vadd.f32 %v436, %v1807
      %1809 = vmatmul.f32.gmra.mxu0 %v1022
      %v1810 = vpop.f32.mrf.mxu0
      %v1811 = vadd.f32 %v436, %v1810
      %1812 = vmatmul.f32.gmra.mxu0 %v1025
      %v1813 = vpop.f32.mrf.mxu0
      %v1814 = vadd.f32 %v436, %v1813
      %1815 = vmatmul.f32.gmra.mxu0 %v1028
      %v1816 = vpop.f32.mrf.mxu0
      %v1817 = vadd.f32 %v436, %v1816
      %1818 = vmatmul.f32.gmra.mxu0 %v1031
      %v1819 = vpop.f32.mrf.mxu0
      %v1820 = vadd.f32 %v436, %v1819
      %1821 = vmatmul.f32.gmra.mxu0 %v1034
      %v1822 = vpop.f32.mrf.mxu0
      %v1823 = vadd.f32 %v436, %v1822
      %1824 = vmatmul.f32.gmra.mxu0 %v1037
      %v1825 = vpop.f32.mrf.mxu0
      %v1826 = vadd.f32 %v436, %v1825
      %1827 = vmatmul.f32.gmra.mxu0 %v1040
      %v1828 = vpop.f32.mrf.mxu0
      %v1829 = vadd.f32 %v436, %v1828
      %1830 = vmatmul.f32.gmra.mxu0 %v1043
      %v1831 = vpop.f32.mrf.mxu0
      %v1832 = vadd.f32 %v436, %v1831
      %1833 = vmatmul.f32.gmra.mxu0 %v1046
      %v1834 = vpop.f32.mrf.mxu0
      %v1835 = vadd.f32 %v436, %v1834
      %1836 = vmatmul.f32.gmra.mxu0 %v1049
      %v1837 = vpop.f32.mrf.mxu0
      %v1838 = vadd.f32 %v436, %v1837
      %1839 = vmatmul.f32.gmra.mxu0 %v1052
      %v1840 = vpop.f32.mrf.mxu0
      %v1841 = vadd.f32 %v436, %v1840
      %1842 = vmatmul.f32.gmra.mxu0 %v1055
      %v1843 = vpop.f32.mrf.mxu0
      %v1844 = vadd.f32 %v436, %v1843
      %1845 = vmatmul.f32.gmra.mxu0 %v1058
      %v1846 = vpop.f32.mrf.mxu0
      %v1847 = vadd.f32 %v436, %v1846
      %1848 = vmatmul.f32.gmra.mxu0 %v1061
      %v1849 = vpop.f32.mrf.mxu0
      %v1850 = vadd.f32 %v436, %v1849
      %1851 = vmatmul.f32.gmra.mxu0 %v1064
      %v1852 = vpop.f32.mrf.mxu0
      %v1853 = vadd.f32 %v436, %v1852
      %1854 = vmatmul.f32.gmra.mxu0 %v1067
      %v1855 = vpop.f32.mrf.mxu0
      %v1856 = vadd.f32 %v436, %v1855
      %1857 = vmatmul.f32.gmra.mxu0 %v1070
      %v1858 = vpop.f32.mrf.mxu0
      %v1859 = vadd.f32 %v436, %v1858
      %1860 = vmatmul.f32.gmra.mxu0 %v1073
      %v1861 = vpop.f32.mrf.mxu0
      %v1862 = vadd.f32 %v436, %v1861
      %1863 = vmatmul.f32.gmra.mxu0 %v1076
      %v1864 = vpop.f32.mrf.mxu0
      %v1865 = vadd.f32 %v436, %v1864
      %1866 = vmatmul.f32.gmra.mxu0 %v1079
      %v1867 = vpop.f32.mrf.mxu0
      %v1868 = vadd.f32 %v436, %v1867
      %1869 = vmatmul.f32.gmra.mxu0 %v1082
      %v1870 = vpop.f32.mrf.mxu0
      %v1871 = vadd.f32 %v436, %v1870
      %1872 = vmatmul.f32.gmra.mxu0 %v1085
      %v1873 = vpop.f32.mrf.mxu0
      %v1874 = vadd.f32 %v436, %v1873
      %1875 = vmatmul.f32.gmra.mxu0 %v1088
      %v1876 = vpop.f32.mrf.mxu0
      %v1877 = vadd.f32 %v436, %v1876
      %1878 = vmatmul.f32.gmra.mxu0 %v1091
      %v1879 = vpop.f32.mrf.mxu0
      %v1880 = vadd.f32 %v436, %v1879
      %1881 = vmatmul.f32.gmra.mxu0 %v1094
      %v1882 = vpop.f32.mrf.mxu0
      %v1883 = vadd.f32 %v436, %v1882
      %1884 = vmatmul.f32.gmra.mxu0 %v1097
      %v1885 = vpop.f32.mrf.mxu0
      %v1886 = vadd.f32 %v436, %v1885
      %1887 = vmatmul.f32.gmra.mxu0 %v1100
      %v1888 = vpop.f32.mrf.mxu0
      %v1889 = vadd.f32 %v436, %v1888
      %1890 = vmatmul.f32.gmra.mxu0 %v1103
      %v1891 = vpop.f32.mrf.mxu0
      %v1892 = vadd.f32 %v436, %v1891
      %1893 = vmatmul.f32.gmra.mxu0 %v1106
      %v1894 = vpop.f32.mrf.mxu0
      %v1895 = vadd.f32 %v436, %v1894
      %1896 = vmatmul.f32.gmra.mxu0 %v1109
      %v1897 = vpop.f32.mrf.mxu0
      %v1898 = vadd.f32 %v436, %v1897
      %1899 = vmatmul.f32.gmra.mxu0 %v1112
      %v1900 = vpop.f32.mrf.mxu0
      %v1901 = vadd.f32 %v436, %v1900
      %1902 = vmatmul.f32.gmra.mxu0 %v1115
      %v1903 = vpop.f32.mrf.mxu0
      %v1904 = vadd.f32 %v436, %v1903
      %1905 = vmatmul.f32.gmra.mxu0 %v1118
      %v1906 = vpop.f32.mrf.mxu0
      %v1907 = vadd.f32 %v436, %v1906
      %1908 = vmatmul.f32.gmra.mxu0 %v1121
      %v1909 = vpop.f32.mrf.mxu0
      %v1910 = vadd.f32 %v436, %v1909
      %1911 = vmatmul.f32.gmra.mxu0 %v1124
      %v1912 = vpop.f32.mrf.mxu0
      %v1913 = vadd.f32 %v436, %v1912
      %1914 = vmatmul.f32.gmra.mxu0 %v1127
      %v1915 = vpop.f32.mrf.mxu0
      %v1916 = vadd.f32 %v436, %v1915
      %1917 = vmatmul.f32.gmra.mxu0 %v1130
      %v1918 = vpop.f32.mrf.mxu0
      %v1919 = vadd.f32 %v436, %v1918
      %1920 = vmatmul.f32.gmra.mxu0 %v1133
      %v1921 = vpop.f32.mrf.mxu0
      %v1922 = vadd.f32 %v436, %v1921
      %1923 = vmatmul.f32.gmra.mxu0 %v1136
      %v1924 = vpop.f32.mrf.mxu0
      %v1925 = vadd.f32 %v436, %v1924
      %1926 = vmatmul.f32.gmra.mxu0 %v1139
      %v1927 = vpop.f32.mrf.mxu0
      %v1928 = vadd.f32 %v436, %v1927
      %1929 = vmatmul.f32.gmra.mxu0 %v1142
      %v1930 = vpop.f32.mrf.mxu0
      %v1931 = vadd.f32 %v436, %v1930
      %1932 = vmatmul.f32.gmra.mxu0 %v1145
      %v1933 = vpop.f32.mrf.mxu0
      %v1934 = vadd.f32 %v436, %v1933
      %1935 = vmatmul.f32.gmra.mxu0 %v1148
      %v1936 = vpop.f32.mrf.mxu0
      %v1937 = vadd.f32 %v436, %v1936
      %1938 = vmatmul.f32.gmra.mxu0 %v1151
      %v1939 = vpop.f32.mrf.mxu0
      %v1940 = vadd.f32 %v436, %v1939
      %1941 = vmatmul.f32.gmra.mxu0 %v1154
      %v1942 = vpop.f32.mrf.mxu0
      %v1943 = vadd.f32 %v436, %v1942
      %1944 = vmatmul.f32.gmra.mxu0 %v1157
      %v1945 = vpop.f32.mrf.mxu0
      %v1946 = vadd.f32 %v436, %v1945
      %1947 = vmatmul.f32.gmra.mxu0 %v1160
      %v1948 = vpop.f32.mrf.mxu0
      %v1949 = vadd.f32 %v436, %v1948
      %1950 = vmatmul.f32.gmra.mxu0 %v1163
      %v1951 = vpop.f32.mrf.mxu0
      %v1952 = vadd.f32 %v436, %v1951
      %1953 = vmatmul.f32.gmra.mxu0 %v1166
      %v1954 = vpop.f32.mrf.mxu0
      %v1955 = vadd.f32 %v436, %v1954
      %1956 = vmatmul.f32.gmra.mxu0 %v1169
      %v1957 = vpop.f32.mrf.mxu0
      %v1958 = vadd.f32 %v436, %v1957
      %1959 = vmatmul.f32.gmra.mxu0 %v1172
      %v1960 = vpop.f32.mrf.mxu0
      %v1961 = vadd.f32 %v436, %v1960
      %1962 = vmatmul.f32.gmra.mxu0 %v1175
      %v1963 = vpop.f32.mrf.mxu0
      %v1964 = vadd.f32 %v436, %v1963
      %1965 = vmatmul.f32.gmra.mxu0 %v1178
      %v1966 = vpop.f32.mrf.mxu0
      %v1967 = vadd.f32 %v436, %v1966
      %1968 = vmatmul.f32.gmra.mxu0 %v1181
      %v1969 = vpop.f32.mrf.mxu0
      %v1970 = vadd.f32 %v436, %v1969
      %1971 = vmatmul.f32.gmra.mxu0 %v1184
      %v1972 = vpop.f32.mrf.mxu0
      %v1973 = vadd.f32 %v436, %v1972
      %1974 = vmatmul.f32.gmra.mxu0 %v1187
      %v1975 = vpop.f32.mrf.mxu0
      %v1976 = vadd.f32 %v436, %v1975
      %1977 = vmatmul.f32.gmra.mxu0 %v1190
      %v1978 = vpop.f32.mrf.mxu0
      %v1979 = vadd.f32 %v436, %v1978
      %1980 = vmatmul.f32.gmra.mxu0 %v1193
      %v1981 = vpop.f32.mrf.mxu0
      %v1982 = vadd.f32 %v436, %v1981
      %1983 = vmatmul.f32.gmra.mxu0 %v1196
      %v1984 = vpop.f32.mrf.mxu0
      %v1985 = vadd.f32 %v436, %v1984
      %1986 = vmatmul.f32.gmra.mxu0 %v1199
      %v1987 = vpop.f32.mrf.mxu0
      %v1988 = vadd.f32 %v436, %v1987
      %1989 = vmatmul.f32.gmra.mxu0 %v1202
      %v1990 = vpop.f32.mrf.mxu0
      %v1991 = vadd.f32 %v436, %v1990
      %1992 = vmatmul.f32.gmra.mxu0 %v1205
      %v1993 = vpop.f32.mrf.mxu0
      %v1994 = vadd.f32 %v436, %v1993
      %1995 = vdwg.mxu0
      %v1996 = vmax.f32 %v1229, 0.0
      %v1997 = vmax.f32 %v1232, 0.0
      %v1998 = vmax.f32 %v1235, 0.0
      %v1999 = vmax.f32 %v1238, 0.0
      %v2000 = vmax.f32 %v1241, 0.0
      %v2001 = vmax.f32 %v1244, 0.0
      %v2002 = vmax.f32 %v1247, 0.0
      %v2003 = vmax.f32 %v1250, 0.0
      %v2004 = vmax.f32 %v1253, 0.0
      %v2005 = vmax.f32 %v1256, 0.0
      %v2006 = vmax.f32 %v1259, 0.0
      %v2007 = vmax.f32 %v1262, 0.0
      %v2008 = vmax.f32 %v1265, 0.0
      %v2009 = vmax.f32 %v1268, 0.0
      %v2010 = vmax.f32 %v1271, 0.0
      %v2011 = vmax.f32 %v1274, 0.0
      %v2012 = vmax.f32 %v1277, 0.0
      %v2013 = vmax.f32 %v1280, 0.0
      %v2014 = vmax.f32 %v1283, 0.0
      %v2015 = vmax.f32 %v1286, 0.0
      %v2016 = vmax.f32 %v1289, 0.0
      %v2017 = vmax.f32 %v1292, 0.0
      %v2018 = vmax.f32 %v1295, 0.0
      %v2019 = vmax.f32 %v1298, 0.0
      %v2020 = vmax.f32 %v1301, 0.0
      %v2021 = vmax.f32 %v1304, 0.0
      %v2022 = vmax.f32 %v1307, 0.0
      %v2023 = vmax.f32 %v1310, 0.0
      %v2024 = vmax.f32 %v1313, 0.0
      %v2025 = vmax.f32 %v1316, 0.0
      %v2026 = vmax.f32 %v1319, 0.0
      %v2027 = vmax.f32 %v1322, 0.0
      %v2028 = vmax.f32 %v1325, 0.0
      %v2029 = vmax.f32 %v1328, 0.0
      %v2030 = vmax.f32 %v1331, 0.0
      %v2031 = vmax.f32 %v1334, 0.0
      %v2032 = vmax.f32 %v1337, 0.0
      %v2033 = vmax.f32 %v1340, 0.0
      %v2034 = vmax.f32 %v1343, 0.0
      %v2035 = vmax.f32 %v1346, 0.0
      %v2036 = vmax.f32 %v1349, 0.0
      %v2037 = vmax.f32 %v1352, 0.0
      %v2038 = vmax.f32 %v1355, 0.0
      %v2039 = vmax.f32 %v1358, 0.0
      %v2040 = vmax.f32 %v1361, 0.0
      %v2041 = vmax.f32 %v1364, 0.0
      %v2042 = vmax.f32 %v1367, 0.0
      %v2043 = vmax.f32 %v1370, 0.0
      %v2044 = vmax.f32 %v1373, 0.0
      %v2045 = vmax.f32 %v1376, 0.0
      %v2046 = vmax.f32 %v1379, 0.0
      %v2047 = vmax.f32 %v1382, 0.0
      %v2048 = vmax.f32 %v1385, 0.0
      %v2049 = vmax.f32 %v1388, 0.0
      %v2050 = vmax.f32 %v1391, 0.0
      %v2051 = vmax.f32 %v1394, 0.0
      %v2052 = vmax.f32 %v1397, 0.0
      %v2053 = vmax.f32 %v1400, 0.0
      %v2054 = vmax.f32 %v1403, 0.0
      %v2055 = vmax.f32 %v1406, 0.0
      %v2056 = vmax.f32 %v1409, 0.0
      %v2057 = vmax.f32 %v1412, 0.0
      %v2058 = vmax.f32 %v1415, 0.0
      %v2059 = vmax.f32 %v1418, 0.0
      %v2060 = vmax.f32 %v1421, 0.0
      %v2061 = vmax.f32 %v1424, 0.0
      %v2062 = vmax.f32 %v1427, 0.0
      %v2063 = vmax.f32 %v1430, 0.0
      %v2064 = vmax.f32 %v1433, 0.0
      %v2065 = vmax.f32 %v1436, 0.0
      %v2066 = vmax.f32 %v1439, 0.0
      %v2067 = vmax.f32 %v1442, 0.0
      %v2068 = vmax.f32 %v1445, 0.0
      %v2069 = vmax.f32 %v1448, 0.0
      %v2070 = vmax.f32 %v1451, 0.0
      %v2071 = vmax.f32 %v1454, 0.0
      %v2072 = vmax.f32 %v1457, 0.0
      %v2073 = vmax.f32 %v1460, 0.0
      %v2074 = vmax.f32 %v1463, 0.0
      %v2075 = vmax.f32 %v1466, 0.0
      %v2076 = vmax.f32 %v1469, 0.0
      %v2077 = vmax.f32 %v1472, 0.0
      %v2078 = vmax.f32 %v1475, 0.0
      %v2079 = vmax.f32 %v1478, 0.0
      %v2080 = vmax.f32 %v1481, 0.0
      %v2081 = vmax.f32 %v1484, 0.0
      %v2082 = vmax.f32 %v1487, 0.0
      %v2083 = vmax.f32 %v1490, 0.0
      %v2084 = vmax.f32 %v1493, 0.0
      %v2085 = vmax.f32 %v1496, 0.0
      %v2086 = vmax.f32 %v1499, 0.0
      %v2087 = vmax.f32 %v1502, 0.0
      %v2088 = vmax.f32 %v1505, 0.0
      %v2089 = vmax.f32 %v1508, 0.0
      %v2090 = vmax.f32 %v1511, 0.0
      %v2091 = vmax.f32 %v1514, 0.0
      %v2092 = vmax.f32 %v1517, 0.0
      %v2093 = vmax.f32 %v1520, 0.0
      %v2094 = vmax.f32 %v1523, 0.0
      %v2095 = vmax.f32 %v1526, 0.0
      %v2096 = vmax.f32 %v1529, 0.0
      %v2097 = vmax.f32 %v1532, 0.0
      %v2098 = vmax.f32 %v1535, 0.0
      %v2099 = vmax.f32 %v1538, 0.0
      %v2100 = vmax.f32 %v1541, 0.0
      %v2101 = vmax.f32 %v1544, 0.0
      %v2102 = vmax.f32 %v1547, 0.0
      %v2103 = vmax.f32 %v1550, 0.0
      %v2104 = vmax.f32 %v1553, 0.0
      %v2105 = vmax.f32 %v1556, 0.0
      %v2106 = vmax.f32 %v1559, 0.0
      %v2107 = vmax.f32 %v1562, 0.0
      %v2108 = vmax.f32 %v1565, 0.0
      %v2109 = vmax.f32 %v1568, 0.0
      %v2110 = vmax.f32 %v1571, 0.0
      %v2111 = vmax.f32 %v1574, 0.0
      %v2112 = vmax.f32 %v1577, 0.0
      %v2113 = vmax.f32 %v1580, 0.0
      %v2114 = vmax.f32 %v1583, 0.0
      %v2115 = vmax.f32 %v1586, 0.0
      %v2116 = vmax.f32 %v1589, 0.0
      %v2117 = vmax.f32 %v1592, 0.0
      %v2118 = vmax.f32 %v1595, 0.0
      %v2119 = vmax.f32 %v1598, 0.0
      %v2120 = vmax.f32 %v1601, 0.0
      %v2121 = vmax.f32 %v1604, 0.0
      %v2122 = vmax.f32 %v1607, 0.0
      %v2123 = vmax.f32 %v1610, 0.0
      %v2124 = vmax.f32 %v1613, 0.0
      %v2125 = vmax.f32 %v1616, 0.0
      %v2126 = vmax.f32 %v1619, 0.0
      %v2127 = vmax.f32 %v1622, 0.0
      %v2128 = vmax.f32 %v1625, 0.0
      %v2129 = vmax.f32 %v1628, 0.0
      %v2130 = vmax.f32 %v1631, 0.0
      %v2131 = vmax.f32 %v1634, 0.0
      %v2132 = vmax.f32 %v1637, 0.0
      %v2133 = vmax.f32 %v1640, 0.0
      %v2134 = vmax.f32 %v1643, 0.0
      %v2135 = vmax.f32 %v1646, 0.0
      %v2136 = vmax.f32 %v1649, 0.0
      %v2137 = vmax.f32 %v1652, 0.0
      %v2138 = vmax.f32 %v1655, 0.0
      %v2139 = vmax.f32 %v1658, 0.0
      %v2140 = vmax.f32 %v1661, 0.0
      %v2141 = vmax.f32 %v1664, 0.0
      %v2142 = vmax.f32 %v1667, 0.0
      %v2143 = vmax.f32 %v1670, 0.0
      %v2144 = vmax.f32 %v1673, 0.0
      %v2145 = vmax.f32 %v1676, 0.0
      %v2146 = vmax.f32 %v1679, 0.0
      %v2147 = vmax.f32 %v1682, 0.0
      %v2148 = vmax.f32 %v1685, 0.0
      %v2149 = vmax.f32 %v1688, 0.0
      %v2150 = vmax.f32 %v1691, 0.0
      %v2151 = vmax.f32 %v1694, 0.0
      %v2152 = vmax.f32 %v1697, 0.0
      %v2153 = vmax.f32 %v1700, 0.0
      %v2154 = vmax.f32 %v1703, 0.0
      %v2155 = vmax.f32 %v1706, 0.0
      %v2156 = vmax.f32 %v1709, 0.0
      %v2157 = vmax.f32 %v1712, 0.0
      %v2158 = vmax.f32 %v1715, 0.0
      %v2159 = vmax.f32 %v1718, 0.0
      %v2160 = vmax.f32 %v1721, 0.0
      %v2161 = vmax.f32 %v1724, 0.0
      %v2162 = vmax.f32 %v1727, 0.0
      %v2163 = vmax.f32 %v1730, 0.0
      %v2164 = vmax.f32 %v1733, 0.0
      %v2165 = vmax.f32 %v1736, 0.0
      %v2166 = vmax.f32 %v1739, 0.0
      %v2167 = vmax.f32 %v1742, 0.0
      %v2168 = vmax.f32 %v1745, 0.0
      %v2169 = vmax.f32 %v1748, 0.0
      %v2170 = vmax.f32 %v1751, 0.0
      %v2171 = vmax.f32 %v1754, 0.0
      %v2172 = vmax.f32 %v1757, 0.0
      %v2173 = vmax.f32 %v1760, 0.0
      %v2174 = vmax.f32 %v1763, 0.0
      %v2175 = vmax.f32 %v1766, 0.0
      %v2176 = vmax.f32 %v1769, 0.0
      %v2177 = vmax.f32 %v1772, 0.0
      %v2178 = vmax.f32 %v1775, 0.0
      %v2179 = vmax.f32 %v1778, 0.0
      %v2180 = vmax.f32 %v1781, 0.0
      %v2181 = vmax.f32 %v1784, 0.0
      %v2182 = vmax.f32 %v1787, 0.0
      %v2183 = vmax.f32 %v1790, 0.0
      %v2184 = vmax.f32 %v1793, 0.0
      %v2185 = vmax.f32 %v1796, 0.0
      %v2186 = vmax.f32 %v1799, 0.0
      %v2187 = vmax.f32 %v1802, 0.0
      %v2188 = vmax.f32 %v1805, 0.0
      %v2189 = vmax.f32 %v1808, 0.0
      %v2190 = vmax.f32 %v1811, 0.0
      %v2191 = vmax.f32 %v1814, 0.0
      %v2192 = vmax.f32 %v1817, 0.0
      %v2193 = vmax.f32 %v1820, 0.0
      %v2194 = vmax.f32 %v1823, 0.0
      %v2195 = vmax.f32 %v1826, 0.0
      %v2196 = vmax.f32 %v1829, 0.0
      %v2197 = vmax.f32 %v1832, 0.0
      %v2198 = vmax.f32 %v1835, 0.0
      %v2199 = vmax.f32 %v1838, 0.0
      %v2200 = vmax.f32 %v1841, 0.0
      %v2201 = vmax.f32 %v1844, 0.0
      %v2202 = vmax.f32 %v1847, 0.0
      %v2203 = vmax.f32 %v1850, 0.0
      %v2204 = vmax.f32 %v1853, 0.0
      %v2205 = vmax.f32 %v1856, 0.0
      %v2206 = vmax.f32 %v1859, 0.0
      %v2207 = vmax.f32 %v1862, 0.0
      %v2208 = vmax.f32 %v1865, 0.0
      %v2209 = vmax.f32 %v1868, 0.0
      %v2210 = vmax.f32 %v1871, 0.0
      %v2211 = vmax.f32 %v1874, 0.0
      %v2212 = vmax.f32 %v1877, 0.0
      %v2213 = vmax.f32 %v1880, 0.0
      %v2214 = vmax.f32 %v1883, 0.0
      %v2215 = vmax.f32 %v1886, 0.0
      %v2216 = vmax.f32 %v1889, 0.0
      %v2217 = vmax.f32 %v1892, 0.0
      %v2218 = vmax.f32 %v1895, 0.0
      %v2219 = vmax.f32 %v1898, 0.0
      %v2220 = vmax.f32 %v1901, 0.0
      %v2221 = vmax.f32 %v1904, 0.0
      %v2222 = vmax.f32 %v1907, 0.0
      %v2223 = vmax.f32 %v1910, 0.0
      %v2224 = vmax.f32 %v1913, 0.0
      %v2225 = vmax.f32 %v1916, 0.0
      %v2226 = vmax.f32 %v1919, 0.0
      %v2227 = vmax.f32 %v1922, 0.0
      %v2228 = vmax.f32 %v1925, 0.0
      %v2229 = vmax.f32 %v1928, 0.0
      %v2230 = vmax.f32 %v1931, 0.0
      %v2231 = vmax.f32 %v1934, 0.0
      %v2232 = vmax.f32 %v1937, 0.0
      %v2233 = vmax.f32 %v1940, 0.0
      %v2234 = vmax.f32 %v1943, 0.0
      %v2235 = vmax.f32 %v1946, 0.0
      %v2236 = vmax.f32 %v1949, 0.0
      %v2237 = vmax.f32 %v1952, 0.0
      %v2238 = vmax.f32 %v1955, 0.0
      %v2239 = vmax.f32 %v1958, 0.0
      %v2240 = vmax.f32 %v1961, 0.0
      %v2241 = vmax.f32 %v1964, 0.0
      %v2242 = vmax.f32 %v1967, 0.0
      %v2243 = vmax.f32 %v1970, 0.0
      %v2244 = vmax.f32 %v1973, 0.0
      %v2245 = vmax.f32 %v1976, 0.0
      %v2246 = vmax.f32 %v1979, 0.0
      %v2247 = vmax.f32 %v1982, 0.0
      %v2248 = vmax.f32 %v1985, 0.0
      %v2249 = vmax.f32 %v1988, 0.0
      %v2250 = vmax.f32 %v1991, 0.0
      %v2251 = vmax.f32 %v1994, 0.0
      %vm2252 = vcmask 261120
      %v2253 = vsel %vm2252, %v1996, -inf
      %v2254 = vsel %vm2252, %v1997, -inf
      %v2255 = vmax.f32 %v2253, %v2254
      %v2256 = vsel %vm2252, %v1998, -inf
      %v2257 = vmax.f32 %v2255, %v2256
      %v2258 = vsel %vm2252, %v1999, -inf
      %v2259 = vmax.f32 %v2257, %v2258
      %v2260 = vrot.slane %v2259, 4
      %v2261 = vmax.f32 %v2259, %v2260
      %v2262 = vrot.slane %v2261, 2
      %v2263 = vmax.f32 %v2261, %v2262
      %v2264 = vrot.slane %v2263, 1
      %v2265 = vmax.f32 %v2263, %v2264
      %v2266 = vsel %vm2252, %v2000, -inf
      %v2267 = vsel %vm2252, %v2001, -inf
      %v2268 = vmax.f32 %v2266, %v2267
      %v2269 = vsel %vm2252, %v2002, -inf
      %v2270 = vmax.f32 %v2268, %v2269
      %v2271 = vsel %vm2252, %v2003, -inf
      %v2272 = vmax.f32 %v2270, %v2271
      %v2273 = vrot.slane %v2272, 4
      %v2274 = vmax.f32 %v2272, %v2273
      %v2275 = vrot.slane %v2274, 2
      %v2276 = vmax.f32 %v2274, %v2275
      %v2277 = vrot.slane %v2276, 1
      %v2278 = vmax.f32 %v2276, %v2277
      %v2279 = vsel %vm2252, %v2004, -inf
      %v2280 = vsel %vm2252, %v2005, -inf
      %v2281 = vmax.f32 %v2279, %v2280
      %v2282 = vsel %vm2252, %v2006, -inf
      %v2283 = vmax.f32 %v2281, %v2282
      %v2284 = vsel %vm2252, %v2007, -inf
      %v2285 = vmax.f32 %v2283, %v2284
      %v2286 = vrot.slane %v2285, 4
      %v2287 = vmax.f32 %v2285, %v2286
      %v2288 = vrot.slane %v2287, 2
      %v2289 = vmax.f32 %v2287, %v2288
      %v2290 = vrot.slane %v2289, 1
      %v2291 = vmax.f32 %v2289, %v2290
      %v2292 = vsel %vm2252, %v2008, -inf
      %v2293 = vsel %vm2252, %v2009, -inf
      %v2294 = vmax.f32 %v2292, %v2293
      %v2295 = vsel %vm2252, %v2010, -inf
      %v2296 = vmax.f32 %v2294, %v2295
      %v2297 = vsel %vm2252, %v2011, -inf
      %v2298 = vmax.f32 %v2296, %v2297
      %v2299 = vrot.slane %v2298, 4
      %v2300 = vmax.f32 %v2298, %v2299
      %v2301 = vrot.slane %v2300, 2
      %v2302 = vmax.f32 %v2300, %v2301
      %v2303 = vrot.slane %v2302, 1
      %v2304 = vmax.f32 %v2302, %v2303
      %v2305 = vsel %vm2252, %v2012, -inf
      %v2306 = vsel %vm2252, %v2013, -inf
      %v2307 = vmax.f32 %v2305, %v2306
      %v2308 = vsel %vm2252, %v2014, -inf
      %v2309 = vmax.f32 %v2307, %v2308
      %v2310 = vsel %vm2252, %v2015, -inf
      %v2311 = vmax.f32 %v2309, %v2310
      %v2312 = vrot.slane %v2311, 4
      %v2313 = vmax.f32 %v2311, %v2312
      %v2314 = vrot.slane %v2313, 2
      %v2315 = vmax.f32 %v2313, %v2314
      %v2316 = vrot.slane %v2315, 1
      %v2317 = vmax.f32 %v2315, %v2316
      %v2318 = vsel %vm2252, %v2016, -inf
      %v2319 = vsel %vm2252, %v2017, -inf
      %v2320 = vmax.f32 %v2318, %v2319
      %v2321 = vsel %vm2252, %v2018, -inf
      %v2322 = vmax.f32 %v2320, %v2321
      %v2323 = vsel %vm2252, %v2019, -inf
      %v2324 = vmax.f32 %v2322, %v2323
      %v2325 = vrot.slane %v2324, 4
      %v2326 = vmax.f32 %v2324, %v2325
      %v2327 = vrot.slane %v2326, 2
      %v2328 = vmax.f32 %v2326, %v2327
      %v2329 = vrot.slane %v2328, 1
      %v2330 = vmax.f32 %v2328, %v2329
      %v2331 = vsel %vm2252, %v2020, -inf
      %v2332 = vsel %vm2252, %v2021, -inf
      %v2333 = vmax.f32 %v2331, %v2332
      %v2334 = vsel %vm2252, %v2022, -inf
      %v2335 = vmax.f32 %v2333, %v2334
      %v2336 = vsel %vm2252, %v2023, -inf
      %v2337 = vmax.f32 %v2335, %v2336
      %v2338 = vrot.slane %v2337, 4
      %v2339 = vmax.f32 %v2337, %v2338
      %v2340 = vrot.slane %v2339, 2
      %v2341 = vmax.f32 %v2339, %v2340
      %v2342 = vrot.slane %v2341, 1
      %v2343 = vmax.f32 %v2341, %v2342
      %v2344 = vsel %vm2252, %v2024, -inf
      %v2345 = vsel %vm2252, %v2025, -inf
      %v2346 = vmax.f32 %v2344, %v2345
      %v2347 = vsel %vm2252, %v2026, -inf
      %v2348 = vmax.f32 %v2346, %v2347
      %v2349 = vsel %vm2252, %v2027, -inf
      %v2350 = vmax.f32 %v2348, %v2349
      %v2351 = vrot.slane %v2350, 4
      %v2352 = vmax.f32 %v2350, %v2351
      %v2353 = vrot.slane %v2352, 2
      %v2354 = vmax.f32 %v2352, %v2353
      %v2355 = vrot.slane %v2354, 1
      %v2356 = vmax.f32 %v2354, %v2355
      %v2357 = vsel %vm2252, %v2028, -inf
      %v2358 = vsel %vm2252, %v2029, -inf
      %v2359 = vmax.f32 %v2357, %v2358
      %v2360 = vsel %vm2252, %v2030, -inf
      %v2361 = vmax.f32 %v2359, %v2360
      %v2362 = vsel %vm2252, %v2031, -inf
      %v2363 = vmax.f32 %v2361, %v2362
      %v2364 = vrot.slane %v2363, 4
      %v2365 = vmax.f32 %v2363, %v2364
      %v2366 = vrot.slane %v2365, 2
      %v2367 = vmax.f32 %v2365, %v2366
      %v2368 = vrot.slane %v2367, 1
      %v2369 = vmax.f32 %v2367, %v2368
      %v2370 = vsel %vm2252, %v2032, -inf
      %v2371 = vsel %vm2252, %v2033, -inf
      %v2372 = vmax.f32 %v2370, %v2371
      %v2373 = vsel %vm2252, %v2034, -inf
      %v2374 = vmax.f32 %v2372, %v2373
      %v2375 = vsel %vm2252, %v2035, -inf
      %v2376 = vmax.f32 %v2374, %v2375
      %v2377 = vrot.slane %v2376, 4
      %v2378 = vmax.f32 %v2376, %v2377
      %v2379 = vrot.slane %v2378, 2
      %v2380 = vmax.f32 %v2378, %v2379
      %v2381 = vrot.slane %v2380, 1
      %v2382 = vmax.f32 %v2380, %v2381
      %v2383 = vsel %vm2252, %v2036, -inf
      %v2384 = vsel %vm2252, %v2037, -inf
      %v2385 = vmax.f32 %v2383, %v2384
      %v2386 = vsel %vm2252, %v2038, -inf
      %v2387 = vmax.f32 %v2385, %v2386
      %v2388 = vsel %vm2252, %v2039, -inf
      %v2389 = vmax.f32 %v2387, %v2388
      %v2390 = vrot.slane %v2389, 4
      %v2391 = vmax.f32 %v2389, %v2390
      %v2392 = vrot.slane %v2391, 2
      %v2393 = vmax.f32 %v2391, %v2392
      %v2394 = vrot.slane %v2393, 1
      %v2395 = vmax.f32 %v2393, %v2394
      %v2396 = vsel %vm2252, %v2040, -inf
      %v2397 = vsel %vm2252, %v2041, -inf
      %v2398 = vmax.f32 %v2396, %v2397
      %v2399 = vsel %vm2252, %v2042, -inf
      %v2400 = vmax.f32 %v2398, %v2399
      %v2401 = vsel %vm2252, %v2043, -inf
      %v2402 = vmax.f32 %v2400, %v2401
      %v2403 = vrot.slane %v2402, 4
      %v2404 = vmax.f32 %v2402, %v2403
      %v2405 = vrot.slane %v2404, 2
      %v2406 = vmax.f32 %v2404, %v2405
      %v2407 = vrot.slane %v2406, 1
      %v2408 = vmax.f32 %v2406, %v2407
      %v2409 = vsel %vm2252, %v2044, -inf
      %v2410 = vsel %vm2252, %v2045, -inf
      %v2411 = vmax.f32 %v2409, %v2410
      %v2412 = vsel %vm2252, %v2046, -inf
      %v2413 = vmax.f32 %v2411, %v2412
      %v2414 = vsel %vm2252, %v2047, -inf
      %v2415 = vmax.f32 %v2413, %v2414
      %v2416 = vrot.slane %v2415, 4
      %v2417 = vmax.f32 %v2415, %v2416
      %v2418 = vrot.slane %v2417, 2
      %v2419 = vmax.f32 %v2417, %v2418
      %v2420 = vrot.slane %v2419, 1
      %v2421 = vmax.f32 %v2419, %v2420
      %v2422 = vsel %vm2252, %v2048, -inf
      %v2423 = vsel %vm2252, %v2049, -inf
      %v2424 = vmax.f32 %v2422, %v2423
      %v2425 = vsel %vm2252, %v2050, -inf
      %v2426 = vmax.f32 %v2424, %v2425
      %v2427 = vsel %vm2252, %v2051, -inf
      %v2428 = vmax.f32 %v2426, %v2427
      %v2429 = vrot.slane %v2428, 4
      %v2430 = vmax.f32 %v2428, %v2429
      %v2431 = vrot.slane %v2430, 2
      %v2432 = vmax.f32 %v2430, %v2431
      %v2433 = vrot.slane %v2432, 1
      %v2434 = vmax.f32 %v2432, %v2433
      %v2435 = vsel %vm2252, %v2052, -inf
      %v2436 = vsel %vm2252, %v2053, -inf
      %v2437 = vmax.f32 %v2435, %v2436
      %v2438 = vsel %vm2252, %v2054, -inf
      %v2439 = vmax.f32 %v2437, %v2438
      %v2440 = vsel %vm2252, %v2055, -inf
      %v2441 = vmax.f32 %v2439, %v2440
      %v2442 = vrot.slane %v2441, 4
      %v2443 = vmax.f32 %v2441, %v2442
      %v2444 = vrot.slane %v2443, 2
      %v2445 = vmax.f32 %v2443, %v2444
      %v2446 = vrot.slane %v2445, 1
      %v2447 = vmax.f32 %v2445, %v2446
      %v2448 = vsel %vm2252, %v2056, -inf
      %v2449 = vsel %vm2252, %v2057, -inf
      %v2450 = vmax.f32 %v2448, %v2449
      %v2451 = vsel %vm2252, %v2058, -inf
      %v2452 = vmax.f32 %v2450, %v2451
      %v2453 = vsel %vm2252, %v2059, -inf
      %v2454 = vmax.f32 %v2452, %v2453
      %v2455 = vrot.slane %v2454, 4
      %v2456 = vmax.f32 %v2454, %v2455
      %v2457 = vrot.slane %v2456, 2
      %v2458 = vmax.f32 %v2456, %v2457
      %v2459 = vrot.slane %v2458, 1
      %v2460 = vmax.f32 %v2458, %v2459
      %v2461 = vsel %vm2252, %v2060, -inf
      %v2462 = vsel %vm2252, %v2061, -inf
      %v2463 = vmax.f32 %v2461, %v2462
      %v2464 = vsel %vm2252, %v2062, -inf
      %v2465 = vmax.f32 %v2463, %v2464
      %v2466 = vsel %vm2252, %v2063, -inf
      %v2467 = vmax.f32 %v2465, %v2466
      %v2468 = vrot.slane %v2467, 4
      %v2469 = vmax.f32 %v2467, %v2468
      %v2470 = vrot.slane %v2469, 2
      %v2471 = vmax.f32 %v2469, %v2470
      %v2472 = vrot.slane %v2471, 1
      %v2473 = vmax.f32 %v2471, %v2472
      %v2474 = vsel %vm2252, %v2064, -inf
      %v2475 = vsel %vm2252, %v2065, -inf
      %v2476 = vmax.f32 %v2474, %v2475
      %v2477 = vsel %vm2252, %v2066, -inf
      %v2478 = vmax.f32 %v2476, %v2477
      %v2479 = vsel %vm2252, %v2067, -inf
      %v2480 = vmax.f32 %v2478, %v2479
      %v2481 = vrot.slane %v2480, 4
      %v2482 = vmax.f32 %v2480, %v2481
      %v2483 = vrot.slane %v2482, 2
      %v2484 = vmax.f32 %v2482, %v2483
      %v2485 = vrot.slane %v2484, 1
      %v2486 = vmax.f32 %v2484, %v2485
      %v2487 = vsel %vm2252, %v2068, -inf
      %v2488 = vsel %vm2252, %v2069, -inf
      %v2489 = vmax.f32 %v2487, %v2488
      %v2490 = vsel %vm2252, %v2070, -inf
      %v2491 = vmax.f32 %v2489, %v2490
      %v2492 = vsel %vm2252, %v2071, -inf
      %v2493 = vmax.f32 %v2491, %v2492
      %v2494 = vrot.slane %v2493, 4
      %v2495 = vmax.f32 %v2493, %v2494
      %v2496 = vrot.slane %v2495, 2
      %v2497 = vmax.f32 %v2495, %v2496
      %v2498 = vrot.slane %v2497, 1
      %v2499 = vmax.f32 %v2497, %v2498
      %v2500 = vsel %vm2252, %v2072, -inf
      %v2501 = vsel %vm2252, %v2073, -inf
      %v2502 = vmax.f32 %v2500, %v2501
      %v2503 = vsel %vm2252, %v2074, -inf
      %v2504 = vmax.f32 %v2502, %v2503
      %v2505 = vsel %vm2252, %v2075, -inf
      %v2506 = vmax.f32 %v2504, %v2505
      %v2507 = vrot.slane %v2506, 4
      %v2508 = vmax.f32 %v2506, %v2507
      %v2509 = vrot.slane %v2508, 2
      %v2510 = vmax.f32 %v2508, %v2509
      %v2511 = vrot.slane %v2510, 1
      %v2512 = vmax.f32 %v2510, %v2511
      %v2513 = vsel %vm2252, %v2076, -inf
      %v2514 = vsel %vm2252, %v2077, -inf
      %v2515 = vmax.f32 %v2513, %v2514
      %v2516 = vsel %vm2252, %v2078, -inf
      %v2517 = vmax.f32 %v2515, %v2516
      %v2518 = vsel %vm2252, %v2079, -inf
      %v2519 = vmax.f32 %v2517, %v2518
      %v2520 = vrot.slane %v2519, 4
      %v2521 = vmax.f32 %v2519, %v2520
      %v2522 = vrot.slane %v2521, 2
      %v2523 = vmax.f32 %v2521, %v2522
      %v2524 = vrot.slane %v2523, 1
      %v2525 = vmax.f32 %v2523, %v2524
      %v2526 = vsel %vm2252, %v2080, -inf
      %v2527 = vsel %vm2252, %v2081, -inf
      %v2528 = vmax.f32 %v2526, %v2527
      %v2529 = vsel %vm2252, %v2082, -inf
      %v2530 = vmax.f32 %v2528, %v2529
      %v2531 = vsel %vm2252, %v2083, -inf
      %v2532 = vmax.f32 %v2530, %v2531
      %v2533 = vrot.slane %v2532, 4
      %v2534 = vmax.f32 %v2532, %v2533
      %v2535 = vrot.slane %v2534, 2
      %v2536 = vmax.f32 %v2534, %v2535
      %v2537 = vrot.slane %v2536, 1
      %v2538 = vmax.f32 %v2536, %v2537
      %v2539 = vsel %vm2252, %v2084, -inf
      %v2540 = vsel %vm2252, %v2085, -inf
      %v2541 = vmax.f32 %v2539, %v2540
      %v2542 = vsel %vm2252, %v2086, -inf
      %v2543 = vmax.f32 %v2541, %v2542
      %v2544 = vsel %vm2252, %v2087, -inf
      %v2545 = vmax.f32 %v2543, %v2544
      %v2546 = vrot.slane %v2545, 4
      %v2547 = vmax.f32 %v2545, %v2546
      %v2548 = vrot.slane %v2547, 2
      %v2549 = vmax.f32 %v2547, %v2548
      %v2550 = vrot.slane %v2549, 1
      %v2551 = vmax.f32 %v2549, %v2550
      %v2552 = vsel %vm2252, %v2088, -inf
      %v2553 = vsel %vm2252, %v2089, -inf
      %v2554 = vmax.f32 %v2552, %v2553
      %v2555 = vsel %vm2252, %v2090, -inf
      %v2556 = vmax.f32 %v2554, %v2555
      %v2557 = vsel %vm2252, %v2091, -inf
      %v2558 = vmax.f32 %v2556, %v2557
      %v2559 = vrot.slane %v2558, 4
      %v2560 = vmax.f32 %v2558, %v2559
      %v2561 = vrot.slane %v2560, 2
      %v2562 = vmax.f32 %v2560, %v2561
      %v2563 = vrot.slane %v2562, 1
      %v2564 = vmax.f32 %v2562, %v2563
      %v2565 = vsel %vm2252, %v2092, -inf
      %v2566 = vsel %vm2252, %v2093, -inf
      %v2567 = vmax.f32 %v2565, %v2566
      %v2568 = vsel %vm2252, %v2094, -inf
      %v2569 = vmax.f32 %v2567, %v2568
      %v2570 = vsel %vm2252, %v2095, -inf
      %v2571 = vmax.f32 %v2569, %v2570
      %v2572 = vrot.slane %v2571, 4
      %v2573 = vmax.f32 %v2571, %v2572
      %v2574 = vrot.slane %v2573, 2
      %v2575 = vmax.f32 %v2573, %v2574
      %v2576 = vrot.slane %v2575, 1
      %v2577 = vmax.f32 %v2575, %v2576
      %v2578 = vsel %vm2252, %v2096, -inf
      %v2579 = vsel %vm2252, %v2097, -inf
      %v2580 = vmax.f32 %v2578, %v2579
      %v2581 = vsel %vm2252, %v2098, -inf
      %v2582 = vmax.f32 %v2580, %v2581
      %v2583 = vsel %vm2252, %v2099, -inf
      %v2584 = vmax.f32 %v2582, %v2583
      %v2585 = vrot.slane %v2584, 4
      %v2586 = vmax.f32 %v2584, %v2585
      %v2587 = vrot.slane %v2586, 2
      %v2588 = vmax.f32 %v2586, %v2587
      %v2589 = vrot.slane %v2588, 1
      %v2590 = vmax.f32 %v2588, %v2589
      %v2591 = vsel %vm2252, %v2100, -inf
      %v2592 = vsel %vm2252, %v2101, -inf
      %v2593 = vmax.f32 %v2591, %v2592
      %v2594 = vsel %vm2252, %v2102, -inf
      %v2595 = vmax.f32 %v2593, %v2594
      %v2596 = vsel %vm2252, %v2103, -inf
      %v2597 = vmax.f32 %v2595, %v2596
      %v2598 = vrot.slane %v2597, 4
      %v2599 = vmax.f32 %v2597, %v2598
      %v2600 = vrot.slane %v2599, 2
      %v2601 = vmax.f32 %v2599, %v2600
      %v2602 = vrot.slane %v2601, 1
      %v2603 = vmax.f32 %v2601, %v2602
      %v2604 = vsel %vm2252, %v2104, -inf
      %v2605 = vsel %vm2252, %v2105, -inf
      %v2606 = vmax.f32 %v2604, %v2605
      %v2607 = vsel %vm2252, %v2106, -inf
      %v2608 = vmax.f32 %v2606, %v2607
      %v2609 = vsel %vm2252, %v2107, -inf
      %v2610 = vmax.f32 %v2608, %v2609
      %v2611 = vrot.slane %v2610, 4
      %v2612 = vmax.f32 %v2610, %v2611
      %v2613 = vrot.slane %v2612, 2
      %v2614 = vmax.f32 %v2612, %v2613
      %v2615 = vrot.slane %v2614, 1
      %v2616 = vmax.f32 %v2614, %v2615
      %v2617 = vsel %vm2252, %v2108, -inf
      %v2618 = vsel %vm2252, %v2109, -inf
      %v2619 = vmax.f32 %v2617, %v2618
      %v2620 = vsel %vm2252, %v2110, -inf
      %v2621 = vmax.f32 %v2619, %v2620
      %v2622 = vsel %vm2252, %v2111, -inf
      %v2623 = vmax.f32 %v2621, %v2622
      %v2624 = vrot.slane %v2623, 4
      %v2625 = vmax.f32 %v2623, %v2624
      %v2626 = vrot.slane %v2625, 2
      %v2627 = vmax.f32 %v2625, %v2626
      %v2628 = vrot.slane %v2627, 1
      %v2629 = vmax.f32 %v2627, %v2628
      %v2630 = vsel %vm2252, %v2112, -inf
      %v2631 = vsel %vm2252, %v2113, -inf
      %v2632 = vmax.f32 %v2630, %v2631
      %v2633 = vsel %vm2252, %v2114, -inf
      %v2634 = vmax.f32 %v2632, %v2633
      %v2635 = vsel %vm2252, %v2115, -inf
      %v2636 = vmax.f32 %v2634, %v2635
      %v2637 = vrot.slane %v2636, 4
      %v2638 = vmax.f32 %v2636, %v2637
      %v2639 = vrot.slane %v2638, 2
      %v2640 = vmax.f32 %v2638, %v2639
      %v2641 = vrot.slane %v2640, 1
      %v2642 = vmax.f32 %v2640, %v2641
      %v2643 = vsel %vm2252, %v2116, -inf
      %v2644 = vsel %vm2252, %v2117, -inf
      %v2645 = vmax.f32 %v2643, %v2644
      %v2646 = vsel %vm2252, %v2118, -inf
      %v2647 = vmax.f32 %v2645, %v2646
      %v2648 = vsel %vm2252, %v2119, -inf
      %v2649 = vmax.f32 %v2647, %v2648
      %v2650 = vrot.slane %v2649, 4
      %v2651 = vmax.f32 %v2649, %v2650
      %v2652 = vrot.slane %v2651, 2
      %v2653 = vmax.f32 %v2651, %v2652
      %v2654 = vrot.slane %v2653, 1
      %v2655 = vmax.f32 %v2653, %v2654
      %v2656 = vsel %vm2252, %v2120, -inf
      %v2657 = vsel %vm2252, %v2121, -inf
      %v2658 = vmax.f32 %v2656, %v2657
      %v2659 = vsel %vm2252, %v2122, -inf
      %v2660 = vmax.f32 %v2658, %v2659
      %v2661 = vsel %vm2252, %v2123, -inf
      %v2662 = vmax.f32 %v2660, %v2661
      %v2663 = vrot.slane %v2662, 4
      %v2664 = vmax.f32 %v2662, %v2663
      %v2665 = vrot.slane %v2664, 2
      %v2666 = vmax.f32 %v2664, %v2665
      %v2667 = vrot.slane %v2666, 1
      %v2668 = vmax.f32 %v2666, %v2667
      %v2669 = vsel %vm2252, %v2124, -inf
      %v2670 = vsel %vm2252, %v2125, -inf
      %v2671 = vmax.f32 %v2669, %v2670
      %v2672 = vsel %vm2252, %v2126, -inf
      %v2673 = vmax.f32 %v2671, %v2672
      %v2674 = vsel %vm2252, %v2127, -inf
      %v2675 = vmax.f32 %v2673, %v2674
      %v2676 = vrot.slane %v2675, 4
      %v2677 = vmax.f32 %v2675, %v2676
      %v2678 = vrot.slane %v2677, 2
      %v2679 = vmax.f32 %v2677, %v2678
      %v2680 = vrot.slane %v2679, 1
      %v2681 = vmax.f32 %v2679, %v2680
      %v2682 = vsel %vm2252, %v2128, -inf
      %v2683 = vsel %vm2252, %v2129, -inf
      %v2684 = vmax.f32 %v2682, %v2683
      %v2685 = vsel %vm2252, %v2130, -inf
      %v2686 = vmax.f32 %v2684, %v2685
      %v2687 = vsel %vm2252, %v2131, -inf
      %v2688 = vmax.f32 %v2686, %v2687
      %v2689 = vrot.slane %v2688, 4
      %v2690 = vmax.f32 %v2688, %v2689
      %v2691 = vrot.slane %v2690, 2
      %v2692 = vmax.f32 %v2690, %v2691
      %v2693 = vrot.slane %v2692, 1
      %v2694 = vmax.f32 %v2692, %v2693
      %v2695 = vsel %vm2252, %v2132, -inf
      %v2696 = vsel %vm2252, %v2133, -inf
      %v2697 = vmax.f32 %v2695, %v2696
      %v2698 = vsel %vm2252, %v2134, -inf
      %v2699 = vmax.f32 %v2697, %v2698
      %v2700 = vsel %vm2252, %v2135, -inf
      %v2701 = vmax.f32 %v2699, %v2700
      %v2702 = vrot.slane %v2701, 4
      %v2703 = vmax.f32 %v2701, %v2702
      %v2704 = vrot.slane %v2703, 2
      %v2705 = vmax.f32 %v2703, %v2704
      %v2706 = vrot.slane %v2705, 1
      %v2707 = vmax.f32 %v2705, %v2706
      %v2708 = vsel %vm2252, %v2136, -inf
      %v2709 = vsel %vm2252, %v2137, -inf
      %v2710 = vmax.f32 %v2708, %v2709
      %v2711 = vsel %vm2252, %v2138, -inf
      %v2712 = vmax.f32 %v2710, %v2711
      %v2713 = vsel %vm2252, %v2139, -inf
      %v2714 = vmax.f32 %v2712, %v2713
      %v2715 = vrot.slane %v2714, 4
      %v2716 = vmax.f32 %v2714, %v2715
      %v2717 = vrot.slane %v2716, 2
      %v2718 = vmax.f32 %v2716, %v2717
      %v2719 = vrot.slane %v2718, 1
      %v2720 = vmax.f32 %v2718, %v2719
      %v2721 = vsel %vm2252, %v2140, -inf
      %v2722 = vsel %vm2252, %v2141, -inf
      %v2723 = vmax.f32 %v2721, %v2722
      %v2724 = vsel %vm2252, %v2142, -inf
      %v2725 = vmax.f32 %v2723, %v2724
      %v2726 = vsel %vm2252, %v2143, -inf
      %v2727 = vmax.f32 %v2725, %v2726
      %v2728 = vrot.slane %v2727, 4
      %v2729 = vmax.f32 %v2727, %v2728
      %v2730 = vrot.slane %v2729, 2
      %v2731 = vmax.f32 %v2729, %v2730
      %v2732 = vrot.slane %v2731, 1
      %v2733 = vmax.f32 %v2731, %v2732
      %v2734 = vsel %vm2252, %v2144, -inf
      %v2735 = vsel %vm2252, %v2145, -inf
      %v2736 = vmax.f32 %v2734, %v2735
      %v2737 = vsel %vm2252, %v2146, -inf
      %v2738 = vmax.f32 %v2736, %v2737
      %v2739 = vsel %vm2252, %v2147, -inf
      %v2740 = vmax.f32 %v2738, %v2739
      %v2741 = vrot.slane %v2740, 4
      %v2742 = vmax.f32 %v2740, %v2741
      %v2743 = vrot.slane %v2742, 2
      %v2744 = vmax.f32 %v2742, %v2743
      %v2745 = vrot.slane %v2744, 1
      %v2746 = vmax.f32 %v2744, %v2745
      %v2747 = vsel %vm2252, %v2148, -inf
      %v2748 = vsel %vm2252, %v2149, -inf
      %v2749 = vmax.f32 %v2747, %v2748
      %v2750 = vsel %vm2252, %v2150, -inf
      %v2751 = vmax.f32 %v2749, %v2750
      %v2752 = vsel %vm2252, %v2151, -inf
      %v2753 = vmax.f32 %v2751, %v2752
      %v2754 = vrot.slane %v2753, 4
      %v2755 = vmax.f32 %v2753, %v2754
      %v2756 = vrot.slane %v2755, 2
      %v2757 = vmax.f32 %v2755, %v2756
      %v2758 = vrot.slane %v2757, 1
      %v2759 = vmax.f32 %v2757, %v2758
      %v2760 = vsel %vm2252, %v2152, -inf
      %v2761 = vsel %vm2252, %v2153, -inf
      %v2762 = vmax.f32 %v2760, %v2761
      %v2763 = vsel %vm2252, %v2154, -inf
      %v2764 = vmax.f32 %v2762, %v2763
      %v2765 = vsel %vm2252, %v2155, -inf
      %v2766 = vmax.f32 %v2764, %v2765
      %v2767 = vrot.slane %v2766, 4
      %v2768 = vmax.f32 %v2766, %v2767
      %v2769 = vrot.slane %v2768, 2
      %v2770 = vmax.f32 %v2768, %v2769
      %v2771 = vrot.slane %v2770, 1
      %v2772 = vmax.f32 %v2770, %v2771
      %v2773 = vsel %vm2252, %v2156, -inf
      %v2774 = vsel %vm2252, %v2157, -inf
      %v2775 = vmax.f32 %v2773, %v2774
      %v2776 = vsel %vm2252, %v2158, -inf
      %v2777 = vmax.f32 %v2775, %v2776
      %v2778 = vsel %vm2252, %v2159, -inf
      %v2779 = vmax.f32 %v2777, %v2778
      %v2780 = vrot.slane %v2779, 4
      %v2781 = vmax.f32 %v2779, %v2780
      %v2782 = vrot.slane %v2781, 2
      %v2783 = vmax.f32 %v2781, %v2782
      %v2784 = vrot.slane %v2783, 1
      %v2785 = vmax.f32 %v2783, %v2784
      %v2786 = vsel %vm2252, %v2160, -inf
      %v2787 = vsel %vm2252, %v2161, -inf
      %v2788 = vmax.f32 %v2786, %v2787
      %v2789 = vsel %vm2252, %v2162, -inf
      %v2790 = vmax.f32 %v2788, %v2789
      %v2791 = vsel %vm2252, %v2163, -inf
      %v2792 = vmax.f32 %v2790, %v2791
      %v2793 = vrot.slane %v2792, 4
      %v2794 = vmax.f32 %v2792, %v2793
      %v2795 = vrot.slane %v2794, 2
      %v2796 = vmax.f32 %v2794, %v2795
      %v2797 = vrot.slane %v2796, 1
      %v2798 = vmax.f32 %v2796, %v2797
      %v2799 = vsel %vm2252, %v2164, -inf
      %v2800 = vsel %vm2252, %v2165, -inf
      %v2801 = vmax.f32 %v2799, %v2800
      %v2802 = vsel %vm2252, %v2166, -inf
      %v2803 = vmax.f32 %v2801, %v2802
      %v2804 = vsel %vm2252, %v2167, -inf
      %v2805 = vmax.f32 %v2803, %v2804
      %v2806 = vrot.slane %v2805, 4
      %v2807 = vmax.f32 %v2805, %v2806
      %v2808 = vrot.slane %v2807, 2
      %v2809 = vmax.f32 %v2807, %v2808
      %v2810 = vrot.slane %v2809, 1
      %v2811 = vmax.f32 %v2809, %v2810
      %v2812 = vsel %vm2252, %v2168, -inf
      %v2813 = vsel %vm2252, %v2169, -inf
      %v2814 = vmax.f32 %v2812, %v2813
      %v2815 = vsel %vm2252, %v2170, -inf
      %v2816 = vmax.f32 %v2814, %v2815
      %v2817 = vsel %vm2252, %v2171, -inf
      %v2818 = vmax.f32 %v2816, %v2817
      %v2819 = vrot.slane %v2818, 4
      %v2820 = vmax.f32 %v2818, %v2819
      %v2821 = vrot.slane %v2820, 2
      %v2822 = vmax.f32 %v2820, %v2821
      %v2823 = vrot.slane %v2822, 1
      %v2824 = vmax.f32 %v2822, %v2823
      %v2825 = vsel %vm2252, %v2172, -inf
      %v2826 = vsel %vm2252, %v2173, -inf
      %v2827 = vmax.f32 %v2825, %v2826
      %v2828 = vsel %vm2252, %v2174, -inf
      %v2829 = vmax.f32 %v2827, %v2828
      %v2830 = vsel %vm2252, %v2175, -inf
      %v2831 = vmax.f32 %v2829, %v2830
      %v2832 = vrot.slane %v2831, 4
      %v2833 = vmax.f32 %v2831, %v2832
      %v2834 = vrot.slane %v2833, 2
      %v2835 = vmax.f32 %v2833, %v2834
      %v2836 = vrot.slane %v2835, 1
      %v2837 = vmax.f32 %v2835, %v2836
      %v2838 = vsel %vm2252, %v2176, -inf
      %v2839 = vsel %vm2252, %v2177, -inf
      %v2840 = vmax.f32 %v2838, %v2839
      %v2841 = vsel %vm2252, %v2178, -inf
      %v2842 = vmax.f32 %v2840, %v2841
      %v2843 = vsel %vm2252, %v2179, -inf
      %v2844 = vmax.f32 %v2842, %v2843
      %v2845 = vrot.slane %v2844, 4
      %v2846 = vmax.f32 %v2844, %v2845
      %v2847 = vrot.slane %v2846, 2
      %v2848 = vmax.f32 %v2846, %v2847
      %v2849 = vrot.slane %v2848, 1
      %v2850 = vmax.f32 %v2848, %v2849
      %v2851 = vsel %vm2252, %v2180, -inf
      %v2852 = vsel %vm2252, %v2181, -inf
      %v2853 = vmax.f32 %v2851, %v2852
      %v2854 = vsel %vm2252, %v2182, -inf
      %v2855 = vmax.f32 %v2853, %v2854
      %v2856 = vsel %vm2252, %v2183, -inf
      %v2857 = vmax.f32 %v2855, %v2856
      %v2858 = vrot.slane %v2857, 4
      %v2859 = vmax.f32 %v2857, %v2858
      %v2860 = vrot.slane %v2859, 2
      %v2861 = vmax.f32 %v2859, %v2860
      %v2862 = vrot.slane %v2861, 1
      %v2863 = vmax.f32 %v2861, %v2862
      %v2864 = vsel %vm2252, %v2184, -inf
      %v2865 = vsel %vm2252, %v2185, -inf
      %v2866 = vmax.f32 %v2864, %v2865
      %v2867 = vsel %vm2252, %v2186, -inf
      %v2868 = vmax.f32 %v2866, %v2867
      %v2869 = vsel %vm2252, %v2187, -inf
      %v2870 = vmax.f32 %v2868, %v2869
      %v2871 = vrot.slane %v2870, 4
      %v2872 = vmax.f32 %v2870, %v2871
      %v2873 = vrot.slane %v2872, 2
      %v2874 = vmax.f32 %v2872, %v2873
      %v2875 = vrot.slane %v2874, 1
      %v2876 = vmax.f32 %v2874, %v2875
      %v2877 = vsel %vm2252, %v2188, -inf
      %v2878 = vsel %vm2252, %v2189, -inf
      %v2879 = vmax.f32 %v2877, %v2878
      %v2880 = vsel %vm2252, %v2190, -inf
      %v2881 = vmax.f32 %v2879, %v2880
      %v2882 = vsel %vm2252, %v2191, -inf
      %v2883 = vmax.f32 %v2881, %v2882
      %v2884 = vrot.slane %v2883, 4
      %v2885 = vmax.f32 %v2883, %v2884
      %v2886 = vrot.slane %v2885, 2
      %v2887 = vmax.f32 %v2885, %v2886
      %v2888 = vrot.slane %v2887, 1
      %v2889 = vmax.f32 %v2887, %v2888
      %v2890 = vsel %vm2252, %v2192, -inf
      %v2891 = vsel %vm2252, %v2193, -inf
      %v2892 = vmax.f32 %v2890, %v2891
      %v2893 = vsel %vm2252, %v2194, -inf
      %v2894 = vmax.f32 %v2892, %v2893
      %v2895 = vsel %vm2252, %v2195, -inf
      %v2896 = vmax.f32 %v2894, %v2895
      %v2897 = vrot.slane %v2896, 4
      %v2898 = vmax.f32 %v2896, %v2897
      %v2899 = vrot.slane %v2898, 2
      %v2900 = vmax.f32 %v2898, %v2899
      %v2901 = vrot.slane %v2900, 1
      %v2902 = vmax.f32 %v2900, %v2901
      %v2903 = vsel %vm2252, %v2196, -inf
      %v2904 = vsel %vm2252, %v2197, -inf
      %v2905 = vmax.f32 %v2903, %v2904
      %v2906 = vsel %vm2252, %v2198, -inf
      %v2907 = vmax.f32 %v2905, %v2906
      %v2908 = vsel %vm2252, %v2199, -inf
      %v2909 = vmax.f32 %v2907, %v2908
      %v2910 = vrot.slane %v2909, 4
      %v2911 = vmax.f32 %v2909, %v2910
      %v2912 = vrot.slane %v2911, 2
      %v2913 = vmax.f32 %v2911, %v2912
      %v2914 = vrot.slane %v2913, 1
      %v2915 = vmax.f32 %v2913, %v2914
      %v2916 = vsel %vm2252, %v2200, -inf
      %v2917 = vsel %vm2252, %v2201, -inf
      %v2918 = vmax.f32 %v2916, %v2917
      %v2919 = vsel %vm2252, %v2202, -inf
      %v2920 = vmax.f32 %v2918, %v2919
      %v2921 = vsel %vm2252, %v2203, -inf
      %v2922 = vmax.f32 %v2920, %v2921
      %v2923 = vrot.slane %v2922, 4
      %v2924 = vmax.f32 %v2922, %v2923
      %v2925 = vrot.slane %v2924, 2
      %v2926 = vmax.f32 %v2924, %v2925
      %v2927 = vrot.slane %v2926, 1
      %v2928 = vmax.f32 %v2926, %v2927
      %v2929 = vsel %vm2252, %v2204, -inf
      %v2930 = vsel %vm2252, %v2205, -inf
      %v2931 = vmax.f32 %v2929, %v2930
      %v2932 = vsel %vm2252, %v2206, -inf
      %v2933 = vmax.f32 %v2931, %v2932
      %v2934 = vsel %vm2252, %v2207, -inf
      %v2935 = vmax.f32 %v2933, %v2934
      %v2936 = vrot.slane %v2935, 4
      %v2937 = vmax.f32 %v2935, %v2936
      %v2938 = vrot.slane %v2937, 2
      %v2939 = vmax.f32 %v2937, %v2938
      %v2940 = vrot.slane %v2939, 1
      %v2941 = vmax.f32 %v2939, %v2940
      %v2942 = vsel %vm2252, %v2208, -inf
      %v2943 = vsel %vm2252, %v2209, -inf
      %v2944 = vmax.f32 %v2942, %v2943
      %v2945 = vsel %vm2252, %v2210, -inf
      %v2946 = vmax.f32 %v2944, %v2945
      %v2947 = vsel %vm2252, %v2211, -inf
      %v2948 = vmax.f32 %v2946, %v2947
      %v2949 = vrot.slane %v2948, 4
      %v2950 = vmax.f32 %v2948, %v2949
      %v2951 = vrot.slane %v2950, 2
      %v2952 = vmax.f32 %v2950, %v2951
      %v2953 = vrot.slane %v2952, 1
      %v2954 = vmax.f32 %v2952, %v2953
      %v2955 = vsel %vm2252, %v2212, -inf
      %v2956 = vsel %vm2252, %v2213, -inf
      %v2957 = vmax.f32 %v2955, %v2956
      %v2958 = vsel %vm2252, %v2214, -inf
      %v2959 = vmax.f32 %v2957, %v2958
      %v2960 = vsel %vm2252, %v2215, -inf
      %v2961 = vmax.f32 %v2959, %v2960
      %v2962 = vrot.slane %v2961, 4
      %v2963 = vmax.f32 %v2961, %v2962
      %v2964 = vrot.slane %v2963, 2
      %v2965 = vmax.f32 %v2963, %v2964
      %v2966 = vrot.slane %v2965, 1
      %v2967 = vmax.f32 %v2965, %v2966
      %v2968 = vsel %vm2252, %v2216, -inf
      %v2969 = vsel %vm2252, %v2217, -inf
      %v2970 = vmax.f32 %v2968, %v2969
      %v2971 = vsel %vm2252, %v2218, -inf
      %v2972 = vmax.f32 %v2970, %v2971
      %v2973 = vsel %vm2252, %v2219, -inf
      %v2974 = vmax.f32 %v2972, %v2973
      %v2975 = vrot.slane %v2974, 4
      %v2976 = vmax.f32 %v2974, %v2975
      %v2977 = vrot.slane %v2976, 2
      %v2978 = vmax.f32 %v2976, %v2977
      %v2979 = vrot.slane %v2978, 1
      %v2980 = vmax.f32 %v2978, %v2979
      %v2981 = vsel %vm2252, %v2220, -inf
      %v2982 = vsel %vm2252, %v2221, -inf
      %v2983 = vmax.f32 %v2981, %v2982
      %v2984 = vsel %vm2252, %v2222, -inf
      %v2985 = vmax.f32 %v2983, %v2984
      %v2986 = vsel %vm2252, %v2223, -inf
      %v2987 = vmax.f32 %v2985, %v2986
      %v2988 = vrot.slane %v2987, 4
      %v2989 = vmax.f32 %v2987, %v2988
      %v2990 = vrot.slane %v2989, 2
      %v2991 = vmax.f32 %v2989, %v2990
      %v2992 = vrot.slane %v2991, 1
      %v2993 = vmax.f32 %v2991, %v2992
      %v2994 = vsel %vm2252, %v2224, -inf
      %v2995 = vsel %vm2252, %v2225, -inf
      %v2996 = vmax.f32 %v2994, %v2995
      %v2997 = vsel %vm2252, %v2226, -inf
      %v2998 = vmax.f32 %v2996, %v2997
      %v2999 = vsel %vm2252, %v2227, -inf
      %v3000 = vmax.f32 %v2998, %v2999
      %v3001 = vrot.slane %v3000, 4
      %v3002 = vmax.f32 %v3000, %v3001
      %v3003 = vrot.slane %v3002, 2
      %v3004 = vmax.f32 %v3002, %v3003
      %v3005 = vrot.slane %v3004, 1
      %v3006 = vmax.f32 %v3004, %v3005
      %v3007 = vsel %vm2252, %v2228, -inf
      %v3008 = vsel %vm2252, %v2229, -inf
      %v3009 = vmax.f32 %v3007, %v3008
      %v3010 = vsel %vm2252, %v2230, -inf
      %v3011 = vmax.f32 %v3009, %v3010
      %v3012 = vsel %vm2252, %v2231, -inf
      %v3013 = vmax.f32 %v3011, %v3012
      %v3014 = vrot.slane %v3013, 4
      %v3015 = vmax.f32 %v3013, %v3014
      %v3016 = vrot.slane %v3015, 2
      %v3017 = vmax.f32 %v3015, %v3016
      %v3018 = vrot.slane %v3017, 1
      %v3019 = vmax.f32 %v3017, %v3018
      %v3020 = vsel %vm2252, %v2232, -inf
      %v3021 = vsel %vm2252, %v2233, -inf
      %v3022 = vmax.f32 %v3020, %v3021
      %v3023 = vsel %vm2252, %v2234, -inf
      %v3024 = vmax.f32 %v3022, %v3023
      %v3025 = vsel %vm2252, %v2235, -inf
      %v3026 = vmax.f32 %v3024, %v3025
      %v3027 = vrot.slane %v3026, 4
      %v3028 = vmax.f32 %v3026, %v3027
      %v3029 = vrot.slane %v3028, 2
      %v3030 = vmax.f32 %v3028, %v3029
      %v3031 = vrot.slane %v3030, 1
      %v3032 = vmax.f32 %v3030, %v3031
      %v3033 = vsel %vm2252, %v2236, -inf
      %v3034 = vsel %vm2252, %v2237, -inf
      %v3035 = vmax.f32 %v3033, %v3034
      %v3036 = vsel %vm2252, %v2238, -inf
      %v3037 = vmax.f32 %v3035, %v3036
      %v3038 = vsel %vm2252, %v2239, -inf
      %v3039 = vmax.f32 %v3037, %v3038
      %v3040 = vrot.slane %v3039, 4
      %v3041 = vmax.f32 %v3039, %v3040
      %v3042 = vrot.slane %v3041, 2
      %v3043 = vmax.f32 %v3041, %v3042
      %v3044 = vrot.slane %v3043, 1
      %v3045 = vmax.f32 %v3043, %v3044
      %v3046 = vsel %vm2252, %v2240, -inf
      %v3047 = vsel %vm2252, %v2241, -inf
      %v3048 = vmax.f32 %v3046, %v3047
      %v3049 = vsel %vm2252, %v2242, -inf
      %v3050 = vmax.f32 %v3048, %v3049
      %v3051 = vsel %vm2252, %v2243, -inf
      %v3052 = vmax.f32 %v3050, %v3051
      %v3053 = vrot.slane %v3052, 4
      %v3054 = vmax.f32 %v3052, %v3053
      %v3055 = vrot.slane %v3054, 2
      %v3056 = vmax.f32 %v3054, %v3055
      %v3057 = vrot.slane %v3056, 1
      %v3058 = vmax.f32 %v3056, %v3057
      %v3059 = vsel %vm2252, %v2244, -inf
      %v3060 = vsel %vm2252, %v2245, -inf
      %v3061 = vmax.f32 %v3059, %v3060
      %v3062 = vsel %vm2252, %v2246, -inf
      %v3063 = vmax.f32 %v3061, %v3062
      %v3064 = vsel %vm2252, %v2247, -inf
      %v3065 = vmax.f32 %v3063, %v3064
      %v3066 = vrot.slane %v3065, 4
      %v3067 = vmax.f32 %v3065, %v3066
      %v3068 = vrot.slane %v3067, 2
      %v3069 = vmax.f32 %v3067, %v3068
      %v3070 = vrot.slane %v3069, 1
      %v3071 = vmax.f32 %v3069, %v3070
      %v3072 = vsel %vm2252, %v2248, -inf
      %v3073 = vsel %vm2252, %v2249, -inf
      %v3074 = vmax.f32 %v3072, %v3073
      %v3075 = vsel %vm2252, %v2250, -inf
      %v3076 = vmax.f32 %v3074, %v3075
      %v3077 = vsel %vm2252, %v2251, -inf
      %v3078 = vmax.f32 %v3076, %v3077
      %v3079 = vrot.slane %v3078, 4
      %v3080 = vmax.f32 %v3078, %v3079
      %v3081 = vrot.slane %v3080, 2
      %v3082 = vmax.f32 %v3080, %v3081
      %v3083 = vrot.slane %v3082, 1
      %v3084 = vmax.f32 %v3082, %v3083
      %3085 = vst.msk [vmem:[%s174] sm:$0xff] %vm2252, %v1996
      %3086 = vst.msk [vmem:[%s174 + $0x8] sm:$0xff] %vm2252, %v1997
      %3087 = vst.msk [vmem:[%s174 + $0x10] sm:$0xff] %vm2252, %v1998
      %3088 = vst.msk [vmem:[%s174 + $0x18] sm:$0xff] %vm2252, %v1999
      %3089 = vst.msk [vmem:[%s174 + $0x20] sm:$0xff] %vm2252, %v2000
      %3090 = vst.msk [vmem:[%s174 + $0x28] sm:$0xff] %vm2252, %v2001
      %3091 = vst.msk [vmem:[%s174 + $0x30] sm:$0xff] %vm2252, %v2002
      %3092 = vst.msk [vmem:[%s174 + $0x38] sm:$0xff] %vm2252, %v2003
      %3093 = vst.msk [vmem:[%s174 + $0x40] sm:$0xff] %vm2252, %v2004
      %3094 = vst.msk [vmem:[%s174 + $0x48] sm:$0xff] %vm2252, %v2005
      %3095 = vst.msk [vmem:[%s174 + $0x50] sm:$0xff] %vm2252, %v2006
      %3096 = vst.msk [vmem:[%s174 + $0x58] sm:$0xff] %vm2252, %v2007
      %3097 = vst.msk [vmem:[%s174 + $0x60] sm:$0xff] %vm2252, %v2008
      %3098 = vst.msk [vmem:[%s174 + $0x68] sm:$0xff] %vm2252, %v2009
      %3099 = vst.msk [vmem:[%s174 + $0x70] sm:$0xff] %vm2252, %v2010
      %3100 = vst.msk [vmem:[%s174 + $0x78] sm:$0xff] %vm2252, %v2011
      %3101 = vst.msk [vmem:[%s174 + $0x80] sm:$0xff] %vm2252, %v2012
      %3102 = vst.msk [vmem:[%s174 + $0x88] sm:$0xff] %vm2252, %v2013
      %3103 = vst.msk [vmem:[%s174 + $0x90] sm:$0xff] %vm2252, %v2014
      %3104 = vst.msk [vmem:[%s174 + $0x98] sm:$0xff] %vm2252, %v2015
      %3105 = vst.msk [vmem:[%s174 + $0xa0] sm:$0xff] %vm2252, %v2016
      %3106 = vst.msk [vmem:[%s174 + $0xa8] sm:$0xff] %vm2252, %v2017
      %3107 = vst.msk [vmem:[%s174 + $0xb0] sm:$0xff] %vm2252, %v2018
      %3108 = vst.msk [vmem:[%s174 + $0xb8] sm:$0xff] %vm2252, %v2019
      %3109 = vst.msk [vmem:[%s174 + $0xc0] sm:$0xff] %vm2252, %v2020
      %3110 = vst.msk [vmem:[%s174 + $0xc8] sm:$0xff] %vm2252, %v2021
      %3111 = vst.msk [vmem:[%s174 + $0xd0] sm:$0xff] %vm2252, %v2022
      %3112 = vst.msk [vmem:[%s174 + $0xd8] sm:$0xff] %vm2252, %v2023
      %3113 = vst.msk [vmem:[%s174 + $0xe0] sm:$0xff] %vm2252, %v2024
      %3114 = vst.msk [vmem:[%s174 + $0xe8] sm:$0xff] %vm2252, %v2025
      %3115 = vst.msk [vmem:[%s174 + $0xf0] sm:$0xff] %vm2252, %v2026
      %3116 = vst.msk [vmem:[%s174 + $0xf8] sm:$0xff] %vm2252, %v2027
      %3117 = vst.msk [vmem:[%s174 + $0x100] sm:$0xff] %vm2252, %v2028
      %3118 = vst.msk [vmem:[%s174 + $0x108] sm:$0xff] %vm2252, %v2029
      %3119 = vst.msk [vmem:[%s174 + $0x110] sm:$0xff] %vm2252, %v2030
      %3120 = vst.msk [vmem:[%s174 + $0x118] sm:$0xff] %vm2252, %v2031
      %3121 = vst.msk [vmem:[%s174 + $0x120] sm:$0xff] %vm2252, %v2032
      %3122 = vst.msk [vmem:[%s174 + $0x128] sm:$0xff] %vm2252, %v2033
      %3123 = vst.msk [vmem:[%s174 + $0x130] sm:$0xff] %vm2252, %v2034
      %3124 = vst.msk [vmem:[%s174 + $0x138] sm:$0xff] %vm2252, %v2035
      %3125 = vst.msk [vmem:[%s174 + $0x140] sm:$0xff] %vm2252, %v2036
      %3126 = vst.msk [vmem:[%s174 + $0x148] sm:$0xff] %vm2252, %v2037
      %3127 = vst.msk [vmem:[%s174 + $0x150] sm:$0xff] %vm2252, %v2038
      %3128 = vst.msk [vmem:[%s174 + $0x158] sm:$0xff] %vm2252, %v2039
      %3129 = vst.msk [vmem:[%s174 + $0x160] sm:$0xff] %vm2252, %v2040
      %3130 = vst.msk [vmem:[%s174 + $0x168] sm:$0xff] %vm2252, %v2041
      %3131 = vst.msk [vmem:[%s174 + $0x170] sm:$0xff] %vm2252, %v2042
      %3132 = vst.msk [vmem:[%s174 + $0x178] sm:$0xff] %vm2252, %v2043
      %3133 = vst.msk [vmem:[%s174 + $0x180] sm:$0xff] %vm2252, %v2044
      %3134 = vst.msk [vmem:[%s174 + $0x188] sm:$0xff] %vm2252, %v2045
      %3135 = vst.msk [vmem:[%s174 + $0x190] sm:$0xff] %vm2252, %v2046
      %3136 = vst.msk [vmem:[%s174 + $0x198] sm:$0xff] %vm2252, %v2047
      %3137 = vst.msk [vmem:[%s174 + $0x1a0] sm:$0xff] %vm2252, %v2048
      %3138 = vst.msk [vmem:[%s174 + $0x1a8] sm:$0xff] %vm2252, %v2049
      %3139 = vst.msk [vmem:[%s174 + $0x1b0] sm:$0xff] %vm2252, %v2050
      %3140 = vst.msk [vmem:[%s174 + $0x1b8] sm:$0xff] %vm2252, %v2051
      %3141 = vst.msk [vmem:[%s174 + $0x1c0] sm:$0xff] %vm2252, %v2052
      %3142 = vst.msk [vmem:[%s174 + $0x1c8] sm:$0xff] %vm2252, %v2053
      %3143 = vst.msk [vmem:[%s174 + $0x1d0] sm:$0xff] %vm2252, %v2054
      %3144 = vst.msk [vmem:[%s174 + $0x1d8] sm:$0xff] %vm2252, %v2055
      %3145 = vst.msk [vmem:[%s174 + $0x1e0] sm:$0xff] %vm2252, %v2056
      %3146 = vst.msk [vmem:[%s174 + $0x1e8] sm:$0xff] %vm2252, %v2057
      %3147 = vst.msk [vmem:[%s174 + $0x1f0] sm:$0xff] %vm2252, %v2058
      %3148 = vst.msk [vmem:[%s174 + $0x1f8] sm:$0xff] %vm2252, %v2059
      %3149 = vst.msk [vmem:[%s174 + $0x200] sm:$0xff] %vm2252, %v2060
      %3150 = vst.msk [vmem:[%s174 + $0x208] sm:$0xff] %vm2252, %v2061
      %3151 = vst.msk [vmem:[%s174 + $0x210] sm:$0xff] %vm2252, %v2062
      %3152 = vst.msk [vmem:[%s174 + $0x218] sm:$0xff] %vm2252, %v2063
      %3153 = vst.msk [vmem:[%s174 + $0x220] sm:$0xff] %vm2252, %v2064
      %3154 = vst.msk [vmem:[%s174 + $0x228] sm:$0xff] %vm2252, %v2065
      %3155 = vst.msk [vmem:[%s174 + $0x230] sm:$0xff] %vm2252, %v2066
      %3156 = vst.msk [vmem:[%s174 + $0x238] sm:$0xff] %vm2252, %v2067
      %3157 = vst.msk [vmem:[%s174 + $0x240] sm:$0xff] %vm2252, %v2068
      %3158 = vst.msk [vmem:[%s174 + $0x248] sm:$0xff] %vm2252, %v2069
      %3159 = vst.msk [vmem:[%s174 + $0x250] sm:$0xff] %vm2252, %v2070
      %3160 = vst.msk [vmem:[%s174 + $0x258] sm:$0xff] %vm2252, %v2071
      %3161 = vst.msk [vmem:[%s174 + $0x260] sm:$0xff] %vm2252, %v2072
      %3162 = vst.msk [vmem:[%s174 + $0x268] sm:$0xff] %vm2252, %v2073
      %3163 = vst.msk [vmem:[%s174 + $0x270] sm:$0xff] %vm2252, %v2074
      %3164 = vst.msk [vmem:[%s174 + $0x278] sm:$0xff] %vm2252, %v2075
      %3165 = vst.msk [vmem:[%s174 + $0x280] sm:$0xff] %vm2252, %v2076
      %3166 = vst.msk [vmem:[%s174 + $0x288] sm:$0xff] %vm2252, %v2077
      %3167 = vst.msk [vmem:[%s174 + $0x290] sm:$0xff] %vm2252, %v2078
      %3168 = vst.msk [vmem:[%s174 + $0x298] sm:$0xff] %vm2252, %v2079
      %3169 = vst.msk [vmem:[%s174 + $0x2a0] sm:$0xff] %vm2252, %v2080
      %3170 = vst.msk [vmem:[%s174 + $0x2a8] sm:$0xff] %vm2252, %v2081
      %3171 = vst.msk [vmem:[%s174 + $0x2b0] sm:$0xff] %vm2252, %v2082
      %3172 = vst.msk [vmem:[%s174 + $0x2b8] sm:$0xff] %vm2252, %v2083
      %3173 = vst.msk [vmem:[%s174 + $0x2c0] sm:$0xff] %vm2252, %v2084
      %3174 = vst.msk [vmem:[%s174 + $0x2c8] sm:$0xff] %vm2252, %v2085
      %3175 = vst.msk [vmem:[%s174 + $0x2d0] sm:$0xff] %vm2252, %v2086
      %3176 = vst.msk [vmem:[%s174 + $0x2d8] sm:$0xff] %vm2252, %v2087
      %3177 = vst.msk [vmem:[%s174 + $0x2e0] sm:$0xff] %vm2252, %v2088
      %3178 = vst.msk [vmem:[%s174 + $0x2e8] sm:$0xff] %vm2252, %v2089
      %3179 = vst.msk [vmem:[%s174 + $0x2f0] sm:$0xff] %vm2252, %v2090
      %3180 = vst.msk [vmem:[%s174 + $0x2f8] sm:$0xff] %vm2252, %v2091
      %3181 = vst.msk [vmem:[%s174 + $0x300] sm:$0xff] %vm2252, %v2092
      %3182 = vst.msk [vmem:[%s174 + $0x308] sm:$0xff] %vm2252, %v2093
      %3183 = vst.msk [vmem:[%s174 + $0x310] sm:$0xff] %vm2252, %v2094
      %3184 = vst.msk [vmem:[%s174 + $0x318] sm:$0xff] %vm2252, %v2095
      %3185 = vst.msk [vmem:[%s174 + $0x320] sm:$0xff] %vm2252, %v2096
      %3186 = vst.msk [vmem:[%s174 + $0x328] sm:$0xff] %vm2252, %v2097
      %3187 = vst.msk [vmem:[%s174 + $0x330] sm:$0xff] %vm2252, %v2098
      %3188 = vst.msk [vmem:[%s174 + $0x338] sm:$0xff] %vm2252, %v2099
      %3189 = vst.msk [vmem:[%s174 + $0x340] sm:$0xff] %vm2252, %v2100
      %3190 = vst.msk [vmem:[%s174 + $0x348] sm:$0xff] %vm2252, %v2101
      %3191 = vst.msk [vmem:[%s174 + $0x350] sm:$0xff] %vm2252, %v2102
      %3192 = vst.msk [vmem:[%s174 + $0x358] sm:$0xff] %vm2252, %v2103
      %3193 = vst.msk [vmem:[%s174 + $0x360] sm:$0xff] %vm2252, %v2104
      %3194 = vst.msk [vmem:[%s174 + $0x368] sm:$0xff] %vm2252, %v2105
      %3195 = vst.msk [vmem:[%s174 + $0x370] sm:$0xff] %vm2252, %v2106
      %3196 = vst.msk [vmem:[%s174 + $0x378] sm:$0xff] %vm2252, %v2107
      %3197 = vst.msk [vmem:[%s174 + $0x380] sm:$0xff] %vm2252, %v2108
      %3198 = vst.msk [vmem:[%s174 + $0x388] sm:$0xff] %vm2252, %v2109
      %3199 = vst.msk [vmem:[%s174 + $0x390] sm:$0xff] %vm2252, %v2110
      %3200 = vst.msk [vmem:[%s174 + $0x398] sm:$0xff] %vm2252, %v2111
      %3201 = vst.msk [vmem:[%s174 + $0x3a0] sm:$0xff] %vm2252, %v2112
      %3202 = vst.msk [vmem:[%s174 + $0x3a8] sm:$0xff] %vm2252, %v2113
      %3203 = vst.msk [vmem:[%s174 + $0x3b0] sm:$0xff] %vm2252, %v2114
      %3204 = vst.msk [vmem:[%s174 + $0x3b8] sm:$0xff] %vm2252, %v2115
      %3205 = vst.msk [vmem:[%s174 + $0x3c0] sm:$0xff] %vm2252, %v2116
      %3206 = vst.msk [vmem:[%s174 + $0x3c8] sm:$0xff] %vm2252, %v2117
      %3207 = vst.msk [vmem:[%s174 + $0x3d0] sm:$0xff] %vm2252, %v2118
      %3208 = vst.msk [vmem:[%s174 + $0x3d8] sm:$0xff] %vm2252, %v2119
      %3209 = vst.msk [vmem:[%s174 + $0x3e0] sm:$0xff] %vm2252, %v2120
      %3210 = vst.msk [vmem:[%s174 + $0x3e8] sm:$0xff] %vm2252, %v2121
      %3211 = vst.msk [vmem:[%s174 + $0x3f0] sm:$0xff] %vm2252, %v2122
      %3212 = vst.msk [vmem:[%s174 + $0x3f8] sm:$0xff] %vm2252, %v2123
      %3213 = vst.msk [vmem:[%s174 + $0x400] sm:$0xff] %vm2252, %v2124
      %3214 = vst.msk [vmem:[%s174 + $0x408] sm:$0xff] %vm2252, %v2125
      %3215 = vst.msk [vmem:[%s174 + $0x410] sm:$0xff] %vm2252, %v2126
      %3216 = vst.msk [vmem:[%s174 + $0x418] sm:$0xff] %vm2252, %v2127
      %3217 = vst.msk [vmem:[%s174 + $0x420] sm:$0xff] %vm2252, %v2128
      %3218 = vst.msk [vmem:[%s174 + $0x428] sm:$0xff] %vm2252, %v2129
      %3219 = vst.msk [vmem:[%s174 + $0x430] sm:$0xff] %vm2252, %v2130
      %3220 = vst.msk [vmem:[%s174 + $0x438] sm:$0xff] %vm2252, %v2131
      %3221 = vst.msk [vmem:[%s174 + $0x440] sm:$0xff] %vm2252, %v2132
      %3222 = vst.msk [vmem:[%s174 + $0x448] sm:$0xff] %vm2252, %v2133
      %3223 = vst.msk [vmem:[%s174 + $0x450] sm:$0xff] %vm2252, %v2134
      %3224 = vst.msk [vmem:[%s174 + $0x458] sm:$0xff] %vm2252, %v2135
      %3225 = vst.msk [vmem:[%s174 + $0x460] sm:$0xff] %vm2252, %v2136
      %3226 = vst.msk [vmem:[%s174 + $0x468] sm:$0xff] %vm2252, %v2137
      %3227 = vst.msk [vmem:[%s174 + $0x470] sm:$0xff] %vm2252, %v2138
      %3228 = vst.msk [vmem:[%s174 + $0x478] sm:$0xff] %vm2252, %v2139
      %3229 = vst.msk [vmem:[%s174 + $0x480] sm:$0xff] %vm2252, %v2140
      %3230 = vst.msk [vmem:[%s174 + $0x488] sm:$0xff] %vm2252, %v2141
      %3231 = vst.msk [vmem:[%s174 + $0x490] sm:$0xff] %vm2252, %v2142
      %3232 = vst.msk [vmem:[%s174 + $0x498] sm:$0xff] %vm2252, %v2143
      %3233 = vst.msk [vmem:[%s174 + $0x4a0] sm:$0xff] %vm2252, %v2144
      %3234 = vst.msk [vmem:[%s174 + $0x4a8] sm:$0xff] %vm2252, %v2145
      %3235 = vst.msk [vmem:[%s174 + $0x4b0] sm:$0xff] %vm2252, %v2146
      %3236 = vst.msk [vmem:[%s174 + $0x4b8] sm:$0xff] %vm2252, %v2147
      %3237 = vst.msk [vmem:[%s174 + $0x4c0] sm:$0xff] %vm2252, %v2148
      %3238 = vst.msk [vmem:[%s174 + $0x4c8] sm:$0xff] %vm2252, %v2149
      %3239 = vst.msk [vmem:[%s174 + $0x4d0] sm:$0xff] %vm2252, %v2150
      %3240 = vst.msk [vmem:[%s174 + $0x4d8] sm:$0xff] %vm2252, %v2151
      %3241 = vst.msk [vmem:[%s174 + $0x4e0] sm:$0xff] %vm2252, %v2152
      %3242 = vst.msk [vmem:[%s174 + $0x4e8] sm:$0xff] %vm2252, %v2153
      %3243 = vst.msk [vmem:[%s174 + $0x4f0] sm:$0xff] %vm2252, %v2154
      %3244 = vst.msk [vmem:[%s174 + $0x4f8] sm:$0xff] %vm2252, %v2155
      %3245 = vst.msk [vmem:[%s174 + $0x500] sm:$0xff] %vm2252, %v2156
      %3246 = vst.msk [vmem:[%s174 + $0x508] sm:$0xff] %vm2252, %v2157
      %3247 = vst.msk [vmem:[%s174 + $0x510] sm:$0xff] %vm2252, %v2158
      %3248 = vst.msk [vmem:[%s174 + $0x518] sm:$0xff] %vm2252, %v2159
      %3249 = vst.msk [vmem:[%s174 + $0x520] sm:$0xff] %vm2252, %v2160
      %3250 = vst.msk [vmem:[%s174 + $0x528] sm:$0xff] %vm2252, %v2161
      %3251 = vst.msk [vmem:[%s174 + $0x530] sm:$0xff] %vm2252, %v2162
      %3252 = vst.msk [vmem:[%s174 + $0x538] sm:$0xff] %vm2252, %v2163
      %3253 = vst.msk [vmem:[%s174 + $0x540] sm:$0xff] %vm2252, %v2164
      %3254 = vst.msk [vmem:[%s174 + $0x548] sm:$0xff] %vm2252, %v2165
      %3255 = vst.msk [vmem:[%s174 + $0x550] sm:$0xff] %vm2252, %v2166
      %3256 = vst.msk [vmem:[%s174 + $0x558] sm:$0xff] %vm2252, %v2167
      %3257 = vst.msk [vmem:[%s174 + $0x560] sm:$0xff] %vm2252, %v2168
      %3258 = vst.msk [vmem:[%s174 + $0x568] sm:$0xff] %vm2252, %v2169
      %3259 = vst.msk [vmem:[%s174 + $0x570] sm:$0xff] %vm2252, %v2170
      %3260 = vst.msk [vmem:[%s174 + $0x578] sm:$0xff] %vm2252, %v2171
      %3261 = vst.msk [vmem:[%s174 + $0x580] sm:$0xff] %vm2252, %v2172
      %3262 = vst.msk [vmem:[%s174 + $0x588] sm:$0xff] %vm2252, %v2173
      %3263 = vst.msk [vmem:[%s174 + $0x590] sm:$0xff] %vm2252, %v2174
      %3264 = vst.msk [vmem:[%s174 + $0x598] sm:$0xff] %vm2252, %v2175
      %3265 = vst.msk [vmem:[%s174 + $0x5a0] sm:$0xff] %vm2252, %v2176
      %3266 = vst.msk [vmem:[%s174 + $0x5a8] sm:$0xff] %vm2252, %v2177
      %3267 = vst.msk [vmem:[%s174 + $0x5b0] sm:$0xff] %vm2252, %v2178
      %3268 = vst.msk [vmem:[%s174 + $0x5b8] sm:$0xff] %vm2252, %v2179
      %3269 = vst.msk [vmem:[%s174 + $0x5c0] sm:$0xff] %vm2252, %v2180
      %3270 = vst.msk [vmem:[%s174 + $0x5c8] sm:$0xff] %vm2252, %v2181
      %3271 = vst.msk [vmem:[%s174 + $0x5d0] sm:$0xff] %vm2252, %v2182
      %3272 = vst.msk [vmem:[%s174 + $0x5d8] sm:$0xff] %vm2252, %v2183
      %3273 = vst.msk [vmem:[%s174 + $0x5e0] sm:$0xff] %vm2252, %v2184
      %3274 = vst.msk [vmem:[%s174 + $0x5e8] sm:$0xff] %vm2252, %v2185
      %3275 = vst.msk [vmem:[%s174 + $0x5f0] sm:$0xff] %vm2252, %v2186
      %3276 = vst.msk [vmem:[%s174 + $0x5f8] sm:$0xff] %vm2252, %v2187
      %3277 = vst.msk [vmem:[%s174 + $0x600] sm:$0xff] %vm2252, %v2188
      %3278 = vst.msk [vmem:[%s174 + $0x608] sm:$0xff] %vm2252, %v2189
      %3279 = vst.msk [vmem:[%s174 + $0x610] sm:$0xff] %vm2252, %v2190
      %3280 = vst.msk [vmem:[%s174 + $0x618] sm:$0xff] %vm2252, %v2191
      %3281 = vst.msk [vmem:[%s174 + $0x620] sm:$0xff] %vm2252, %v2192
      %3282 = vst.msk [vmem:[%s174 + $0x628] sm:$0xff] %vm2252, %v2193
      %3283 = vst.msk [vmem:[%s174 + $0x630] sm:$0xff] %vm2252, %v2194
      %3284 = vst.msk [vmem:[%s174 + $0x638] sm:$0xff] %vm2252, %v2195
      %3285 = vst.msk [vmem:[%s174 + $0x640] sm:$0xff] %vm2252, %v2196
      %3286 = vst.msk [vmem:[%s174 + $0x648] sm:$0xff] %vm2252, %v2197
      %3287 = vst.msk [vmem:[%s174 + $0x650] sm:$0xff] %vm2252, %v2198
      %3288 = vst.msk [vmem:[%s174 + $0x658] sm:$0xff] %vm2252, %v2199
      %3289 = vst.msk [vmem:[%s174 + $0x660] sm:$0xff] %vm2252, %v2200
      %3290 = vst.msk [vmem:[%s174 + $0x668] sm:$0xff] %vm2252, %v2201
      %3291 = vst.msk [vmem:[%s174 + $0x670] sm:$0xff] %vm2252, %v2202
      %3292 = vst.msk [vmem:[%s174 + $0x678] sm:$0xff] %vm2252, %v2203
      %3293 = vst.msk [vmem:[%s174 + $0x680] sm:$0xff] %vm2252, %v2204
      %3294 = vst.msk [vmem:[%s174 + $0x688] sm:$0xff] %vm2252, %v2205
      %3295 = vst.msk [vmem:[%s174 + $0x690] sm:$0xff] %vm2252, %v2206
      %3296 = vst.msk [vmem:[%s174 + $0x698] sm:$0xff] %vm2252, %v2207
      %3297 = vst.msk [vmem:[%s174 + $0x6a0] sm:$0xff] %vm2252, %v2208
      %3298 = vst.msk [vmem:[%s174 + $0x6a8] sm:$0xff] %vm2252, %v2209
      %3299 = vst.msk [vmem:[%s174 + $0x6b0] sm:$0xff] %vm2252, %v2210
      %3300 = vst.msk [vmem:[%s174 + $0x6b8] sm:$0xff] %vm2252, %v2211
      %3301 = vst.msk [vmem:[%s174 + $0x6c0] sm:$0xff] %vm2252, %v2212
      %3302 = vst.msk [vmem:[%s174 + $0x6c8] sm:$0xff] %vm2252, %v2213
      %3303 = vst.msk [vmem:[%s174 + $0x6d0] sm:$0xff] %vm2252, %v2214
      %3304 = vst.msk [vmem:[%s174 + $0x6d8] sm:$0xff] %vm2252, %v2215
      %3305 = vst.msk [vmem:[%s174 + $0x6e0] sm:$0xff] %vm2252, %v2216
      %3306 = vst.msk [vmem:[%s174 + $0x6e8] sm:$0xff] %vm2252, %v2217
      %3307 = vst.msk [vmem:[%s174 + $0x6f0] sm:$0xff] %vm2252, %v2218
      %3308 = vst.msk [vmem:[%s174 + $0x6f8] sm:$0xff] %vm2252, %v2219
      %3309 = vst.msk [vmem:[%s174 + $0x700] sm:$0xff] %vm2252, %v2220
      %3310 = vst.msk [vmem:[%s174 + $0x708] sm:$0xff] %vm2252, %v2221
      %3311 = vst.msk [vmem:[%s174 + $0x710] sm:$0xff] %vm2252, %v2222
      %3312 = vst.msk [vmem:[%s174 + $0x718] sm:$0xff] %vm2252, %v2223
      %3313 = vst.msk [vmem:[%s174 + $0x720] sm:$0xff] %vm2252, %v2224
      %3314 = vst.msk [vmem:[%s174 + $0x728] sm:$0xff] %vm2252, %v2225
      %3315 = vst.msk [vmem:[%s174 + $0x730] sm:$0xff] %vm2252, %v2226
      %3316 = vst.msk [vmem:[%s174 + $0x738] sm:$0xff] %vm2252, %v2227
      %3317 = vst.msk [vmem:[%s174 + $0x740] sm:$0xff] %vm2252, %v2228
      %3318 = vst.msk [vmem:[%s174 + $0x748] sm:$0xff] %vm2252, %v2229
      %3319 = vst.msk [vmem:[%s174 + $0x750] sm:$0xff] %vm2252, %v2230
      %3320 = vst.msk [vmem:[%s174 + $0x758] sm:$0xff] %vm2252, %v2231
      %3321 = vst.msk [vmem:[%s174 + $0x760] sm:$0xff] %vm2252, %v2232
      %3322 = vst.msk [vmem:[%s174 + $0x768] sm:$0xff] %vm2252, %v2233
      %3323 = vst.msk [vmem:[%s174 + $0x770] sm:$0xff] %vm2252, %v2234
      %3324 = vst.msk [vmem:[%s174 + $0x778] sm:$0xff] %vm2252, %v2235
      %3325 = vst.msk [vmem:[%s174 + $0x780] sm:$0xff] %vm2252, %v2236
      %3326 = vst.msk [vmem:[%s174 + $0x788] sm:$0xff] %vm2252, %v2237
      %3327 = vst.msk [vmem:[%s174 + $0x790] sm:$0xff] %vm2252, %v2238
      %3328 = vst.msk [vmem:[%s174 + $0x798] sm:$0xff] %vm2252, %v2239
      %3329 = vst.msk [vmem:[%s174 + $0x7a0] sm:$0xff] %vm2252, %v2240
      %3330 = vst.msk [vmem:[%s174 + $0x7a8] sm:$0xff] %vm2252, %v2241
      %3331 = vst.msk [vmem:[%s174 + $0x7b0] sm:$0xff] %vm2252, %v2242
      %3332 = vst.msk [vmem:[%s174 + $0x7b8] sm:$0xff] %vm2252, %v2243
      %3333 = vst.msk [vmem:[%s174 + $0x7c0] sm:$0xff] %vm2252, %v2244
      %3334 = vst.msk [vmem:[%s174 + $0x7c8] sm:$0xff] %vm2252, %v2245
      %3335 = vst.msk [vmem:[%s174 + $0x7d0] sm:$0xff] %vm2252, %v2246
      %3336 = vst.msk [vmem:[%s174 + $0x7d8] sm:$0xff] %vm2252, %v2247
      %3337 = vst.msk [vmem:[%s174 + $0x7e0] sm:$0xff] %vm2252, %v2248
      %3338 = vst.msk [vmem:[%s174 + $0x7e8] sm:$0xff] %vm2252, %v2249
      %3339 = vst.msk [vmem:[%s174 + $0x7f0] sm:$0xff] %vm2252, %v2250
      %3340 = vst.msk [vmem:[%s174 + $0x7f8] sm:$0xff] %vm2252, %v2251
      %3405 = vrot.lane.b32.xlu0 %v2265, 32
      %v3406 = vpop.permute.xlu0 %3405
      %3407 = vrot.lane.b32.xlu0 %v2278, 32
      %v3408 = vpop.permute.xlu0 %3407
      %3409 = vrot.lane.b32.xlu0 %v2291, 32
      %v3410 = vpop.permute.xlu0 %3409
      %3411 = vrot.lane.b32.xlu0 %v2304, 32
      %v3412 = vpop.permute.xlu0 %3411
      %3413 = vrot.lane.b32.xlu0 %v2317, 32
      %v3414 = vpop.permute.xlu0 %3413
      %3415 = vrot.lane.b32.xlu0 %v2330, 32
      %v3416 = vpop.permute.xlu0 %3415
      %3417 = vrot.lane.b32.xlu0 %v2343, 32
      %v3418 = vpop.permute.xlu0 %3417
      %3419 = vrot.lane.b32.xlu0 %v2356, 32
      %v3420 = vpop.permute.xlu0 %3419
      %3421 = vrot.lane.b32.xlu0 %v2369, 32
      %v3422 = vpop.permute.xlu0 %3421
      %3423 = vrot.lane.b32.xlu0 %v2382, 32
      %v3424 = vpop.permute.xlu0 %3423
      %3425 = vrot.lane.b32.xlu0 %v2395, 32
      %v3426 = vpop.permute.xlu0 %3425
      %3427 = vrot.lane.b32.xlu0 %v2408, 32
      %v3428 = vpop.permute.xlu0 %3427
      %3429 = vrot.lane.b32.xlu0 %v2421, 32
      %v3430 = vpop.permute.xlu0 %3429
      %3431 = vrot.lane.b32.xlu0 %v2434, 32
      %v3432 = vpop.permute.xlu0 %3431
      %3433 = vrot.lane.b32.xlu0 %v2447, 32
      %v3434 = vpop.permute.xlu0 %3433
      %3435 = vrot.lane.b32.xlu0 %v2460, 32
      %v3436 = vpop.permute.xlu0 %3435
      %3437 = vrot.lane.b32.xlu0 %v2473, 32
      %v3438 = vpop.permute.xlu0 %3437
      %3439 = vrot.lane.b32.xlu0 %v2486, 32
      %v3440 = vpop.permute.xlu0 %3439
      %3441 = vrot.lane.b32.xlu0 %v2499, 32
      %v3442 = vpop.permute.xlu0 %3441
      %3443 = vrot.lane.b32.xlu0 %v2512, 32
      %v3444 = vpop.permute.xlu0 %3443
      %3445 = vrot.lane.b32.xlu0 %v2525, 32
      %v3446 = vpop.permute.xlu0 %3445
      %3447 = vrot.lane.b32.xlu0 %v2538, 32
      %v3448 = vpop.permute.xlu0 %3447
      %3449 = vrot.lane.b32.xlu0 %v2551, 32
      %v3450 = vpop.permute.xlu0 %3449
      %3451 = vrot.lane.b32.xlu0 %v2564, 32
      %v3452 = vpop.permute.xlu0 %3451
      %3453 = vrot.lane.b32.xlu0 %v2577, 32
      %v3454 = vpop.permute.xlu0 %3453
      %3455 = vrot.lane.b32.xlu0 %v2590, 32
      %v3456 = vpop.permute.xlu0 %3455
      %3457 = vrot.lane.b32.xlu0 %v2603, 32
      %v3458 = vpop.permute.xlu0 %3457
      %3459 = vrot.lane.b32.xlu0 %v2616, 32
      %v3460 = vpop.permute.xlu0 %3459
      %3461 = vrot.lane.b32.xlu0 %v2629, 32
      %v3462 = vpop.permute.xlu0 %3461
      %3463 = vrot.lane.b32.xlu0 %v2642, 32
      %v3464 = vpop.permute.xlu0 %3463
      %3465 = vrot.lane.b32.xlu0 %v2655, 32
      %v3466 = vpop.permute.xlu0 %3465
      %3467 = vrot.lane.b32.xlu0 %v2668, 32
      %v3468 = vpop.permute.xlu0 %3467
      %3469 = vrot.lane.b32.xlu0 %v2681, 32
      %v3470 = vpop.permute.xlu0 %3469
      %3471 = vrot.lane.b32.xlu0 %v2694, 32
      %v3472 = vpop.permute.xlu0 %3471
      %3473 = vrot.lane.b32.xlu0 %v2707, 32
      %v3474 = vpop.permute.xlu0 %3473
      %3475 = vrot.lane.b32.xlu0 %v2720, 32
      %v3476 = vpop.permute.xlu0 %3475
      %3477 = vrot.lane.b32.xlu0 %v2733, 32
      %v3478 = vpop.permute.xlu0 %3477
      %3479 = vrot.lane.b32.xlu0 %v2746, 32
      %v3480 = vpop.permute.xlu0 %3479
      %3481 = vrot.lane.b32.xlu0 %v2759, 32
      %v3482 = vpop.permute.xlu0 %3481
      %3483 = vrot.lane.b32.xlu0 %v2772, 32
      %v3484 = vpop.permute.xlu0 %3483
      %3485 = vrot.lane.b32.xlu0 %v2785, 32
      %v3486 = vpop.permute.xlu0 %3485
      %3487 = vrot.lane.b32.xlu0 %v2798, 32
      %v3488 = vpop.permute.xlu0 %3487
      %3489 = vrot.lane.b32.xlu0 %v2811, 32
      %v3490 = vpop.permute.xlu0 %3489
      %3491 = vrot.lane.b32.xlu0 %v2824, 32
      %v3492 = vpop.permute.xlu0 %3491
      %3493 = vrot.lane.b32.xlu0 %v2837, 32
      %v3494 = vpop.permute.xlu0 %3493
      %3495 = vrot.lane.b32.xlu0 %v2850, 32
      %v3496 = vpop.permute.xlu0 %3495
      %3497 = vrot.lane.b32.xlu0 %v2863, 32
      %v3498 = vpop.permute.xlu0 %3497
      %3499 = vrot.lane.b32.xlu0 %v2876, 32
      %v3500 = vpop.permute.xlu0 %3499
      %3501 = vrot.lane.b32.xlu0 %v2889, 32
      %v3502 = vpop.permute.xlu0 %3501
      %3503 = vrot.lane.b32.xlu0 %v2902, 32
      %v3504 = vpop.permute.xlu0 %3503
      %3505 = vrot.lane.b32.xlu0 %v2915, 32
      %v3506 = vpop.permute.xlu0 %3505
      %3507 = vrot.lane.b32.xlu0 %v2928, 32
      %v3508 = vpop.permute.xlu0 %3507
      %3509 = vrot.lane.b32.xlu0 %v2941, 32
      %v3510 = vpop.permute.xlu0 %3509
      %3511 = vrot.lane.b32.xlu0 %v2954, 32
      %v3512 = vpop.permute.xlu0 %3511
      %3513 = vrot.lane.b32.xlu0 %v2967, 32
      %v3514 = vpop.permute.xlu0 %3513
      %3515 = vrot.lane.b32.xlu0 %v2980, 32
      %v3516 = vpop.permute.xlu0 %3515
      %3517 = vrot.lane.b32.xlu0 %v2993, 32
      %v3518 = vpop.permute.xlu0 %3517
      %3519 = vrot.lane.b32.xlu0 %v3006, 32
      %v3520 = vpop.permute.xlu0 %3519
      %3521 = vrot.lane.b32.xlu0 %v3019, 32
      %v3522 = vpop.permute.xlu0 %3521
      %3523 = vrot.lane.b32.xlu0 %v3032, 32
      %v3524 = vpop.permute.xlu0 %3523
      %3525 = vrot.lane.b32.xlu0 %v3045, 32
      %v3526 = vpop.permute.xlu0 %3525
      %3527 = vrot.lane.b32.xlu0 %v3058, 32
      %v3528 = vpop.permute.xlu0 %3527
      %3529 = vrot.lane.b32.xlu0 %v3071, 32
      %v3530 = vpop.permute.xlu0 %3529
      %3531 = vrot.lane.b32.xlu0 %v3084, 32
      %v3532 = vpop.permute.xlu0 %3531
      %vm3597 = vcmask 523520
      %3598 = vst.msk [vmem:[%s174] sm:$0xff] %vm3597, %v3406
      %3599 = vst.msk [vmem:[%s174 + $0x8] sm:$0xff] %vm3597, %v3406
      %3600 = vst.msk [vmem:[%s174 + $0x10] sm:$0xff] %vm3597, %v3406
      %3601 = vst.msk [vmem:[%s174 + $0x18] sm:$0xff] %vm3597, %v3406
      %3602 = vst.msk [vmem:[%s174 + $0x20] sm:$0xff] %vm3597, %v3408
      %3603 = vst.msk [vmem:[%s174 + $0x28] sm:$0xff] %vm3597, %v3408
      %3604 = vst.msk [vmem:[%s174 + $0x30] sm:$0xff] %vm3597, %v3408
      %3605 = vst.msk [vmem:[%s174 + $0x38] sm:$0xff] %vm3597, %v3408
      %3606 = vst.msk [vmem:[%s174 + $0x40] sm:$0xff] %vm3597, %v3410
      %3607 = vst.msk [vmem:[%s174 + $0x48] sm:$0xff] %vm3597, %v3410
      %3608 = vst.msk [vmem:[%s174 + $0x50] sm:$0xff] %vm3597, %v3410
      %3609 = vst.msk [vmem:[%s174 + $0x58] sm:$0xff] %vm3597, %v3410
      %3610 = vst.msk [vmem:[%s174 + $0x60] sm:$0xff] %vm3597, %v3412
      %3611 = vst.msk [vmem:[%s174 + $0x68] sm:$0xff] %vm3597, %v3412
      %3612 = vst.msk [vmem:[%s174 + $0x70] sm:$0xff] %vm3597, %v3412
      %3613 = vst.msk [vmem:[%s174 + $0x78] sm:$0xff] %vm3597, %v3412
      %3614 = vst.msk [vmem:[%s174 + $0x80] sm:$0xff] %vm3597, %v3414
      %3615 = vst.msk [vmem:[%s174 + $0x88] sm:$0xff] %vm3597, %v3414
      %3616 = vst.msk [vmem:[%s174 + $0x90] sm:$0xff] %vm3597, %v3414
      %3617 = vst.msk [vmem:[%s174 + $0x98] sm:$0xff] %vm3597, %v3414
      %3618 = vst.msk [vmem:[%s174 + $0xa0] sm:$0xff] %vm3597, %v3416
      %3619 = vst.msk [vmem:[%s174 + $0xa8] sm:$0xff] %vm3597, %v3416
      %3620 = vst.msk [vmem:[%s174 + $0xb0] sm:$0xff] %vm3597, %v3416
      %3621 = vst.msk [vmem:[%s174 + $0xb8] sm:$0xff] %vm3597, %v3416
      %3622 = vst.msk [vmem:[%s174 + $0xc0] sm:$0xff] %vm3597, %v3418
      %3623 = vst.msk [vmem:[%s174 + $0xc8] sm:$0xff] %vm3597, %v3418
      %3624 = vst.msk [vmem:[%s174 + $0xd0] sm:$0xff] %vm3597, %v3418
      %3625 = vst.msk [vmem:[%s174 + $0xd8] sm:$0xff] %vm3597, %v3418
      %3626 = vst.msk [vmem:[%s174 + $0xe0] sm:$0xff] %vm3597, %v3420
      %3627 = vst.msk [vmem:[%s174 + $0xe8] sm:$0xff] %vm3597, %v3420
      %3628 = vst.msk [vmem:[%s174 + $0xf0] sm:$0xff] %vm3597, %v3420
      %3629 = vst.msk [vmem:[%s174 + $0xf8] sm:$0xff] %vm3597, %v3420
      %3630 = vst.msk [vmem:[%s174 + $0x100] sm:$0xff] %vm3597, %v3422
      %3631 = vst.msk [vmem:[%s174 + $0x108] sm:$0xff] %vm3597, %v3422
      %3632 = vst.msk [vmem:[%s174 + $0x110] sm:$0xff] %vm3597, %v3422
      %3633 = vst.msk [vmem:[%s174 + $0x118] sm:$0xff] %vm3597, %v3422
      %3634 = vst.msk [vmem:[%s174 + $0x120] sm:$0xff] %vm3597, %v3424
      %3635 = vst.msk [vmem:[%s174 + $0x128] sm:$0xff] %vm3597, %v3424
      %3636 = vst.msk [vmem:[%s174 + $0x130] sm:$0xff] %vm3597, %v3424
      %3637 = vst.msk [vmem:[%s174 + $0x138] sm:$0xff] %vm3597, %v3424
      %3638 = vst.msk [vmem:[%s174 + $0x140] sm:$0xff] %vm3597, %v3426
      %3639 = vst.msk [vmem:[%s174 + $0x148] sm:$0xff] %vm3597, %v3426
      %3640 = vst.msk [vmem:[%s174 + $0x150] sm:$0xff] %vm3597, %v3426
      %3641 = vst.msk [vmem:[%s174 + $0x158] sm:$0xff] %vm3597, %v3426
      %3642 = vst.msk [vmem:[%s174 + $0x160] sm:$0xff] %vm3597, %v3428
      %3643 = vst.msk [vmem:[%s174 + $0x168] sm:$0xff] %vm3597, %v3428
      %3644 = vst.msk [vmem:[%s174 + $0x170] sm:$0xff] %vm3597, %v3428
      %3645 = vst.msk [vmem:[%s174 + $0x178] sm:$0xff] %vm3597, %v3428
      %3646 = vst.msk [vmem:[%s174 + $0x180] sm:$0xff] %vm3597, %v3430
      %3647 = vst.msk [vmem:[%s174 + $0x188] sm:$0xff] %vm3597, %v3430
      %3648 = vst.msk [vmem:[%s174 + $0x190] sm:$0xff] %vm3597, %v3430
      %3649 = vst.msk [vmem:[%s174 + $0x198] sm:$0xff] %vm3597, %v3430
      %3650 = vst.msk [vmem:[%s174 + $0x1a0] sm:$0xff] %vm3597, %v3432
      %3651 = vst.msk [vmem:[%s174 + $0x1a8] sm:$0xff] %vm3597, %v3432
      %3652 = vst.msk [vmem:[%s174 + $0x1b0] sm:$0xff] %vm3597, %v3432
      %3653 = vst.msk [vmem:[%s174 + $0x1b8] sm:$0xff] %vm3597, %v3432
      %3654 = vst.msk [vmem:[%s174 + $0x1c0] sm:$0xff] %vm3597, %v3434
      %3655 = vst.msk [vmem:[%s174 + $0x1c8] sm:$0xff] %vm3597, %v3434
      %3656 = vst.msk [vmem:[%s174 + $0x1d0] sm:$0xff] %vm3597, %v3434
      %3657 = vst.msk [vmem:[%s174 + $0x1d8] sm:$0xff] %vm3597, %v3434
      %3658 = vst.msk [vmem:[%s174 + $0x1e0] sm:$0xff] %vm3597, %v3436
      %3659 = vst.msk [vmem:[%s174 + $0x1e8] sm:$0xff] %vm3597, %v3436
      %3660 = vst.msk [vmem:[%s174 + $0x1f0] sm:$0xff] %vm3597, %v3436
      %3661 = vst.msk [vmem:[%s174 + $0x1f8] sm:$0xff] %vm3597, %v3436
      %3662 = vst.msk [vmem:[%s174 + $0x200] sm:$0xff] %vm3597, %v3438
      %3663 = vst.msk [vmem:[%s174 + $0x208] sm:$0xff] %vm3597, %v3438
      %3664 = vst.msk [vmem:[%s174 + $0x210] sm:$0xff] %vm3597, %v3438
      %3665 = vst.msk [vmem:[%s174 + $0x218] sm:$0xff] %vm3597, %v3438
      %3666 = vst.msk [vmem:[%s174 + $0x220] sm:$0xff] %vm3597, %v3440
      %3667 = vst.msk [vmem:[%s174 + $0x228] sm:$0xff] %vm3597, %v3440
      %3668 = vst.msk [vmem:[%s174 + $0x230] sm:$0xff] %vm3597, %v3440
      %3669 = vst.msk [vmem:[%s174 + $0x238] sm:$0xff] %vm3597, %v3440
      %3670 = vst.msk [vmem:[%s174 + $0x240] sm:$0xff] %vm3597, %v3442
      %3671 = vst.msk [vmem:[%s174 + $0x248] sm:$0xff] %vm3597, %v3442
      %3672 = vst.msk [vmem:[%s174 + $0x250] sm:$0xff] %vm3597, %v3442
      %3673 = vst.msk [vmem:[%s174 + $0x258] sm:$0xff] %vm3597, %v3442
      %3674 = vst.msk [vmem:[%s174 + $0x260] sm:$0xff] %vm3597, %v3444
      %3675 = vst.msk [vmem:[%s174 + $0x268] sm:$0xff] %vm3597, %v3444
      %3676 = vst.msk [vmem:[%s174 + $0x270] sm:$0xff] %vm3597, %v3444
      %3677 = vst.msk [vmem:[%s174 + $0x278] sm:$0xff] %vm3597, %v3444
      %3678 = vst.msk [vmem:[%s174 + $0x280] sm:$0xff] %vm3597, %v3446
      %3679 = vst.msk [vmem:[%s174 + $0x288] sm:$0xff] %vm3597, %v3446
      %3680 = vst.msk [vmem:[%s174 + $0x290] sm:$0xff] %vm3597, %v3446
      %3681 = vst.msk [vmem:[%s174 + $0x298] sm:$0xff] %vm3597, %v3446
      %3682 = vst.msk [vmem:[%s174 + $0x2a0] sm:$0xff] %vm3597, %v3448
      %3683 = vst.msk [vmem:[%s174 + $0x2a8] sm:$0xff] %vm3597, %v3448
      %3684 = vst.msk [vmem:[%s174 + $0x2b0] sm:$0xff] %vm3597, %v3448
      %3685 = vst.msk [vmem:[%s174 + $0x2b8] sm:$0xff] %vm3597, %v3448
      %3686 = vst.msk [vmem:[%s174 + $0x2c0] sm:$0xff] %vm3597, %v3450
      %3687 = vst.msk [vmem:[%s174 + $0x2c8] sm:$0xff] %vm3597, %v3450
      %3688 = vst.msk [vmem:[%s174 + $0x2d0] sm:$0xff] %vm3597, %v3450
      %3689 = vst.msk [vmem:[%s174 + $0x2d8] sm:$0xff] %vm3597, %v3450
      %3690 = vst.msk [vmem:[%s174 + $0x2e0] sm:$0xff] %vm3597, %v3452
      %3691 = vst.msk [vmem:[%s174 + $0x2e8] sm:$0xff] %vm3597, %v3452
      %3692 = vst.msk [vmem:[%s174 + $0x2f0] sm:$0xff] %vm3597, %v3452
      %3693 = vst.msk [vmem:[%s174 + $0x2f8] sm:$0xff] %vm3597, %v3452
      %3694 = vst.msk [vmem:[%s174 + $0x300] sm:$0xff] %vm3597, %v3454
      %3695 = vst.msk [vmem:[%s174 + $0x308] sm:$0xff] %vm3597, %v3454
      %3696 = vst.msk [vmem:[%s174 + $0x310] sm:$0xff] %vm3597, %v3454
      %3697 = vst.msk [vmem:[%s174 + $0x318] sm:$0xff] %vm3597, %v3454
      %3698 = vst.msk [vmem:[%s174 + $0x320] sm:$0xff] %vm3597, %v3456
      %3699 = vst.msk [vmem:[%s174 + $0x328] sm:$0xff] %vm3597, %v3456
      %3700 = vst.msk [vmem:[%s174 + $0x330] sm:$0xff] %vm3597, %v3456
      %3701 = vst.msk [vmem:[%s174 + $0x338] sm:$0xff] %vm3597, %v3456
      %3702 = vst.msk [vmem:[%s174 + $0x340] sm:$0xff] %vm3597, %v3458
      %3703 = vst.msk [vmem:[%s174 + $0x348] sm:$0xff] %vm3597, %v3458
      %3704 = vst.msk [vmem:[%s174 + $0x350] sm:$0xff] %vm3597, %v3458
      %3705 = vst.msk [vmem:[%s174 + $0x358] sm:$0xff] %vm3597, %v3458
      %3706 = vst.msk [vmem:[%s174 + $0x360] sm:$0xff] %vm3597, %v3460
      %3707 = vst.msk [vmem:[%s174 + $0x368] sm:$0xff] %vm3597, %v3460
      %3708 = vst.msk [vmem:[%s174 + $0x370] sm:$0xff] %vm3597, %v3460
      %3709 = vst.msk [vmem:[%s174 + $0x378] sm:$0xff] %vm3597, %v3460
      %3710 = vst.msk [vmem:[%s174 + $0x380] sm:$0xff] %vm3597, %v3462
      %3711 = vst.msk [vmem:[%s174 + $0x388] sm:$0xff] %vm3597, %v3462
      %3712 = vst.msk [vmem:[%s174 + $0x390] sm:$0xff] %vm3597, %v3462
      %3713 = vst.msk [vmem:[%s174 + $0x398] sm:$0xff] %vm3597, %v3462
      %3714 = vst.msk [vmem:[%s174 + $0x3a0] sm:$0xff] %vm3597, %v3464
      %3715 = vst.msk [vmem:[%s174 + $0x3a8] sm:$0xff] %vm3597, %v3464
      %3716 = vst.msk [vmem:[%s174 + $0x3b0] sm:$0xff] %vm3597, %v3464
      %3717 = vst.msk [vmem:[%s174 + $0x3b8] sm:$0xff] %vm3597, %v3464
      %3718 = vst.msk [vmem:[%s174 + $0x3c0] sm:$0xff] %vm3597, %v3466
      %3719 = vst.msk [vmem:[%s174 + $0x3c8] sm:$0xff] %vm3597, %v3466
      %3720 = vst.msk [vmem:[%s174 + $0x3d0] sm:$0xff] %vm3597, %v3466
      %3721 = vst.msk [vmem:[%s174 + $0x3d8] sm:$0xff] %vm3597, %v3466
      %3722 = vst.msk [vmem:[%s174 + $0x3e0] sm:$0xff] %vm3597, %v3468
      %3723 = vst.msk [vmem:[%s174 + $0x3e8] sm:$0xff] %vm3597, %v3468
      %3724 = vst.msk [vmem:[%s174 + $0x3f0] sm:$0xff] %vm3597, %v3468
      %3725 = vst.msk [vmem:[%s174 + $0x3f8] sm:$0xff] %vm3597, %v3468
      %3726 = vst.msk [vmem:[%s174 + $0x400] sm:$0xff] %vm3597, %v3470
      %3727 = vst.msk [vmem:[%s174 + $0x408] sm:$0xff] %vm3597, %v3470
      %3728 = vst.msk [vmem:[%s174 + $0x410] sm:$0xff] %vm3597, %v3470
      %3729 = vst.msk [vmem:[%s174 + $0x418] sm:$0xff] %vm3597, %v3470
      %3730 = vst.msk [vmem:[%s174 + $0x420] sm:$0xff] %vm3597, %v3472
      %3731 = vst.msk [vmem:[%s174 + $0x428] sm:$0xff] %vm3597, %v3472
      %3732 = vst.msk [vmem:[%s174 + $0x430] sm:$0xff] %vm3597, %v3472
      %3733 = vst.msk [vmem:[%s174 + $0x438] sm:$0xff] %vm3597, %v3472
      %3734 = vst.msk [vmem:[%s174 + $0x440] sm:$0xff] %vm3597, %v3474
      %3735 = vst.msk [vmem:[%s174 + $0x448] sm:$0xff] %vm3597, %v3474
      %3736 = vst.msk [vmem:[%s174 + $0x450] sm:$0xff] %vm3597, %v3474
      %3737 = vst.msk [vmem:[%s174 + $0x458] sm:$0xff] %vm3597, %v3474
      %3738 = vst.msk [vmem:[%s174 + $0x460] sm:$0xff] %vm3597, %v3476
      %3739 = vst.msk [vmem:[%s174 + $0x468] sm:$0xff] %vm3597, %v3476
      %3740 = vst.msk [vmem:[%s174 + $0x470] sm:$0xff] %vm3597, %v3476
      %3741 = vst.msk [vmem:[%s174 + $0x478] sm:$0xff] %vm3597, %v3476
      %3742 = vst.msk [vmem:[%s174 + $0x480] sm:$0xff] %vm3597, %v3478
      %3743 = vst.msk [vmem:[%s174 + $0x488] sm:$0xff] %vm3597, %v3478
      %3744 = vst.msk [vmem:[%s174 + $0x490] sm:$0xff] %vm3597, %v3478
      %3745 = vst.msk [vmem:[%s174 + $0x498] sm:$0xff] %vm3597, %v3478
      %3746 = vst.msk [vmem:[%s174 + $0x4a0] sm:$0xff] %vm3597, %v3480
      %3747 = vst.msk [vmem:[%s174 + $0x4a8] sm:$0xff] %vm3597, %v3480
      %3748 = vst.msk [vmem:[%s174 + $0x4b0] sm:$0xff] %vm3597, %v3480
      %3749 = vst.msk [vmem:[%s174 + $0x4b8] sm:$0xff] %vm3597, %v3480
      %3750 = vst.msk [vmem:[%s174 + $0x4c0] sm:$0xff] %vm3597, %v3482
      %3751 = vst.msk [vmem:[%s174 + $0x4c8] sm:$0xff] %vm3597, %v3482
      %3752 = vst.msk [vmem:[%s174 + $0x4d0] sm:$0xff] %vm3597, %v3482
      %3753 = vst.msk [vmem:[%s174 + $0x4d8] sm:$0xff] %vm3597, %v3482
      %3754 = vst.msk [vmem:[%s174 + $0x4e0] sm:$0xff] %vm3597, %v3484
      %3755 = vst.msk [vmem:[%s174 + $0x4e8] sm:$0xff] %vm3597, %v3484
      %3756 = vst.msk [vmem:[%s174 + $0x4f0] sm:$0xff] %vm3597, %v3484
      %3757 = vst.msk [vmem:[%s174 + $0x4f8] sm:$0xff] %vm3597, %v3484
      %3758 = vst.msk [vmem:[%s174 + $0x500] sm:$0xff] %vm3597, %v3486
      %3759 = vst.msk [vmem:[%s174 + $0x508] sm:$0xff] %vm3597, %v3486
      %3760 = vst.msk [vmem:[%s174 + $0x510] sm:$0xff] %vm3597, %v3486
      %3761 = vst.msk [vmem:[%s174 + $0x518] sm:$0xff] %vm3597, %v3486
      %3762 = vst.msk [vmem:[%s174 + $0x520] sm:$0xff] %vm3597, %v3488
      %3763 = vst.msk [vmem:[%s174 + $0x528] sm:$0xff] %vm3597, %v3488
      %3764 = vst.msk [vmem:[%s174 + $0x530] sm:$0xff] %vm3597, %v3488
      %3765 = vst.msk [vmem:[%s174 + $0x538] sm:$0xff] %vm3597, %v3488
      %3766 = vst.msk [vmem:[%s174 + $0x540] sm:$0xff] %vm3597, %v3490
      %3767 = vst.msk [vmem:[%s174 + $0x548] sm:$0xff] %vm3597, %v3490
      %3768 = vst.msk [vmem:[%s174 + $0x550] sm:$0xff] %vm3597, %v3490
      %3769 = vst.msk [vmem:[%s174 + $0x558] sm:$0xff] %vm3597, %v3490
      %3770 = vst.msk [vmem:[%s174 + $0x560] sm:$0xff] %vm3597, %v3492
      %3771 = vst.msk [vmem:[%s174 + $0x568] sm:$0xff] %vm3597, %v3492
      %3772 = vst.msk [vmem:[%s174 + $0x570] sm:$0xff] %vm3597, %v3492
      %3773 = vst.msk [vmem:[%s174 + $0x578] sm:$0xff] %vm3597, %v3492
      %3774 = vst.msk [vmem:[%s174 + $0x580] sm:$0xff] %vm3597, %v3494
      %3775 = vst.msk [vmem:[%s174 + $0x588] sm:$0xff] %vm3597, %v3494
      %3776 = vst.msk [vmem:[%s174 + $0x590] sm:$0xff] %vm3597, %v3494
      %3777 = vst.msk [vmem:[%s174 + $0x598] sm:$0xff] %vm3597, %v3494
      %3778 = vst.msk [vmem:[%s174 + $0x5a0] sm:$0xff] %vm3597, %v3496
      %3779 = vst.msk [vmem:[%s174 + $0x5a8] sm:$0xff] %vm3597, %v3496
      %3780 = vst.msk [vmem:[%s174 + $0x5b0] sm:$0xff] %vm3597, %v3496
      %3781 = vst.msk [vmem:[%s174 + $0x5b8] sm:$0xff] %vm3597, %v3496
      %3782 = vst.msk [vmem:[%s174 + $0x5c0] sm:$0xff] %vm3597, %v3498
      %3783 = vst.msk [vmem:[%s174 + $0x5c8] sm:$0xff] %vm3597, %v3498
      %3784 = vst.msk [vmem:[%s174 + $0x5d0] sm:$0xff] %vm3597, %v3498
      %3785 = vst.msk [vmem:[%s174 + $0x5d8] sm:$0xff] %vm3597, %v3498
      %3786 = vst.msk [vmem:[%s174 + $0x5e0] sm:$0xff] %vm3597, %v3500
      %3787 = vst.msk [vmem:[%s174 + $0x5e8] sm:$0xff] %vm3597, %v3500
      %3788 = vst.msk [vmem:[%s174 + $0x5f0] sm:$0xff] %vm3597, %v3500
      %3789 = vst.msk [vmem:[%s174 + $0x5f8] sm:$0xff] %vm3597, %v3500
      %3790 = vst.msk [vmem:[%s174 + $0x600] sm:$0xff] %vm3597, %v3502
      %3791 = vst.msk [vmem:[%s174 + $0x608] sm:$0xff] %vm3597, %v3502
      %3792 = vst.msk [vmem:[%s174 + $0x610] sm:$0xff] %vm3597, %v3502
      %3793 = vst.msk [vmem:[%s174 + $0x618] sm:$0xff] %vm3597, %v3502
      %3794 = vst.msk [vmem:[%s174 + $0x620] sm:$0xff] %vm3597, %v3504
      %3795 = vst.msk [vmem:[%s174 + $0x628] sm:$0xff] %vm3597, %v3504
      %3796 = vst.msk [vmem:[%s174 + $0x630] sm:$0xff] %vm3597, %v3504
      %3797 = vst.msk [vmem:[%s174 + $0x638] sm:$0xff] %vm3597, %v3504
      %3798 = vst.msk [vmem:[%s174 + $0x640] sm:$0xff] %vm3597, %v3506
      %3799 = vst.msk [vmem:[%s174 + $0x648] sm:$0xff] %vm3597, %v3506
      %3800 = vst.msk [vmem:[%s174 + $0x650] sm:$0xff] %vm3597, %v3506
      %3801 = vst.msk [vmem:[%s174 + $0x658] sm:$0xff] %vm3597, %v3506
      %3802 = vst.msk [vmem:[%s174 + $0x660] sm:$0xff] %vm3597, %v3508
      %3803 = vst.msk [vmem:[%s174 + $0x668] sm:$0xff] %vm3597, %v3508
      %3804 = vst.msk [vmem:[%s174 + $0x670] sm:$0xff] %vm3597, %v3508
      %3805 = vst.msk [vmem:[%s174 + $0x678] sm:$0xff] %vm3597, %v3508
      %3806 = vst.msk [vmem:[%s174 + $0x680] sm:$0xff] %vm3597, %v3510
      %3807 = vst.msk [vmem:[%s174 + $0x688] sm:$0xff] %vm3597, %v3510
      %3808 = vst.msk [vmem:[%s174 + $0x690] sm:$0xff] %vm3597, %v3510
      %3809 = vst.msk [vmem:[%s174 + $0x698] sm:$0xff] %vm3597, %v3510
      %3810 = vst.msk [vmem:[%s174 + $0x6a0] sm:$0xff] %vm3597, %v3512
      %3811 = vst.msk [vmem:[%s174 + $0x6a8] sm:$0xff] %vm3597, %v3512
      %3812 = vst.msk [vmem:[%s174 + $0x6b0] sm:$0xff] %vm3597, %v3512
      %3813 = vst.msk [vmem:[%s174 + $0x6b8] sm:$0xff] %vm3597, %v3512
      %3814 = vst.msk [vmem:[%s174 + $0x6c0] sm:$0xff] %vm3597, %v3514
      %3815 = vst.msk [vmem:[%s174 + $0x6c8] sm:$0xff] %vm3597, %v3514
      %3816 = vst.msk [vmem:[%s174 + $0x6d0] sm:$0xff] %vm3597, %v3514
      %3817 = vst.msk [vmem:[%s174 + $0x6d8] sm:$0xff] %vm3597, %v3514
      %3818 = vst.msk [vmem:[%s174 + $0x6e0] sm:$0xff] %vm3597, %v3516
      %3819 = vst.msk [vmem:[%s174 + $0x6e8] sm:$0xff] %vm3597, %v3516
      %3820 = vst.msk [vmem:[%s174 + $0x6f0] sm:$0xff] %vm3597, %v3516
      %3821 = vst.msk [vmem:[%s174 + $0x6f8] sm:$0xff] %vm3597, %v3516
      %3822 = vst.msk [vmem:[%s174 + $0x700] sm:$0xff] %vm3597, %v3518
      %3823 = vst.msk [vmem:[%s174 + $0x708] sm:$0xff] %vm3597, %v3518
      %3824 = vst.msk [vmem:[%s174 + $0x710] sm:$0xff] %vm3597, %v3518
      %3825 = vst.msk [vmem:[%s174 + $0x718] sm:$0xff] %vm3597, %v3518
      %3826 = vst.msk [vmem:[%s174 + $0x720] sm:$0xff] %vm3597, %v3520
      %3827 = vst.msk [vmem:[%s174 + $0x728] sm:$0xff] %vm3597, %v3520
      %3828 = vst.msk [vmem:[%s174 + $0x730] sm:$0xff] %vm3597, %v3520
      %3829 = vst.msk [vmem:[%s174 + $0x738] sm:$0xff] %vm3597, %v3520
      %3830 = vst.msk [vmem:[%s174 + $0x740] sm:$0xff] %vm3597, %v3522
      %3831 = vst.msk [vmem:[%s174 + $0x748] sm:$0xff] %vm3597, %v3522
      %3832 = vst.msk [vmem:[%s174 + $0x750] sm:$0xff] %vm3597, %v3522
      %3833 = vst.msk [vmem:[%s174 + $0x758] sm:$0xff] %vm3597, %v3522
      %3834 = vst.msk [vmem:[%s174 + $0x760] sm:$0xff] %vm3597, %v3524
      %3835 = vst.msk [vmem:[%s174 + $0x768] sm:$0xff] %vm3597, %v3524
      %3836 = vst.msk [vmem:[%s174 + $0x770] sm:$0xff] %vm3597, %v3524
      %3837 = vst.msk [vmem:[%s174 + $0x778] sm:$0xff] %vm3597, %v3524
      %3838 = vst.msk [vmem:[%s174 + $0x780] sm:$0xff] %vm3597, %v3526
      %3839 = vst.msk [vmem:[%s174 + $0x788] sm:$0xff] %vm3597, %v3526
      %3840 = vst.msk [vmem:[%s174 + $0x790] sm:$0xff] %vm3597, %v3526
      %3841 = vst.msk [vmem:[%s174 + $0x798] sm:$0xff] %vm3597, %v3526
      %3842 = vst.msk [vmem:[%s174 + $0x7a0] sm:$0xff] %vm3597, %v3528
      %3843 = vst.msk [vmem:[%s174 + $0x7a8] sm:$0xff] %vm3597, %v3528
      %3844 = vst.msk [vmem:[%s174 + $0x7b0] sm:$0xff] %vm3597, %v3528
      %3845 = vst.msk [vmem:[%s174 + $0x7b8] sm:$0xff] %vm3597, %v3528
      %3846 = vst.msk [vmem:[%s174 + $0x7c0] sm:$0xff] %vm3597, %v3530
      %3847 = vst.msk [vmem:[%s174 + $0x7c8] sm:$0xff] %vm3597, %v3530
      %3848 = vst.msk [vmem:[%s174 + $0x7d0] sm:$0xff] %vm3597, %v3530
      %3849 = vst.msk [vmem:[%s174 + $0x7d8] sm:$0xff] %vm3597, %v3530
      %3850 = vst.msk [vmem:[%s174 + $0x7e0] sm:$0xff] %vm3597, %v3532
      %3851 = vst.msk [vmem:[%s174 + $0x7e8] sm:$0xff] %vm3597, %v3532
      %3852 = vst.msk [vmem:[%s174 + $0x7f0] sm:$0xff] %vm3597, %v3532
      %3853 = vst.msk [vmem:[%s174 + $0x7f8] sm:$0xff] %vm3597, %v3532
      %s3854 = smul.u32 64, %s14
      %p3855 = scmp.lt.s32.totalorder %s3854, 255
      %s3856 = scalar_select %p3855, %s3854, 255
      %s3857 = smul.addr %s3856, 4
      %s3858 = smul.addr %s3857, 8
      %s3859 = scalar_lea.vmem %s3, %s3858
      // Predicated region
      $region33: #{tpu_custom_call.1} parent=31 // pred_check
        %p3860 = pneg %p100
      $region34: #{tpu_custom_call.1} parent=31 // pred_check_branch
        %3862 = sbr.rel (%p3860) target = $region36
      $region35: #{tpu_custom_call.1} parent=31 // pred_region
        %s3863 = smul.u32 64, %s14
      $region36: #{tpu_custom_call.1} parent=31 // pred_fallthru
        _
    $region32: #{tpu_custom_call.1} parent=5 // pred_fallthru
      _
    %p3864 = scmp.le.s32.totalorder 2, %s9
    // Predicated region
    $region37: #{tpu_custom_call.1} parent=5 // pred_check
      %p3865 = pneg %p3864
    $region38: #{tpu_custom_call.1} parent=5 // pred_check_branch
      %3867 = sbr.rel (%p3865) target = $region40
    $region39: #{tpu_custom_call.1} parent=5 // pred_region
      %s3868 = ssub.s32 %s9, 2
      // Predicated region
      $region41: #{tpu_custom_call.1} parent=39 // pred_check
        %p3869 = pneg %p106
      $region42: #{tpu_custom_call.1} parent=39 // pred_check_branch
        %3871 = sbr.rel (%p3869) target = $region44
      $region43: #{tpu_custom_call.1} parent=39 // pred_region
        %s3872 = smul.u32 64, %s15
        %p3873 = scmp.lt.s32.totalorder %s3872, 255
        %s3874 = scalar_select %p3873, %s3872, 255
        %s3875 = smul.addr %s3874, 4
        %s3876 = smul.addr %s3875, 8
        %s3877 = scalar_lea.vmem %s3, %s3876
      $region44: #{tpu_custom_call.1} parent=39 // pred_fallthru
        _
    $region40: #{tpu_custom_call.1} parent=5 // pred_fallthru
      _
  $region6: #{tpu_custom_call.1} parent=0 // loop_footer
    %s13 = sadd.s32 1, %s9
  $region7: #{tpu_custom_call.1} parent=0 // loop_footer_branch
    %8 = sbr.rel target = $region3
  $region8: #{tpu_custom_call.1} parent=0 // loop_exit
    _

</llo_original>
